<compile_context>
chip_gen: v6e
topology: v6e:2x2x1
jax: 0.10.0
libtpu: 0.0.40
codegen_flags: <defaults>
</compile_context>

<pallas_src>
import functools
import math

import jax
import jax.numpy as jnp
from jax.experimental import pallas as pl
from jax.experimental.pallas import tpu as pltpu


# ----------------------------------------------------------------------------- helpers
def _layer_norm(x, scale, bias, eps=1e-6):
    """torch.nn.LayerNorm over the last dim (biased variance, eps inside sqrt)."""
    mu = jnp.mean(x, axis=-1, keepdims=True)
    var = jnp.mean(jnp.square(x - mu), axis=-1, keepdims=True)
    return (x - mu) * jax.lax.rsqrt(var + eps) * scale + bias


def _gelu_tanh(x):
    # tanh-approximate GELU (see TODO above); used identically in kernel and reference.
    c = 0.7978845608028654  # sqrt(2/pi)
    return 0.5 * x * (1.0 + jnp.tanh(c * (x + 0.044715 * x * x * x)))


# -------------------------------------------------------------------- fused ViT kernel
def _vit_kernel(
    idx_ref,                                     # scalar prefetch: [B*N] int32 (SMEM)
    xp_ref, pw_ref, pb_ref, tab_ref, cls_ref,    # embedding inputs (constant blocks)
    ln1s_ref, ln1b_ref, wqkv_ref, bqkv_ref, wo_ref, bo_ref,
    ln2s_ref, ln2b_ref, w1_ref, b1_ref, w2_ref, b2_ref,   # per-layer (streamed) blocks
    encs_ref, encb_ref,                          # final encoder norm (constant blocks)
    o_ref,                                       # output [B, H]
    acc_ref,                                     # VMEM scratch [B*S, H] (resident acts)
    *, batch, n_patches, num_heads,
):
    layer = pl.program_id(0)
    seq = n_patches + 1
    hidden = acc_ref.shape[-1]
    dh = hidden // num_heads
    inv_sqrt_dh = 1.0 / math.sqrt(dh)

    # ---- layer step 0: embeddings (patch matmul + UV pos gather + cls token) ---------
    @pl.when(layer == 0)
    def _embed():
        tok = (
            jnp.dot(xp_ref[...], pw_ref[...], preferred_element_type=jnp.float32)
            + pb_ref[...]
        )                                                       # [B*N, H]
        cls_row = cls_ref[...] + tab_ref[0:1, :]                # cls + pos-table row 0
        for b in range(batch):
            acc_ref[b * seq : b * seq + 1, :] = cls_row
            for n in range(n_patches):
                i = b * n_patches + n
                pos_row = tab_ref[pl.ds(idx_ref[i], 1), :]      # in-kernel row gather
                acc_ref[b * seq + 1 + n : b * seq + 2 + n, :] = tok[i : i + 1, :] + pos_row

    x = acc_ref[...]                                            # [B*S, H]

    # ---- attention block (pre-norm) ---------------------------------------------------
    y = _layer_norm(x, ln1s_ref[0], ln1b_ref[0])
    qkv = jnp.dot(y, wqkv_ref[0], preferred_element_type=jnp.float32) + bqkv_ref[0]
    q = qkv[:, 0:hidden] * inv_sqrt_dh                          # fold 1/sqrt(dh) into q
    k = qkv[:, hidden : 2 * hidden]
    v = qkv[:, 2 * hidden : 3 * hidden]

    ctx_rows = []
    for b in range(batch):                                      # attention is per image
        rs, re = b * seq, (b + 1) * seq
        heads = []
        for hd in range(num_heads):
            lo, hi = hd * dh, (hd + 1) * dh
            qh = q[rs:re, lo:hi]
            kh = k[rs:re, lo:hi]
            vh = v[rs:re, lo:hi]
            # q @ k^T without an explicit transpose (NT dot_general).
            s = jax.lax.dot_general(
                qh, kh, (((1,), (1,)), ((), ())), preferred_element_type=jnp.float32
            )
            s = s - jnp.max(s, axis=-1, keepdims=True)
            p = jnp.exp(s)
            p = p * pl.reciprocal(jnp.sum(p, axis=-1, keepdims=True), approx=True)
            heads.append(jnp.dot(p, vh, preferred_element_type=jnp.float32))  # [S, dh]
        ctx_rows.append(jnp.concatenate(heads, axis=1))          # [S, H]  (lane concat)
    ctx = jnp.concatenate(ctx_rows, axis=0)                      # [B*S, H]

    attn = jnp.dot(ctx, wo_ref[0], preferred_element_type=jnp.float32) + bo_ref[0]
    x = x + attn

    # ---- MLP block (pre-norm) ---------------------------------------------------------
    y = _layer_norm(x, ln2s_ref[0], ln2b_ref[0])
    m = jnp.dot(y, w1_ref[0], preferred_element_type=jnp.float32) + b1_ref[0]
    m = _gelu_tanh(m)
    m = jnp.dot(m, w2_ref[0], preferred_element_type=jnp.float32) + b2_ref[0]
    x = x + m
    acc_ref[...] = x                                             # activations stay in VMEM

    # ---- last layer step: final encoder LayerNorm on cls rows only, write [B, H] ------
    @pl.when(layer == pl.num_programs(0) - 1)
    def _final():
        cls_rows = jnp.concatenate(
            [x[b * seq : b * seq + 1, :] for b in range(batch)], axis=0
        )                                                        # [B, H]
        o_ref[...] = _layer_norm(cls_rows, encs_ref[...], encb_ref[...])


# ---------------------------------------------------- one-time weight packing (no jit)
def pack_params(params):
    """Pre-transpose / stack / fuse all weights ONCE, outside the jitted forward."""
    h = params["cls_token"].shape[-1]
    layers = params["layers"]
    m = layers[0]["w1"].shape[0]

    def stack(fn):
        return jnp.stack([fn(lp) for lp in layers], axis=0)

    return {
        "patch_w_t": params["patch_w"].reshape(h, -1).T,                      # [C*P*P, H]
        "patch_b": params["patch_b"].reshape(1, h),
        "pos_table": params["pos_table"][0],                                  # [num_pos, H]
        "cls": params["cls_token"].reshape(1, h),
        "ln1_s": stack(lambda lp: lp["ln1_s"].reshape(1, h)),                 # [L, 1, H]
        "ln1_b": stack(lambda lp: lp["ln1_b"].reshape(1, h)),
        "wqkv_t": stack(                                                      # [L, H, 3H]
            lambda lp: jnp.concatenate([lp["wq"].T, lp["wk"].T, lp["wv"].T], axis=1)
        ),
        "bqkv": stack(                                                        # [L, 1, 3H]
            lambda lp: jnp.concatenate([lp["bq"], lp["bk"], lp["bv"]]).reshape(1, 3 * h)
        ),
        "wo_t": stack(lambda lp: lp["wo"].T),                                 # [L, H, H]
        "bo": stack(lambda lp: lp["bo"].reshape(1, h)),
        "ln2_s": stack(lambda lp: lp["ln2_s"].reshape(1, h)),
        "ln2_b": stack(lambda lp: lp["ln2_b"].reshape(1, h)),
        "w1_t": stack(lambda lp: lp["w1"].T),                                 # [L, H, M]
        "b1": stack(lambda lp: lp["b1"].reshape(1, m)),
        "w2_t": stack(lambda lp: lp["w2"].T),                                 # [L, M, H]
        "b2": stack(lambda lp: lp["b2"].reshape(1, h)),
        "enc_s": params["enc_norm_s"].reshape(1, h),
        "enc_b": params["enc_norm_b"].reshape(1, h),
    }


# -------------------------------------------------------------------- full forward
def vit_forward(packed, x_patches, pos, scales=None, *, width, num_heads):
    """VisionTransformer.forward with x given as [B, N, 3, P, P] patches (5-D path)."""
    del scales  # use_scale_embedding=False
    b, n, c, p, _ = x_patches.shape
    h = packed["cls"].shape[-1]
    bn = b * n
    seq = n + 1
    kdim = c * p * p
    num_pos = packed["pos_table"].shape[0]
    num_layers = packed["wqkv_t"].shape[0]
    mlp = packed["w1_t"].shape[-1]

    # Patch pixels flattened (Conv2d(kernel=stride=P) == flatten + matmul, done in-kernel).
    xp = x_patches.reshape(bn, kdim)

    # UV positional index: floor(u*W)*W + floor(v*W) + 1, clamped to the table range.
    pf = pos.reshape(bn, 2)
    iu = jnp.floor(pf[:, 0] * width).astype(jnp.int32)
    iv = jnp.floor(pf[:, 1] * width).astype(jnp.int32)
    idx = jnp.clip(iu * width + iv + 1, 0, num_pos - 1).astype(jnp.int32)

    def const_spec(shape):
        zeros = (0,) * len(shape)
        return pl.BlockSpec(shape, lambda l, idx_ref, _z=zeros: _z)

    def layer_spec(shape):
        tail = (0,) * (len(shape) - 1)
        return pl.BlockSpec(shape, lambda l, idx_ref, _t=tail: (l,) + _t)

    kernel = functools.partial(
        _vit_kernel, batch=b, n_patches=n, num_heads=num_heads
    )

    grid_spec = pltpu.PrefetchScalarGridSpec(
        num_scalar_prefetch=1,
        grid=(num_layers,),
        in_specs=[
            const_spec((bn, kdim)),          # flattened patches
            const_spec((kdim, h)),           # patch embedding weight^T
            const_spec((1, h)),              # patch embedding bias
            const_spec((num_pos, h)),        # UV pos-embedding table (resident in VMEM)
            const_spec((1, h)),              # cls token
            layer_spec((1, 1, h)), layer_spec((1, 1, h)),          # ln1 scale / bias
            layer_spec((1, h, 3 * h)), layer_spec((1, 1, 3 * h)),  # fused Wqkv^T, bqkv
            layer_spec((1, h, h)), layer_spec((1, 1, h)),          # Wo^T, bo
            layer_spec((1, 1, h)), layer_spec((1, 1, h)),          # ln2 scale / bias
            layer_spec((1, h, mlp)), layer_spec((1, 1, mlp)),      # W1^T, b1
            layer_spec((1, mlp, h)), layer_spec((1, 1, h)),        # W2^T, b2
            const_spec((1, h)), const_spec((1, h)),                # encoder norm
        ],
        out_specs=pl.BlockSpec((b, h), lambda l, idx_ref: (0, 0)),
        scratch_shapes=[pltpu.VMEM((b * seq, h), jnp.float32)],
    )

    return pl.pallas_call(
        kernel,
        out_shape=jax.ShapeDtypeStruct((b, h), jnp.float32),
        grid_spec=grid_spec,
        compiler_params=pltpu.CompilerParams(
            dimension_semantics=("arbitrary",),        # layers are sequential
            vmem_limit_bytes=32 * 1024 * 1024,
        ),
    )(
        idx,
        xp, packed["patch_w_t"], packed["patch_b"], packed["pos_table"], packed["cls"],
        packed["ln1_s"], packed["ln1_b"], packed["wqkv_t"], packed["bqkv"],
        packed["wo_t"], packed["bo"], packed["ln2_s"], packed["ln2_b"],
        packed["w1_t"], packed["b1"], packed["w2_t"], packed["b2"],
        packed["enc_s"], packed["enc_b"],
    )


# -------------------------------------------------------------------- pure-JAX reference
def vit_reference(params, x_patches, pos, *, width, num_heads):
    hi = jax.lax.Precision.HIGHEST
    b, n, c, p, _ = x_patches.shape
    h = params["cls_token"].shape[-1]
    num_pos = params["pos_table"].shape[1]

    xp = x_patches.reshape(b * n, c * p * p)
    tok = jnp.matmul(xp, params["patch_w"].reshape(h, -1).T, precision=hi) + params["patch_b"]
    tok = tok.reshape(b, n, h)

    pf = jnp.floor(pos.reshape(b * n, 2) * width)
    idx = jnp.clip((pf[:, 0] * width + pf[:, 1] + 1).astype(jnp.int32), 0, num_pos - 1)
    tok = tok + params["pos_table"][0][idx].reshape(b, n, h)

    cls = params["cls_token"] + params["pos_table"][:, 0]        # [1,1,H]
    x = jnp.concatenate([jnp.broadcast_to(cls, (b, 1, h)), tok], axis=1)

    s = x.shape[1]
    dh = h // num_heads
    for lp in params["layers"]:
        resid = x
        y = _layer_norm(x, lp["ln1_s"], lp["ln1_b"])
        q = jnp.matmul(y, lp["wq"].T, precision=hi) + lp["bq"]
        k = jnp.matmul(y, lp["wk"].T, precision=hi) + lp["bk"]
        v = jnp.matmul(y, lp["wv"].T, precision=hi) + lp["bv"]

        def split(t):
            return t.reshape(b, s, num_heads, dh).transpose(0, 2, 1, 3)

        qh, kh, vh = split(q), split(k), split(v)
        sc = jnp.matmul(qh, kh.transpose(0, 1, 3, 2), precision=hi) / math.sqrt(dh)
        pr = jax.nn.softmax(sc, axis=-1)
        ctx = jnp.matmul(pr, vh, precision=hi).transpose(0, 2, 1, 3).reshape(b, s, h)
        attn = jnp.matmul(ctx, lp["wo"].T, precision=hi) + lp["bo"]
        x = attn + resid

        resid = x
        y = _layer_norm(x, lp["ln2_s"], lp["ln2_b"])
        m = _gelu_tanh(jnp.matmul(y, lp["w1"].T, precision=hi) + lp["b1"])
        m = jnp.matmul(m, lp["w2"].T, precision=hi) + lp["b2"]
        x = m + resid

    x = _layer_norm(x, params["enc_norm_s"], params["enc_norm_b"])
    return x[:, 0]


# -------------------------------------------------------------------- demo / self-test
if __name__ == "__main__":
    # Small-but-lane-dense ViT config: hidden=128 (full lane width), width=4 -> 17 pos rows.
    hidden_size = 128
    patch_size = 16
    img_dim = 64
    num_heads = 4
    mlp_dim = 256
    num_layers = 2
    width = img_dim // patch_size           # 4
    num_pos = width * width + 1             # 17

    B, N, C = 2, 8, 3                       # 8 patches per image, +1 cls token -> S=9

    key = jax.random.PRNGKey(0)
    key_iter = iter(jax.random.split(key, 64))

    def rnd(shape, scale):
        return scale * jax.random.normal(next(key_iter), shape, dtype=jnp.float32)

    def make_layer_params():
        return {
            "ln1_s": 1.0 + rnd((hidden_size,), 0.01), "ln1_b": rnd((hidden_size,), 0.01),
            "wq": rnd((hidden_size, hidden_size), 0.08), "bq": rnd((hidden_size,), 0.01),
            "wk": rnd((hidden_size, hidden_size), 0.08), "bk": rnd((hidden_size,), 0.01),
            "wv": rnd((hidden_size, hidden_size), 0.08), "bv": rnd((hidden_size,), 0.01),
            "wo": rnd((hidden_size, hidden_size), 0.08), "bo": rnd((hidden_size,), 0.01),
            "ln2_s": 1.0 + rnd((hidden_size,), 0.01), "ln2_b": rnd((hidden_size,), 0.01),
            "w1": rnd((mlp_dim, hidden_size), 0.08), "b1": rnd((mlp_dim,), 0.01),
            "w2": rnd((hidden_size, mlp_dim), 0.06), "b2": rnd((hidden_size,), 0.01),
        }

    params = {
        "patch_w": rnd((hidden_size, C, patch_size, patch_size), 0.03),
        "patch_b": rnd((hidden_size,), 0.01),
        "cls_token": rnd((1, 1, hidden_size), 0.02),
        "pos_table": rnd((1, num_pos, hidden_size), 0.02),
        "layers": [make_layer_params() for _ in range(num_layers)],
        "enc_norm_s": 1.0 + rnd((hidden_size,), 0.01),
        "enc_norm_b": rnd((hidden_size,), 0.01),
    }

    x_patches = rnd((B, N, C, patch_size, patch_size), 0.5)
    pos = jax.random.uniform(next(key_iter), (B, N, 2), dtype=jnp.float32)   # uv in [0, 1)

    packed = pack_params(params)            # one-time weight packing, outside jit

    fwd = jax.jit(functools.partial(vit_forward, width=width, num_heads=num_heads))
    out = jax.block_until_ready(fwd(packed, x_patches, pos))

    ref = vit_reference(params, x_patches, pos, width=width, num_heads=num_heads)
    assert out.shape == (B, hidden_size), out.shape
    rel_err = float(jnp.max(jnp.abs(out - ref)) / (jnp.max(jnp.abs(ref)) + 1e-8))
    # f32 MXU precision + approximate softmax reciprocal vs HIGHEST-precision XLA reference.
    assert rel_err < 1e-2, f"Pallas output mismatch vs reference (rel err {rel_err})"
    print("KERNEL_OK")
</pallas_src>

<mosaic_0001>
module attributes {stable_mosaic.version = 11 : i64} {
  func.func @_vit_kernel(%arg0: i32, %arg1: memref<16xi32, #tpu.memory_space<smem>>, %arg2: memref<16x768xf32, #tpu.memory_space<vmem>>, %arg3: memref<768x128xf32, #tpu.memory_space<vmem>>, %arg4: memref<1x128xf32, #tpu.memory_space<vmem>>, %arg5: memref<17x128xf32, #tpu.memory_space<vmem>>, %arg6: memref<1x128xf32, #tpu.memory_space<vmem>>, %arg7: memref<1x1x128xf32, #tpu.memory_space<vmem>>, %arg8: memref<1x1x128xf32, #tpu.memory_space<vmem>>, %arg9: memref<1x128x384xf32, #tpu.memory_space<vmem>>, %arg10: memref<1x1x384xf32, #tpu.memory_space<vmem>>, %arg11: memref<1x128x128xf32, #tpu.memory_space<vmem>>, %arg12: memref<1x1x128xf32, #tpu.memory_space<vmem>>, %arg13: memref<1x1x128xf32, #tpu.memory_space<vmem>>, %arg14: memref<1x1x128xf32, #tpu.memory_space<vmem>>, %arg15: memref<1x128x256xf32, #tpu.memory_space<vmem>>, %arg16: memref<1x1x256xf32, #tpu.memory_space<vmem>>, %arg17: memref<1x256x128xf32, #tpu.memory_space<vmem>>, %arg18: memref<1x1x128xf32, #tpu.memory_space<vmem>>, %arg19: memref<1x128xf32, #tpu.memory_space<vmem>>, %arg20: memref<1x128xf32, #tpu.memory_space<vmem>>, %arg21: memref<2x128xf32, #tpu.memory_space<vmem>>, %arg22: memref<18x128xf32, #tpu.memory_space<vmem>>) attributes {dimension_semantics = [#tpu.dimension_semantics<arbitrary>], iteration_bounds = array<i64: 2>, scalar_prefetch = 1 : i64, scratch_operands = 1 : i64, tpu.core_type = #tpu.core_type<tc>, window_params = [{pipeline_mode = #tpu.pipeline_mode<synchronous>, transform_indices = @transform_0, window_bounds = array<i64: 16, 768>}, {pipeline_mode = #tpu.pipeline_mode<synchronous>, transform_indices = @transform_1, window_bounds = array<i64: 768, 128>}, {pipeline_mode = #tpu.pipeline_mode<synchronous>, transform_indices = @transform_2, window_bounds = array<i64: 1, 128>}, {pipeline_mode = #tpu.pipeline_mode<synchronous>, transform_indices = @transform_3, window_bounds = array<i64: 17, 128>}, {pipeline_mode = #tpu.pipeline_mode<synchronous>, transform_indices = @transform_4, window_bounds = array<i64: 1, 128>}, {transform_indices = @transform_5, window_bounds = array<i64: 1, 1, 128>}, {transform_indices = @transform_6, window_bounds = array<i64: 1, 1, 128>}, {transform_indices = @transform_7, window_bounds = array<i64: 1, 128, 384>}, {transform_indices = @transform_8, window_bounds = array<i64: 1, 1, 384>}, {transform_indices = @transform_9, window_bounds = array<i64: 1, 128, 128>}, {transform_indices = @transform_10, window_bounds = array<i64: 1, 1, 128>}, {transform_indices = @transform_11, window_bounds = array<i64: 1, 1, 128>}, {transform_indices = @transform_12, window_bounds = array<i64: 1, 1, 128>}, {transform_indices = @transform_13, window_bounds = array<i64: 1, 128, 256>}, {transform_indices = @transform_14, window_bounds = array<i64: 1, 1, 256>}, {transform_indices = @transform_15, window_bounds = array<i64: 1, 256, 128>}, {transform_indices = @transform_16, window_bounds = array<i64: 1, 1, 128>}, {pipeline_mode = #tpu.pipeline_mode<synchronous>, transform_indices = @transform_17, window_bounds = array<i64: 1, 128>}, {pipeline_mode = #tpu.pipeline_mode<synchronous>, transform_indices = @transform_18, window_bounds = array<i64: 1, 128>}, {pipeline_mode = #tpu.pipeline_mode<synchronous>, transform_indices = @transform_19, window_bounds = array<i64: 2, 128>}]} {
    %c0_i32 = arith.constant 0 : i32
    %0 = arith.cmpi eq, %arg0, %c0_i32 : i32
    %1 = arith.extui %0 : i1 to i32
    %c0_i32_0 = arith.constant 0 : i32
    %2 = arith.cmpi ne, %1, %c0_i32_0 : i32
    scf.if %2 {
      %c0_91 = arith.constant 0 : index
      %c0_92 = arith.constant 0 : index
      %231 = vector.load %arg2[%c0_91, %c0_92] : memref<16x768xf32, #tpu.memory_space<vmem>>, vector<16x768xf32>
      %c0_93 = arith.constant 0 : index
      %c0_94 = arith.constant 0 : index
      %232 = vector.load %arg3[%c0_93, %c0_94] : memref<768x128xf32, #tpu.memory_space<vmem>>, vector<768x128xf32>
      %cst_95 = arith.constant dense<0.000000e+00> : vector<16x128xf32>
      %233 = tpu.matmul %231, %232, %cst_95 {dimension_numbers = #tpu.dot_dimension_numbers<[1], [0], [0], [1], [0, 0, 1, 1], [], []>} : vector<16x768xf32>, vector<768x128xf32>, vector<16x128xf32> -> vector<16x128xf32>
      %c0_96 = arith.constant 0 : index
      %c0_97 = arith.constant 0 : index
      %234 = vector.load %arg4[%c0_96, %c0_97] : memref<1x128xf32, #tpu.memory_space<vmem>>, vector<1x128xf32>
      %235 = vector.broadcast %234 : vector<1x128xf32> to vector<16x128xf32>
      %236 = arith.addf %233, %235 : vector<16x128xf32>
      %c0_98 = arith.constant 0 : index
      %c0_99 = arith.constant 0 : index
      %237 = vector.load %arg6[%c0_98, %c0_99] : memref<1x128xf32, #tpu.memory_space<vmem>>, vector<1x128xf32>
      %c0_100 = arith.constant 0 : index
      %c0_101 = arith.constant 0 : index
      %238 = vector.load %arg5[%c0_100, %c0_101] : memref<17x128xf32, #tpu.memory_space<vmem>>, vector<1x128xf32>
      %239 = arith.addf %237, %238 : vector<1x128xf32>
      %c0_102 = arith.constant 0 : index
      %c0_103 = arith.constant 0 : index
      %240 = vector.load %arg22[%c0_102, %c0_103] : memref<18x128xf32, #tpu.memory_space<vmem>>, vector<1x128xf32>
      tpu.vector_store %arg22[%c0_102, %c0_103], %239 {strides = array<i32>} : memref<18x128xf32, #tpu.memory_space<vmem>>, vector<1x128xf32>,
      %c0_104 = arith.constant 0 : index
      %241 = memref.load %arg1[%c0_104] : memref<16xi32, #tpu.memory_space<smem>>
      %242 = arith.index_cast %241 : i32 to index
      %c0_105 = arith.constant 0 : index
      %243 = vector.load %arg5[%242, %c0_105] : memref<17x128xf32, #tpu.memory_space<vmem>>, vector<1x128xf32>
      %244 = vector.extract_strided_slice %236 {offsets = [0, 0], sizes = [1, 128], strides = [1, 1]} : vector<16x128xf32> to vector<1x128xf32>
      %245 = arith.addf %244, %243 : vector<1x128xf32>
      %c1 = arith.constant 1 : index
      %c0_106 = arith.constant 0 : index
      %246 = vector.load %arg22[%c1, %c0_106] : memref<18x128xf32, #tpu.memory_space<vmem>>, vector<1x128xf32>
      tpu.vector_store %arg22[%c1, %c0_106], %245 {strides = array<i32>} : memref<18x128xf32, #tpu.memory_space<vmem>>, vector<1x128xf32>,
      %c1_107 = arith.constant 1 : index
      %247 = memref.load %arg1[%c1_107] : memref<16xi32, #tpu.memory_space<smem>>
      %248 = arith.index_cast %247 : i32 to index
      %c0_108 = arith.constant 0 : index
      %249 = vector.load %arg5[%248, %c0_108] : memref<17x128xf32, #tpu.memory_space<vmem>>, vector<1x128xf32>
      %250 = vector.extract_strided_slice %236 {offsets = [1, 0], sizes = [1, 128], strides = [1, 1]} : vector<16x128xf32> to vector<1x128xf32>
      %251 = arith.addf %250, %249 : vector<1x128xf32>
      %c2 = arith.constant 2 : index
      %c0_109 = arith.constant 0 : index
      %252 = vector.load %arg22[%c2, %c0_109] : memref<18x128xf32, #tpu.memory_space<vmem>>, vector<1x128xf32>
      tpu.vector_store %arg22[%c2, %c0_109], %251 {strides = array<i32>} : memref<18x128xf32, #tpu.memory_space<vmem>>, vector<1x128xf32>,
      %c2_110 = arith.constant 2 : index
      %253 = memref.load %arg1[%c2_110] : memref<16xi32, #tpu.memory_space<smem>>
      %254 = arith.index_cast %253 : i32 to index
      %c0_111 = arith.constant 0 : index
      %255 = vector.load %arg5[%254, %c0_111] : memref<17x128xf32, #tpu.memory_space<vmem>>, vector<1x128xf32>
      %256 = vector.extract_strided_slice %236 {offsets = [2, 0], sizes = [1, 128], strides = [1, 1]} : vector<16x128xf32> to vector<1x128xf32>
      %257 = arith.addf %256, %255 : vector<1x128xf32>
      %c3 = arith.constant 3 : index
      %c0_112 = arith.constant 0 : index
      %258 = vector.load %arg22[%c3, %c0_112] : memref<18x128xf32, #tpu.memory_space<vmem>>, vector<1x128xf32>
      tpu.vector_store %arg22[%c3, %c0_112], %257 {strides = array<i32>} : memref<18x128xf32, #tpu.memory_space<vmem>>, vector<1x128xf32>,
      %c3_113 = arith.constant 3 : index
      %259 = memref.load %arg1[%c3_113] : memref<16xi32, #tpu.memory_space<smem>>
      %260 = arith.index_cast %259 : i32 to index
      %c0_114 = arith.constant 0 : index
      %261 = vector.load %arg5[%260, %c0_114] : memref<17x128xf32, #tpu.memory_space<vmem>>, vector<1x128xf32>
      %262 = vector.extract_strided_slice %236 {offsets = [3, 0], sizes = [1, 128], strides = [1, 1]} : vector<16x128xf32> to vector<1x128xf32>
      %263 = arith.addf %262, %261 : vector<1x128xf32>
      %c4 = arith.constant 4 : index
      %c0_115 = arith.constant 0 : index
      %264 = vector.load %arg22[%c4, %c0_115] : memref<18x128xf32, #tpu.memory_space<vmem>>, vector<1x128xf32>
      tpu.vector_store %arg22[%c4, %c0_115], %263 {strides = array<i32>} : memref<18x128xf32, #tpu.memory_space<vmem>>, vector<1x128xf32>,
      %c4_116 = arith.constant 4 : index
      %265 = memref.load %arg1[%c4_116] : memref<16xi32, #tpu.memory_space<smem>>
      %266 = arith.index_cast %265 : i32 to index
      %c0_117 = arith.constant 0 : index
      %267 = vector.load %arg5[%266, %c0_117] : memref<17x128xf32, #tpu.memory_space<vmem>>, vector<1x128xf32>
      %268 = vector.extract_strided_slice %236 {offsets = [4, 0], sizes = [1, 128], strides = [1, 1]} : vector<16x128xf32> to vector<1x128xf32>
      %269 = arith.addf %268, %267 : vector<1x128xf32>
      %c5 = arith.constant 5 : index
      %c0_118 = arith.constant 0 : index
      %270 = vector.load %arg22[%c5, %c0_118] : memref<18x128xf32, #tpu.memory_space<vmem>>, vector<1x128xf32>
      tpu.vector_store %arg22[%c5, %c0_118], %269 {strides = array<i32>} : memref<18x128xf32, #tpu.memory_space<vmem>>, vector<1x128xf32>,
      %c5_119 = arith.constant 5 : index
      %271 = memref.load %arg1[%c5_119] : memref<16xi32, #tpu.memory_space<smem>>
      %272 = arith.index_cast %271 : i32 to index
      %c0_120 = arith.constant 0 : index
      %273 = vector.load %arg5[%272, %c0_120] : memref<17x128xf32, #tpu.memory_space<vmem>>, vector<1x128xf32>
      %274 = vector.extract_strided_slice %236 {offsets = [5, 0], sizes = [1, 128], strides = [1, 1]} : vector<16x128xf32> to vector<1x128xf32>
      %275 = arith.addf %274, %273 : vector<1x128xf32>
      %c6 = arith.constant 6 : index
      %c0_121 = arith.constant 0 : index
      %276 = vector.load %arg22[%c6, %c0_121] : memref<18x128xf32, #tpu.memory_space<vmem>>, vector<1x128xf32>
      tpu.vector_store %arg22[%c6, %c0_121], %275 {strides = array<i32>} : memref<18x128xf32, #tpu.memory_space<vmem>>, vector<1x128xf32>,
      %c6_122 = arith.constant 6 : index
      %277 = memref.load %arg1[%c6_122] : memref<16xi32, #tpu.memory_space<smem>>
      %278 = arith.index_cast %277 : i32 to index
      %c0_123 = arith.constant 0 : index
      %279 = vector.load %arg5[%278, %c0_123] : memref<17x128xf32, #tpu.memory_space<vmem>>, vector<1x128xf32>
      %280 = vector.extract_strided_slice %236 {offsets = [6, 0], sizes = [1, 128], strides = [1, 1]} : vector<16x128xf32> to vector<1x128xf32>
      %281 = arith.addf %280, %279 : vector<1x128xf32>
      %c7 = arith.constant 7 : index
      %c0_124 = arith.constant 0 : index
      %282 = vector.load %arg22[%c7, %c0_124] : memref<18x128xf32, #tpu.memory_space<vmem>>, vector<1x128xf32>
      tpu.vector_store %arg22[%c7, %c0_124], %281 {strides = array<i32>} : memref<18x128xf32, #tpu.memory_space<vmem>>, vector<1x128xf32>,
      %c7_125 = arith.constant 7 : index
      %283 = memref.load %arg1[%c7_125] : memref<16xi32, #tpu.memory_space<smem>>
      %284 = arith.index_cast %283 : i32 to index
      %c0_126 = arith.constant 0 : index
      %285 = vector.load %arg5[%284, %c0_126] : memref<17x128xf32, #tpu.memory_space<vmem>>, vector<1x128xf32>
      %286 = vector.extract_strided_slice %236 {offsets = [7, 0], sizes = [1, 128], strides = [1, 1]} : vector<16x128xf32> to vector<1x128xf32>
      %287 = arith.addf %286, %285 : vector<1x128xf32>
      %c8 = arith.constant 8 : index
      %c0_127 = arith.constant 0 : index
      %288 = vector.load %arg22[%c8, %c0_127] : memref<18x128xf32, #tpu.memory_space<vmem>>, vector<1x128xf32>
      tpu.vector_store %arg22[%c8, %c0_127], %287 {strides = array<i32>} : memref<18x128xf32, #tpu.memory_space<vmem>>, vector<1x128xf32>,
      %c9 = arith.constant 9 : index
      %c0_128 = arith.constant 0 : index
      %289 = vector.load %arg22[%c9, %c0_128] : memref<18x128xf32, #tpu.memory_space<vmem>>, vector<1x128xf32>
      tpu.vector_store %arg22[%c9, %c0_128], %239 {strides = array<i32>} : memref<18x128xf32, #tpu.memory_space<vmem>>, vector<1x128xf32>,
      %c8_129 = arith.constant 8 : index
      %290 = memref.load %arg1[%c8_129] : memref<16xi32, #tpu.memory_space<smem>>
      %291 = arith.index_cast %290 : i32 to index
      %c0_130 = arith.constant 0 : index
      %292 = vector.load %arg5[%291, %c0_130] : memref<17x128xf32, #tpu.memory_space<vmem>>, vector<1x128xf32>
      %293 = vector.extract_strided_slice %236 {offsets = [8, 0], sizes = [1, 128], strides = [1, 1]} : vector<16x128xf32> to vector<1x128xf32>
      %294 = arith.addf %293, %292 : vector<1x128xf32>
      %c10 = arith.constant 10 : index
      %c0_131 = arith.constant 0 : index
      %295 = vector.load %arg22[%c10, %c0_131] : memref<18x128xf32, #tpu.memory_space<vmem>>, vector<1x128xf32>
      tpu.vector_store %arg22[%c10, %c0_131], %294 {strides = array<i32>} : memref<18x128xf32, #tpu.memory_space<vmem>>, vector<1x128xf32>,
      %c9_132 = arith.constant 9 : index
      %296 = memref.load %arg1[%c9_132] : memref<16xi32, #tpu.memory_space<smem>>
      %297 = arith.index_cast %296 : i32 to index
      %c0_133 = arith.constant 0 : index
      %298 = vector.load %arg5[%297, %c0_133] : memref<17x128xf32, #tpu.memory_space<vmem>>, vector<1x128xf32>
      %299 = vector.extract_strided_slice %236 {offsets = [9, 0], sizes = [1, 128], strides = [1, 1]} : vector<16x128xf32> to vector<1x128xf32>
      %300 = arith.addf %299, %298 : vector<1x128xf32>
      %c11 = arith.constant 11 : index
      %c0_134 = arith.constant 0 : index
      %301 = vector.load %arg22[%c11, %c0_134] : memref<18x128xf32, #tpu.memory_space<vmem>>, vector<1x128xf32>
      tpu.vector_store %arg22[%c11, %c0_134], %300 {strides = array<i32>} : memref<18x128xf32, #tpu.memory_space<vmem>>, vector<1x128xf32>,
      %c10_135 = arith.constant 10 : index
      %302 = memref.load %arg1[%c10_135] : memref<16xi32, #tpu.memory_space<smem>>
      %303 = arith.index_cast %302 : i32 to index
      %c0_136 = arith.constant 0 : index
      %304 = vector.load %arg5[%303, %c0_136] : memref<17x128xf32, #tpu.memory_space<vmem>>, vector<1x128xf32>
      %305 = vector.extract_strided_slice %236 {offsets = [10, 0], sizes = [1, 128], strides = [1, 1]} : vector<16x128xf32> to vector<1x128xf32>
      %306 = arith.addf %305, %304 : vector<1x128xf32>
      %c12 = arith.constant 12 : index
      %c0_137 = arith.constant 0 : index
      %307 = vector.load %arg22[%c12, %c0_137] : memref<18x128xf32, #tpu.memory_space<vmem>>, vector<1x128xf32>
      tpu.vector_store %arg22[%c12, %c0_137], %306 {strides = array<i32>} : memref<18x128xf32, #tpu.memory_space<vmem>>, vector<1x128xf32>,
      %c11_138 = arith.constant 11 : index
      %308 = memref.load %arg1[%c11_138] : memref<16xi32, #tpu.memory_space<smem>>
      %309 = arith.index_cast %308 : i32 to index
      %c0_139 = arith.constant 0 : index
      %310 = vector.load %arg5[%309, %c0_139] : memref<17x128xf32, #tpu.memory_space<vmem>>, vector<1x128xf32>
      %311 = vector.extract_strided_slice %236 {offsets = [11, 0], sizes = [1, 128], strides = [1, 1]} : vector<16x128xf32> to vector<1x128xf32>
      %312 = arith.addf %311, %310 : vector<1x128xf32>
      %c13 = arith.constant 13 : index
      %c0_140 = arith.constant 0 : index
      %313 = vector.load %arg22[%c13, %c0_140] : memref<18x128xf32, #tpu.memory_space<vmem>>, vector<1x128xf32>
      tpu.vector_store %arg22[%c13, %c0_140], %312 {strides = array<i32>} : memref<18x128xf32, #tpu.memory_space<vmem>>, vector<1x128xf32>,
      %c12_141 = arith.constant 12 : index
      %314 = memref.load %arg1[%c12_141] : memref<16xi32, #tpu.memory_space<smem>>
      %315 = arith.index_cast %314 : i32 to index
      %c0_142 = arith.constant 0 : index
      %316 = vector.load %arg5[%315, %c0_142] : memref<17x128xf32, #tpu.memory_space<vmem>>, vector<1x128xf32>
      %317 = vector.extract_strided_slice %236 {offsets = [12, 0], sizes = [1, 128], strides = [1, 1]} : vector<16x128xf32> to vector<1x128xf32>
      %318 = arith.addf %317, %316 : vector<1x128xf32>
      %c14 = arith.constant 14 : index
      %c0_143 = arith.constant 0 : index
      %319 = vector.load %arg22[%c14, %c0_143] : memref<18x128xf32, #tpu.memory_space<vmem>>, vector<1x128xf32>
      tpu.vector_store %arg22[%c14, %c0_143], %318 {strides = array<i32>} : memref<18x128xf32, #tpu.memory_space<vmem>>, vector<1x128xf32>,
      %c13_144 = arith.constant 13 : index
      %320 = memref.load %arg1[%c13_144] : memref<16xi32, #tpu.memory_space<smem>>
      %321 = arith.index_cast %320 : i32 to index
      %c0_145 = arith.constant 0 : index
      %322 = vector.load %arg5[%321, %c0_145] : memref<17x128xf32, #tpu.memory_space<vmem>>, vector<1x128xf32>
      %323 = vector.extract_strided_slice %236 {offsets = [13, 0], sizes = [1, 128], strides = [1, 1]} : vector<16x128xf32> to vector<1x128xf32>
      %324 = arith.addf %323, %322 : vector<1x128xf32>
      %c15 = arith.constant 15 : index
      %c0_146 = arith.constant 0 : index
      %325 = vector.load %arg22[%c15, %c0_146] : memref<18x128xf32, #tpu.memory_space<vmem>>, vector<1x128xf32>
      tpu.vector_store %arg22[%c15, %c0_146], %324 {strides = array<i32>} : memref<18x128xf32, #tpu.memory_space<vmem>>, vector<1x128xf32>,
      %c14_147 = arith.constant 14 : index
      %326 = memref.load %arg1[%c14_147] : memref<16xi32, #tpu.memory_space<smem>>
      %327 = arith.index_cast %326 : i32 to index
      %c0_148 = arith.constant 0 : index
      %328 = vector.load %arg5[%327, %c0_148] : memref<17x128xf32, #tpu.memory_space<vmem>>, vector<1x128xf32>
      %329 = vector.extract_strided_slice %236 {offsets = [14, 0], sizes = [1, 128], strides = [1, 1]} : vector<16x128xf32> to vector<1x128xf32>
      %330 = arith.addf %329, %328 : vector<1x128xf32>
      %c16 = arith.constant 16 : index
      %c0_149 = arith.constant 0 : index
      %331 = vector.load %arg22[%c16, %c0_149] : memref<18x128xf32, #tpu.memory_space<vmem>>, vector<1x128xf32>
      tpu.vector_store %arg22[%c16, %c0_149], %330 {strides = array<i32>} : memref<18x128xf32, #tpu.memory_space<vmem>>, vector<1x128xf32>,
      %c15_150 = arith.constant 15 : index
      %332 = memref.load %arg1[%c15_150] : memref<16xi32, #tpu.memory_space<smem>>
      %333 = arith.index_cast %332 : i32 to index
      %c0_151 = arith.constant 0 : index
      %334 = vector.load %arg5[%333, %c0_151] : memref<17x128xf32, #tpu.memory_space<vmem>>, vector<1x128xf32>
      %335 = vector.extract_strided_slice %236 {offsets = [15, 0], sizes = [1, 128], strides = [1, 1]} : vector<16x128xf32> to vector<1x128xf32>
      %336 = arith.addf %335, %334 : vector<1x128xf32>
      %c17 = arith.constant 17 : index
      %c0_152 = arith.constant 0 : index
      %337 = vector.load %arg22[%c17, %c0_152] : memref<18x128xf32, #tpu.memory_space<vmem>>, vector<1x128xf32>
      tpu.vector_store %arg22[%c17, %c0_152], %336 {strides = array<i32>} : memref<18x128xf32, #tpu.memory_space<vmem>>, vector<1x128xf32>,
    } else {
    }
    %c0 = arith.constant 0 : index
    %c0_1 = arith.constant 0 : index
    %3 = vector.load %arg22[%c0, %c0_1] : memref<18x128xf32, #tpu.memory_space<vmem>>, vector<18x128xf32>
    %c0_2 = arith.constant 0 : index
    %c0_3 = arith.constant 0 : index
    %c0_4 = arith.constant 0 : index
    %4 = vector.load %arg7[%c0_2, %c0_3, %c0_4] : memref<1x1x128xf32, #tpu.memory_space<vmem>>, vector<1x1x128xf32>
    %5 = vector.shape_cast %4 : vector<1x1x128xf32> to vector<1x128xf32>
    %c0_5 = arith.constant 0 : index
    %c0_6 = arith.constant 0 : index
    %c0_7 = arith.constant 0 : index
    %6 = vector.load %arg8[%c0_5, %c0_6, %c0_7] : memref<1x1x128xf32, #tpu.memory_space<vmem>>, vector<1x1x128xf32>
    %7 = vector.shape_cast %6 : vector<1x1x128xf32> to vector<1x128xf32>
    %cst = arith.constant dense<0.000000e+00> : vector<18xf32>
    %8 = vector.multi_reduction <add>, %3, %cst [1] : vector<18x128xf32> to vector<18xf32>
    %9 = vector.shape_cast %8 : vector<18xf32> to vector<18x1xf32>
    %cst_8 = arith.constant 1.280000e+02 : f32
    %10 = vector.broadcast %cst_8 : f32 to vector<18x1xf32>
    %11 = arith.divf %9, %10 : vector<18x1xf32>
    %12 = vector.broadcast %11 : vector<18x1xf32> to vector<18x128xf32>
    %13 = arith.subf %3, %12 : vector<18x128xf32>
    %14 = arith.mulf %13, %13 : vector<18x128xf32>
    %cst_9 = arith.constant dense<0.000000e+00> : vector<18xf32>
    %15 = vector.multi_reduction <add>, %14, %cst_9 [1] : vector<18x128xf32> to vector<18xf32>
    %16 = vector.shape_cast %15 : vector<18xf32> to vector<18x1xf32>
    %cst_10 = arith.constant 1.280000e+02 : f32
    %17 = vector.broadcast %cst_10 : f32 to vector<18x1xf32>
    %18 = arith.divf %16, %17 : vector<18x1xf32>
    %19 = vector.broadcast %11 : vector<18x1xf32> to vector<18x128xf32>
    %20 = arith.subf %3, %19 : vector<18x128xf32>
    %cst_11 = arith.constant 9.99999997E-7 : f32
    %21 = vector.broadcast %cst_11 : f32 to vector<18x1xf32>
    %22 = arith.addf %18, %21 : vector<18x1xf32>
    %23 = math.rsqrt %22 : vector<18x1xf32>
    %24 = vector.broadcast %23 : vector<18x1xf32> to vector<18x128xf32>
    %25 = arith.mulf %20, %24 : vector<18x128xf32>
    %26 = vector.broadcast %5 : vector<1x128xf32> to vector<18x128xf32>
    %27 = arith.mulf %25, %26 : vector<18x128xf32>
    %28 = vector.broadcast %7 : vector<1x128xf32> to vector<18x128xf32>
    %29 = arith.addf %27, %28 : vector<18x128xf32>
    %c0_12 = arith.constant 0 : index
    %c0_13 = arith.constant 0 : index
    %c0_14 = arith.constant 0 : index
    %30 = vector.load %arg9[%c0_12, %c0_13, %c0_14] : memref<1x128x384xf32, #tpu.memory_space<vmem>>, vector<1x128x384xf32>
    %31 = vector.shape_cast %30 : vector<1x128x384xf32> to vector<128x384xf32>
    %cst_15 = arith.constant dense<0.000000e+00> : vector<18x384xf32>
    %32 = tpu.matmul %29, %31, %cst_15 {dimension_numbers = #tpu.dot_dimension_numbers<[1], [0], [0], [1], [0, 0, 1, 1], [], []>} : vector<18x128xf32>, vector<128x384xf32>, vector<18x384xf32> -> vector<18x384xf32>
    %c0_16 = arith.constant 0 : index
    %c0_17 = arith.constant 0 : index
    %c0_18 = arith.constant 0 : index
    %33 = vector.load %arg10[%c0_16, %c0_17, %c0_18] : memref<1x1x384xf32, #tpu.memory_space<vmem>>, vector<1x1x384xf32>
    %34 = vector.shape_cast %33 : vector<1x1x384xf32> to vector<1x384xf32>
    %35 = vector.broadcast %34 : vector<1x384xf32> to vector<18x384xf32>
    %36 = arith.addf %32, %35 : vector<18x384xf32>
    %37 = vector.extract_strided_slice %36 {offsets = [0, 0], sizes = [18, 128], strides = [1, 1]} : vector<18x384xf32> to vector<18x128xf32>
    %cst_19 = arith.constant 0.176776692 : f32
    %38 = vector.broadcast %cst_19 : f32 to vector<18x128xf32>
    %39 = arith.mulf %37, %38 : vector<18x128xf32>
    %40 = vector.extract_strided_slice %36 {offsets = [0, 128], sizes = [18, 128], strides = [1, 1]} : vector<18x384xf32> to vector<18x128xf32>
    %41 = vector.extract_strided_slice %36 {offsets = [0, 256], sizes = [18, 128], strides = [1, 1]} : vector<18x384xf32> to vector<18x128xf32>
    %42 = vector.extract_strided_slice %39 {offsets = [0, 0], sizes = [9, 32], strides = [1, 1]} : vector<18x128xf32> to vector<9x32xf32>
    %43 = vector.extract_strided_slice %40 {offsets = [0, 0], sizes = [9, 32], strides = [1, 1]} : vector<18x128xf32> to vector<9x32xf32>
    %44 = vector.extract_strided_slice %41 {offsets = [0, 0], sizes = [9, 32], strides = [1, 1]} : vector<18x128xf32> to vector<9x32xf32>
    %cst_20 = arith.constant dense<0.000000e+00> : vector<9x9xf32>
    %45 = tpu.matmul %42, %43, %cst_20 {dimension_numbers = #tpu.dot_dimension_numbers<[1], [1], [0], [0], [0, 0, 1, 0], [], []>} : vector<9x32xf32>, vector<9x32xf32>, vector<9x9xf32> -> vector<9x9xf32>
    %cst_21 = arith.constant dense<0xFF800000> : vector<9xf32>
    %46 = vector.multi_reduction <maximumf>, %45, %cst_21 [1] : vector<9x9xf32> to vector<9xf32>
    %47 = vector.shape_cast %46 : vector<9xf32> to vector<9x1xf32>
    %48 = vector.broadcast %47 : vector<9x1xf32> to vector<9x9xf32>
    %49 = arith.subf %45, %48 : vector<9x9xf32>
    %50 = math.exp %49 : vector<9x9xf32>
    %cst_22 = arith.constant dense<0.000000e+00> : vector<9xf32>
    %51 = vector.multi_reduction <add>, %50, %cst_22 [1] : vector<9x9xf32> to vector<9xf32>
    %52 = vector.shape_cast %51 : vector<9xf32> to vector<9x1xf32>
    %53 = tpu.reciprocal %52 {approx = true} : vector<9x1xf32> -> vector<9x1xf32>
    %54 = vector.broadcast %53 : vector<9x1xf32> to vector<9x9xf32>
    %55 = arith.mulf %50, %54 : vector<9x9xf32>
    %cst_23 = arith.constant dense<0.000000e+00> : vector<9x32xf32>
    %56 = tpu.matmul %55, %44, %cst_23 {dimension_numbers = #tpu.dot_dimension_numbers<[1], [0], [0], [1], [0, 0, 1, 1], [], []>} : vector<9x9xf32>, vector<9x32xf32>, vector<9x32xf32> -> vector<9x32xf32>
    %57 = vector.extract_strided_slice %39 {offsets = [0, 32], sizes = [9, 32], strides = [1, 1]} : vector<18x128xf32> to vector<9x32xf32>
    %58 = vector.extract_strided_slice %40 {offsets = [0, 32], sizes = [9, 32], strides = [1, 1]} : vector<18x128xf32> to vector<9x32xf32>
    %59 = vector.extract_strided_slice %41 {offsets = [0, 32], sizes = [9, 32], strides = [1, 1]} : vector<18x128xf32> to vector<9x32xf32>
    %cst_24 = arith.constant dense<0.000000e+00> : vector<9x9xf32>
    %60 = tpu.matmul %57, %58, %cst_24 {dimension_numbers = #tpu.dot_dimension_numbers<[1], [1], [0], [0], [0, 0, 1, 0], [], []>} : vector<9x32xf32>, vector<9x32xf32>, vector<9x9xf32> -> vector<9x9xf32>
    %cst_25 = arith.constant dense<0xFF800000> : vector<9xf32>
    %61 = vector.multi_reduction <maximumf>, %60, %cst_25 [1] : vector<9x9xf32> to vector<9xf32>
    %62 = vector.shape_cast %61 : vector<9xf32> to vector<9x1xf32>
    %63 = vector.broadcast %62 : vector<9x1xf32> to vector<9x9xf32>
    %64 = arith.subf %60, %63 : vector<9x9xf32>
    %65 = math.exp %64 : vector<9x9xf32>
    %cst_26 = arith.constant dense<0.000000e+00> : vector<9xf32>
    %66 = vector.multi_reduction <add>, %65, %cst_26 [1] : vector<9x9xf32> to vector<9xf32>
    %67 = vector.shape_cast %66 : vector<9xf32> to vector<9x1xf32>
    %68 = tpu.reciprocal %67 {approx = true} : vector<9x1xf32> -> vector<9x1xf32>
    %69 = vector.broadcast %68 : vector<9x1xf32> to vector<9x9xf32>
    %70 = arith.mulf %65, %69 : vector<9x9xf32>
    %cst_27 = arith.constant dense<0.000000e+00> : vector<9x32xf32>
    %71 = tpu.matmul %70, %59, %cst_27 {dimension_numbers = #tpu.dot_dimension_numbers<[1], [0], [0], [1], [0, 0, 1, 1], [], []>} : vector<9x9xf32>, vector<9x32xf32>, vector<9x32xf32> -> vector<9x32xf32>
    %72 = vector.extract_strided_slice %39 {offsets = [0, 64], sizes = [9, 32], strides = [1, 1]} : vector<18x128xf32> to vector<9x32xf32>
    %73 = vector.extract_strided_slice %40 {offsets = [0, 64], sizes = [9, 32], strides = [1, 1]} : vector<18x128xf32> to vector<9x32xf32>
    %74 = vector.extract_strided_slice %41 {offsets = [0, 64], sizes = [9, 32], strides = [1, 1]} : vector<18x128xf32> to vector<9x32xf32>
    %cst_28 = arith.constant dense<0.000000e+00> : vector<9x9xf32>
    %75 = tpu.matmul %72, %73, %cst_28 {dimension_numbers = #tpu.dot_dimension_numbers<[1], [1], [0], [0], [0, 0, 1, 0], [], []>} : vector<9x32xf32>, vector<9x32xf32>, vector<9x9xf32> -> vector<9x9xf32>
    %cst_29 = arith.constant dense<0xFF800000> : vector<9xf32>
    %76 = vector.multi_reduction <maximumf>, %75, %cst_29 [1] : vector<9x9xf32> to vector<9xf32>
    %77 = vector.shape_cast %76 : vector<9xf32> to vector<9x1xf32>
    %78 = vector.broadcast %77 : vector<9x1xf32> to vector<9x9xf32>
    %79 = arith.subf %75, %78 : vector<9x9xf32>
    %80 = math.exp %79 : vector<9x9xf32>
    %cst_30 = arith.constant dense<0.000000e+00> : vector<9xf32>
    %81 = vector.multi_reduction <add>, %80, %cst_30 [1] : vector<9x9xf32> to vector<9xf32>
    %82 = vector.shape_cast %81 : vector<9xf32> to vector<9x1xf32>
    %83 = tpu.reciprocal %82 {approx = true} : vector<9x1xf32> -> vector<9x1xf32>
    %84 = vector.broadcast %83 : vector<9x1xf32> to vector<9x9xf32>
    %85 = arith.mulf %80, %84 : vector<9x9xf32>
    %cst_31 = arith.constant dense<0.000000e+00> : vector<9x32xf32>
    %86 = tpu.matmul %85, %74, %cst_31 {dimension_numbers = #tpu.dot_dimension_numbers<[1], [0], [0], [1], [0, 0, 1, 1], [], []>} : vector<9x9xf32>, vector<9x32xf32>, vector<9x32xf32> -> vector<9x32xf32>
    %87 = vector.extract_strided_slice %39 {offsets = [0, 96], sizes = [9, 32], strides = [1, 1]} : vector<18x128xf32> to vector<9x32xf32>
    %88 = vector.extract_strided_slice %40 {offsets = [0, 96], sizes = [9, 32], strides = [1, 1]} : vector<18x128xf32> to vector<9x32xf32>
    %89 = vector.extract_strided_slice %41 {offsets = [0, 96], sizes = [9, 32], strides = [1, 1]} : vector<18x128xf32> to vector<9x32xf32>
    %cst_32 = arith.constant dense<0.000000e+00> : vector<9x9xf32>
    %90 = tpu.matmul %87, %88, %cst_32 {dimension_numbers = #tpu.dot_dimension_numbers<[1], [1], [0], [0], [0, 0, 1, 0], [], []>} : vector<9x32xf32>, vector<9x32xf32>, vector<9x9xf32> -> vector<9x9xf32>
    %cst_33 = arith.constant dense<0xFF800000> : vector<9xf32>
    %91 = vector.multi_reduction <maximumf>, %90, %cst_33 [1] : vector<9x9xf32> to vector<9xf32>
    %92 = vector.shape_cast %91 : vector<9xf32> to vector<9x1xf32>
    %93 = vector.broadcast %92 : vector<9x1xf32> to vector<9x9xf32>
    %94 = arith.subf %90, %93 : vector<9x9xf32>
    %95 = math.exp %94 : vector<9x9xf32>
    %cst_34 = arith.constant dense<0.000000e+00> : vector<9xf32>
    %96 = vector.multi_reduction <add>, %95, %cst_34 [1] : vector<9x9xf32> to vector<9xf32>
    %97 = vector.shape_cast %96 : vector<9xf32> to vector<9x1xf32>
    %98 = tpu.reciprocal %97 {approx = true} : vector<9x1xf32> -> vector<9x1xf32>
    %99 = vector.broadcast %98 : vector<9x1xf32> to vector<9x9xf32>
    %100 = arith.mulf %95, %99 : vector<9x9xf32>
    %cst_35 = arith.constant dense<0.000000e+00> : vector<9x32xf32>
    %101 = tpu.matmul %100, %89, %cst_35 {dimension_numbers = #tpu.dot_dimension_numbers<[1], [0], [0], [1], [0, 0, 1, 1], [], []>} : vector<9x9xf32>, vector<9x32xf32>, vector<9x32xf32> -> vector<9x32xf32>
    %102 = tpu.concatenate %56, %71, %86, %101 in 1 : vector<9x32xf32>, vector<9x32xf32>, vector<9x32xf32>, vector<9x32xf32> -> vector<9x128xf32>
    %103 = vector.extract_strided_slice %39 {offsets = [9, 0], sizes = [9, 32], strides = [1, 1]} : vector<18x128xf32> to vector<9x32xf32>
    %104 = vector.extract_strided_slice %40 {offsets = [9, 0], sizes = [9, 32], strides = [1, 1]} : vector<18x128xf32> to vector<9x32xf32>
    %105 = vector.extract_strided_slice %41 {offsets = [9, 0], sizes = [9, 32], strides = [1, 1]} : vector<18x128xf32> to vector<9x32xf32>
    %cst_36 = arith.constant dense<0.000000e+00> : vector<9x9xf32>
    %106 = tpu.matmul %103, %104, %cst_36 {dimension_numbers = #tpu.dot_dimension_numbers<[1], [1], [0], [0], [0, 0, 1, 0], [], []>} : vector<9x32xf32>, vector<9x32xf32>, vector<9x9xf32> -> vector<9x9xf32>
    %cst_37 = arith.constant dense<0xFF800000> : vector<9xf32>
    %107 = vector.multi_reduction <maximumf>, %106, %cst_37 [1] : vector<9x9xf32> to vector<9xf32>
    %108 = vector.shape_cast %107 : vector<9xf32> to vector<9x1xf32>
    %109 = vector.broadcast %108 : vector<9x1xf32> to vector<9x9xf32>
    %110 = arith.subf %106, %109 : vector<9x9xf32>
    %111 = math.exp %110 : vector<9x9xf32>
    %cst_38 = arith.constant dense<0.000000e+00> : vector<9xf32>
    %112 = vector.multi_reduction <add>, %111, %cst_38 [1] : vector<9x9xf32> to vector<9xf32>
    %113 = vector.shape_cast %112 : vector<9xf32> to vector<9x1xf32>
    %114 = tpu.reciprocal %113 {approx = true} : vector<9x1xf32> -> vector<9x1xf32>
    %115 = vector.broadcast %114 : vector<9x1xf32> to vector<9x9xf32>
    %116 = arith.mulf %111, %115 : vector<9x9xf32>
    %cst_39 = arith.constant dense<0.000000e+00> : vector<9x32xf32>
    %117 = tpu.matmul %116, %105, %cst_39 {dimension_numbers = #tpu.dot_dimension_numbers<[1], [0], [0], [1], [0, 0, 1, 1], [], []>} : vector<9x9xf32>, vector<9x32xf32>, vector<9x32xf32> -> vector<9x32xf32>
    %118 = vector.extract_strided_slice %39 {offsets = [9, 32], sizes = [9, 32], strides = [1, 1]} : vector<18x128xf32> to vector<9x32xf32>
    %119 = vector.extract_strided_slice %40 {offsets = [9, 32], sizes = [9, 32], strides = [1, 1]} : vector<18x128xf32> to vector<9x32xf32>
    %120 = vector.extract_strided_slice %41 {offsets = [9, 32], sizes = [9, 32], strides = [1, 1]} : vector<18x128xf32> to vector<9x32xf32>
    %cst_40 = arith.constant dense<0.000000e+00> : vector<9x9xf32>
    %121 = tpu.matmul %118, %119, %cst_40 {dimension_numbers = #tpu.dot_dimension_numbers<[1], [1], [0], [0], [0, 0, 1, 0], [], []>} : vector<9x32xf32>, vector<9x32xf32>, vector<9x9xf32> -> vector<9x9xf32>
    %cst_41 = arith.constant dense<0xFF800000> : vector<9xf32>
    %122 = vector.multi_reduction <maximumf>, %121, %cst_41 [1] : vector<9x9xf32> to vector<9xf32>
    %123 = vector.shape_cast %122 : vector<9xf32> to vector<9x1xf32>
    %124 = vector.broadcast %123 : vector<9x1xf32> to vector<9x9xf32>
    %125 = arith.subf %121, %124 : vector<9x9xf32>
    %126 = math.exp %125 : vector<9x9xf32>
    %cst_42 = arith.constant dense<0.000000e+00> : vector<9xf32>
    %127 = vector.multi_reduction <add>, %126, %cst_42 [1] : vector<9x9xf32> to vector<9xf32>
    %128 = vector.shape_cast %127 : vector<9xf32> to vector<9x1xf32>
    %129 = tpu.reciprocal %128 {approx = true} : vector<9x1xf32> -> vector<9x1xf32>
    %130 = vector.broadcast %129 : vector<9x1xf32> to vector<9x9xf32>
    %131 = arith.mulf %126, %130 : vector<9x9xf32>
    %cst_43 = arith.constant dense<0.000000e+00> : vector<9x32xf32>
    %132 = tpu.matmul %131, %120, %cst_43 {dimension_numbers = #tpu.dot_dimension_numbers<[1], [0], [0], [1], [0, 0, 1, 1], [], []>} : vector<9x9xf32>, vector<9x32xf32>, vector<9x32xf32> -> vector<9x32xf32>
    %133 = vector.extract_strided_slice %39 {offsets = [9, 64], sizes = [9, 32], strides = [1, 1]} : vector<18x128xf32> to vector<9x32xf32>
    %134 = vector.extract_strided_slice %40 {offsets = [9, 64], sizes = [9, 32], strides = [1, 1]} : vector<18x128xf32> to vector<9x32xf32>
    %135 = vector.extract_strided_slice %41 {offsets = [9, 64], sizes = [9, 32], strides = [1, 1]} : vector<18x128xf32> to vector<9x32xf32>
    %cst_44 = arith.constant dense<0.000000e+00> : vector<9x9xf32>
    %136 = tpu.matmul %133, %134, %cst_44 {dimension_numbers = #tpu.dot_dimension_numbers<[1], [1], [0], [0], [0, 0, 1, 0], [], []>} : vector<9x32xf32>, vector<9x32xf32>, vector<9x9xf32> -> vector<9x9xf32>
    %cst_45 = arith.constant dense<0xFF800000> : vector<9xf32>
    %137 = vector.multi_reduction <maximumf>, %136, %cst_45 [1] : vector<9x9xf32> to vector<9xf32>
    %138 = vector.shape_cast %137 : vector<9xf32> to vector<9x1xf32>
    %139 = vector.broadcast %138 : vector<9x1xf32> to vector<9x9xf32>
    %140 = arith.subf %136, %139 : vector<9x9xf32>
    %141 = math.exp %140 : vector<9x9xf32>
    %cst_46 = arith.constant dense<0.000000e+00> : vector<9xf32>
    %142 = vector.multi_reduction <add>, %141, %cst_46 [1] : vector<9x9xf32> to vector<9xf32>
    %143 = vector.shape_cast %142 : vector<9xf32> to vector<9x1xf32>
    %144 = tpu.reciprocal %143 {approx = true} : vector<9x1xf32> -> vector<9x1xf32>
    %145 = vector.broadcast %144 : vector<9x1xf32> to vector<9x9xf32>
    %146 = arith.mulf %141, %145 : vector<9x9xf32>
    %cst_47 = arith.constant dense<0.000000e+00> : vector<9x32xf32>
    %147 = tpu.matmul %146, %135, %cst_47 {dimension_numbers = #tpu.dot_dimension_numbers<[1], [0], [0], [1], [0, 0, 1, 1], [], []>} : vector<9x9xf32>, vector<9x32xf32>, vector<9x32xf32> -> vector<9x32xf32>
    %148 = vector.extract_strided_slice %39 {offsets = [9, 96], sizes = [9, 32], strides = [1, 1]} : vector<18x128xf32> to vector<9x32xf32>
    %149 = vector.extract_strided_slice %40 {offsets = [9, 96], sizes = [9, 32], strides = [1, 1]} : vector<18x128xf32> to vector<9x32xf32>
    %150 = vector.extract_strided_slice %41 {offsets = [9, 96], sizes = [9, 32], strides = [1, 1]} : vector<18x128xf32> to vector<9x32xf32>
    %cst_48 = arith.constant dense<0.000000e+00> : vector<9x9xf32>
    %151 = tpu.matmul %148, %149, %cst_48 {dimension_numbers = #tpu.dot_dimension_numbers<[1], [1], [0], [0], [0, 0, 1, 0], [], []>} : vector<9x32xf32>, vector<9x32xf32>, vector<9x9xf32> -> vector<9x9xf32>
    %cst_49 = arith.constant dense<0xFF800000> : vector<9xf32>
    %152 = vector.multi_reduction <maximumf>, %151, %cst_49 [1] : vector<9x9xf32> to vector<9xf32>
    %153 = vector.shape_cast %152 : vector<9xf32> to vector<9x1xf32>
    %154 = vector.broadcast %153 : vector<9x1xf32> to vector<9x9xf32>
    %155 = arith.subf %151, %154 : vector<9x9xf32>
    %156 = math.exp %155 : vector<9x9xf32>
    %cst_50 = arith.constant dense<0.000000e+00> : vector<9xf32>
    %157 = vector.multi_reduction <add>, %156, %cst_50 [1] : vector<9x9xf32> to vector<9xf32>
    %158 = vector.shape_cast %157 : vector<9xf32> to vector<9x1xf32>
    %159 = tpu.reciprocal %158 {approx = true} : vector<9x1xf32> -> vector<9x1xf32>
    %160 = vector.broadcast %159 : vector<9x1xf32> to vector<9x9xf32>
    %161 = arith.mulf %156, %160 : vector<9x9xf32>
    %cst_51 = arith.constant dense<0.000000e+00> : vector<9x32xf32>
    %162 = tpu.matmul %161, %150, %cst_51 {dimension_numbers = #tpu.dot_dimension_numbers<[1], [0], [0], [1], [0, 0, 1, 1], [], []>} : vector<9x9xf32>, vector<9x32xf32>, vector<9x32xf32> -> vector<9x32xf32>
    %163 = tpu.concatenate %117, %132, %147, %162 in 1 : vector<9x32xf32>, vector<9x32xf32>, vector<9x32xf32>, vector<9x32xf32> -> vector<9x128xf32>
    %164 = tpu.concatenate %102, %163 in 0 : vector<9x128xf32>, vector<9x128xf32> -> vector<18x128xf32>
    %c0_52 = arith.constant 0 : index
    %c0_53 = arith.constant 0 : index
    %c0_54 = arith.constant 0 : index
    %165 = vector.load %arg11[%c0_52, %c0_53, %c0_54] : memref<1x128x128xf32, #tpu.memory_space<vmem>>, vector<1x128x128xf32>
    %166 = vector.shape_cast %165 : vector<1x128x128xf32> to vector<128x128xf32>
    %cst_55 = arith.constant dense<0.000000e+00> : vector<18x128xf32>
    %167 = tpu.matmul %164, %166, %cst_55 {dimension_numbers = #tpu.dot_dimension_numbers<[1], [0], [0], [1], [0, 0, 1, 1], [], []>} : vector<18x128xf32>, vector<128x128xf32>, vector<18x128xf32> -> vector<18x128xf32>
    %c0_56 = arith.constant 0 : index
    %c0_57 = arith.constant 0 : index
    %c0_58 = arith.constant 0 : index
    %168 = vector.load %arg12[%c0_56, %c0_57, %c0_58] : memref<1x1x128xf32, #tpu.memory_space<vmem>>, vector<1x1x128xf32>
    %169 = vector.shape_cast %168 : vector<1x1x128xf32> to vector<1x128xf32>
    %170 = vector.broadcast %169 : vector<1x128xf32> to vector<18x128xf32>
    %171 = arith.addf %167, %170 : vector<18x128xf32>
    %172 = arith.addf %3, %171 : vector<18x128xf32>
    %c0_59 = arith.constant 0 : index
    %c0_60 = arith.constant 0 : index
    %c0_61 = arith.constant 0 : index
    %173 = vector.load %arg13[%c0_59, %c0_60, %c0_61] : memref<1x1x128xf32, #tpu.memory_space<vmem>>, vector<1x1x128xf32>
    %174 = vector.shape_cast %173 : vector<1x1x128xf32> to vector<1x128xf32>
    %c0_62 = arith.constant 0 : index
    %c0_63 = arith.constant 0 : index
    %c0_64 = arith.constant 0 : index
    %175 = vector.load %arg14[%c0_62, %c0_63, %c0_64] : memref<1x1x128xf32, #tpu.memory_space<vmem>>, vector<1x1x128xf32>
    %176 = vector.shape_cast %175 : vector<1x1x128xf32> to vector<1x128xf32>
    %cst_65 = arith.constant dense<0.000000e+00> : vector<18xf32>
    %177 = vector.multi_reduction <add>, %172, %cst_65 [1] : vector<18x128xf32> to vector<18xf32>
    %178 = vector.shape_cast %177 : vector<18xf32> to vector<18x1xf32>
    %cst_66 = arith.constant 1.280000e+02 : f32
    %179 = vector.broadcast %cst_66 : f32 to vector<18x1xf32>
    %180 = arith.divf %178, %179 : vector<18x1xf32>
    %181 = vector.broadcast %180 : vector<18x1xf32> to vector<18x128xf32>
    %182 = arith.subf %172, %181 : vector<18x128xf32>
    %183 = arith.mulf %182, %182 : vector<18x128xf32>
    %cst_67 = arith.constant dense<0.000000e+00> : vector<18xf32>
    %184 = vector.multi_reduction <add>, %183, %cst_67 [1] : vector<18x128xf32> to vector<18xf32>
    %185 = vector.shape_cast %184 : vector<18xf32> to vector<18x1xf32>
    %cst_68 = arith.constant 1.280000e+02 : f32
    %186 = vector.broadcast %cst_68 : f32 to vector<18x1xf32>
    %187 = arith.divf %185, %186 : vector<18x1xf32>
    %188 = vector.broadcast %180 : vector<18x1xf32> to vector<18x128xf32>
    %189 = arith.subf %172, %188 : vector<18x128xf32>
    %cst_69 = arith.constant 9.99999997E-7 : f32
    %190 = vector.broadcast %cst_69 : f32 to vector<18x1xf32>
    %191 = arith.addf %187, %190 : vector<18x1xf32>
    %192 = math.rsqrt %191 : vector<18x1xf32>
    %193 = vector.broadcast %192 : vector<18x1xf32> to vector<18x128xf32>
    %194 = arith.mulf %189, %193 : vector<18x128xf32>
    %195 = vector.broadcast %174 : vector<1x128xf32> to vector<18x128xf32>
    %196 = arith.mulf %194, %195 : vector<18x128xf32>
    %197 = vector.broadcast %176 : vector<1x128xf32> to vector<18x128xf32>
    %198 = arith.addf %196, %197 : vector<18x128xf32>
    %c0_70 = arith.constant 0 : index
    %c0_71 = arith.constant 0 : index
    %c0_72 = arith.constant 0 : index
    %199 = vector.load %arg15[%c0_70, %c0_71, %c0_72] : memref<1x128x256xf32, #tpu.memory_space<vmem>>, vector<1x128x256xf32>
    %200 = vector.shape_cast %199 : vector<1x128x256xf32> to vector<128x256xf32>
    %cst_73 = arith.constant dense<0.000000e+00> : vector<18x256xf32>
    %201 = tpu.matmul %198, %200, %cst_73 {dimension_numbers = #tpu.dot_dimension_numbers<[1], [0], [0], [1], [0, 0, 1, 1], [], []>} : vector<18x128xf32>, vector<128x256xf32>, vector<18x256xf32> -> vector<18x256xf32>
    %c0_74 = arith.constant 0 : index
    %c0_75 = arith.constant 0 : index
    %c0_76 = arith.constant 0 : index
    %202 = vector.load %arg16[%c0_74, %c0_75, %c0_76] : memref<1x1x256xf32, #tpu.memory_space<vmem>>, vector<1x1x256xf32>
    %203 = vector.shape_cast %202 : vector<1x1x256xf32> to vector<1x256xf32>
    %204 = vector.broadcast %203 : vector<1x256xf32> to vector<18x256xf32>
    %205 = arith.addf %201, %204 : vector<18x256xf32>
    %cst_77 = arith.constant 5.000000e-01 : f32
    %206 = vector.broadcast %cst_77 : f32 to vector<18x256xf32>
    %207 = arith.mulf %206, %205 : vector<18x256xf32>
    %cst_78 = arith.constant 4.471500e-02 : f32
    %208 = vector.broadcast %cst_78 : f32 to vector<18x256xf32>
    %209 = arith.mulf %208, %205 : vector<18x256xf32>
    %210 = arith.mulf %209, %205 : vector<18x256xf32>
    %211 = arith.mulf %210, %205 : vector<18x256xf32>
    %212 = arith.addf %205, %211 : vector<18x256xf32>
    %cst_79 = arith.constant 0.797884583 : f32
    %213 = vector.broadcast %cst_79 : f32 to vector<18x256xf32>
    %214 = arith.mulf %213, %212 : vector<18x256xf32>
    %215 = math.tanh %214 : vector<18x256xf32>
    %cst_80 = arith.constant 1.000000e+00 : f32
    %216 = vector.broadcast %cst_80 : f32 to vector<18x256xf32>
    %217 = arith.addf %216, %215 : vector<18x256xf32>
    %218 = arith.mulf %207, %217 : vector<18x256xf32>
    %c0_81 = arith.constant 0 : index
    %c0_82 = arith.constant 0 : index
    %c0_83 = arith.constant 0 : index
    %219 = vector.load %arg17[%c0_81, %c0_82, %c0_83] : memref<1x256x128xf32, #tpu.memory_space<vmem>>, vector<1x256x128xf32>
    %220 = vector.shape_cast %219 : vector<1x256x128xf32> to vector<256x128xf32>
    %cst_84 = arith.constant dense<0.000000e+00> : vector<18x128xf32>
    %221 = tpu.matmul %218, %220, %cst_84 {dimension_numbers = #tpu.dot_dimension_numbers<[1], [0], [0], [1], [0, 0, 1, 1], [], []>} : vector<18x256xf32>, vector<256x128xf32>, vector<18x128xf32> -> vector<18x128xf32>
    %c0_85 = arith.constant 0 : index
    %c0_86 = arith.constant 0 : index
    %c0_87 = arith.constant 0 : index
    %222 = vector.load %arg18[%c0_85, %c0_86, %c0_87] : memref<1x1x128xf32, #tpu.memory_space<vmem>>, vector<1x1x128xf32>
    %223 = vector.shape_cast %222 : vector<1x1x128xf32> to vector<1x128xf32>
    %224 = vector.broadcast %223 : vector<1x128xf32> to vector<18x128xf32>
    %225 = arith.addf %221, %224 : vector<18x128xf32>
    %226 = arith.addf %172, %225 : vector<18x128xf32>
    %c0_88 = arith.constant 0 : index
    %c0_89 = arith.constant 0 : index
    %227 = vector.load %arg22[%c0_88, %c0_89] : memref<18x128xf32, #tpu.memory_space<vmem>>, vector<18x128xf32>
    tpu.vector_store %arg22[%c0_88, %c0_89], %226 {strides = array<i32>} : memref<18x128xf32, #tpu.memory_space<vmem>>, vector<18x128xf32>,
    %c1_i32 = arith.constant 1 : i32
    %228 = arith.cmpi eq, %arg0, %c1_i32 : i32
    %229 = arith.extui %228 : i1 to i32
    %c0_i32_90 = arith.constant 0 : i32
    %230 = arith.cmpi ne, %229, %c0_i32_90 : i32
    scf.if %230 {
      %231 = vector.extract_strided_slice %226 {offsets = [0, 0], sizes = [1, 128], strides = [1, 1]} : vector<18x128xf32> to vector<1x128xf32>
      %232 = vector.extract_strided_slice %226 {offsets = [9, 0], sizes = [1, 128], strides = [1, 1]} : vector<18x128xf32> to vector<1x128xf32>
      %233 = tpu.concatenate %231, %232 in 0 : vector<1x128xf32>, vector<1x128xf32> -> vector<2x128xf32>
      %c0_91 = arith.constant 0 : index
      %c0_92 = arith.constant 0 : index
      %234 = vector.load %arg19[%c0_91, %c0_92] : memref<1x128xf32, #tpu.memory_space<vmem>>, vector<1x128xf32>
      %c0_93 = arith.constant 0 : index
      %c0_94 = arith.constant 0 : index
      %235 = vector.load %arg20[%c0_93, %c0_94] : memref<1x128xf32, #tpu.memory_space<vmem>>, vector<1x128xf32>
      %cst_95 = arith.constant dense<0.000000e+00> : vector<2xf32>
      %236 = vector.multi_reduction <add>, %233, %cst_95 [1] : vector<2x128xf32> to vector<2xf32>
      %237 = vector.shape_cast %236 : vector<2xf32> to vector<2x1xf32>
      %cst_96 = arith.constant 1.280000e+02 : f32
      %238 = vector.broadcast %cst_96 : f32 to vector<2x1xf32>
      %239 = arith.divf %237, %238 : vector<2x1xf32>
      %240 = vector.broadcast %239 : vector<2x1xf32> to vector<2x128xf32>
      %241 = arith.subf %233, %240 : vector<2x128xf32>
      %242 = arith.mulf %241, %241 : vector<2x128xf32>
      %cst_97 = arith.constant dense<0.000000e+00> : vector<2xf32>
      %243 = vector.multi_reduction <add>, %242, %cst_97 [1] : vector<2x128xf32> to vector<2xf32>
      %244 = vector.shape_cast %243 : vector<2xf32> to vector<2x1xf32>
      %cst_98 = arith.constant 1.280000e+02 : f32
      %245 = vector.broadcast %cst_98 : f32 to vector<2x1xf32>
      %246 = arith.divf %244, %245 : vector<2x1xf32>
      %247 = vector.broadcast %239 : vector<2x1xf32> to vector<2x128xf32>
      %248 = arith.subf %233, %247 : vector<2x128xf32>
      %cst_99 = arith.constant 9.99999997E-7 : f32
      %249 = vector.broadcast %cst_99 : f32 to vector<2x1xf32>
      %250 = arith.addf %246, %249 : vector<2x1xf32>
      %251 = math.rsqrt %250 : vector<2x1xf32>
      %252 = vector.broadcast %251 : vector<2x1xf32> to vector<2x128xf32>
      %253 = arith.mulf %248, %252 : vector<2x128xf32>
      %254 = vector.broadcast %234 : vector<1x128xf32> to vector<2x128xf32>
      %255 = arith.mulf %253, %254 : vector<2x128xf32>
      %256 = vector.broadcast %235 : vector<1x128xf32> to vector<2x128xf32>
      %257 = arith.addf %255, %256 : vector<2x128xf32>
      %c0_100 = arith.constant 0 : index
      %c0_101 = arith.constant 0 : index
      %258 = vector.load %arg21[%c0_100, %c0_101] : memref<2x128xf32, #tpu.memory_space<vmem>>, vector<2x128xf32>
      tpu.vector_store %arg21[%c0_100, %c0_101], %257 {strides = array<i32>} : memref<2x128xf32, #tpu.memory_space<vmem>>, vector<2x128xf32>,
    } else {
    }
    return
  }
  func.func @transform_0(%arg0: i32, %arg1: memref<16xi32, #tpu.memory_space<smem>>) -> (i32, i32) {
    %c0_i32 = arith.constant 0 : i32
    %c0_i32_0 = arith.constant 0 : i32
    %c0_i32_1 = arith.constant 0 : i32
    return %c0_i32, %c0_i32_0 : i32, i32
  }
  func.func @transform_1(%arg0: i32, %arg1: memref<16xi32, #tpu.memory_space<smem>>) -> (i32, i32) {
    %c0_i32 = arith.constant 0 : i32
    %c0_i32_0 = arith.constant 0 : i32
    %c0_i32_1 = arith.constant 0 : i32
    return %c0_i32, %c0_i32_0 : i32, i32
  }
  func.func @transform_2(%arg0: i32, %arg1: memref<16xi32, #tpu.memory_space<smem>>) -> (i32, i32) {
    %c0_i32 = arith.constant 0 : i32
    %c0_i32_0 = arith.constant 0 : i32
    %c0_i32_1 = arith.constant 0 : i32
    return %c0_i32, %c0_i32_0 : i32, i32
  }
  func.func @transform_3(%arg0: i32, %arg1: memref<16xi32, #tpu.memory_space<smem>>) -> (i32, i32) {
    %c0_i32 = arith.constant 0 : i32
    %c0_i32_0 = arith.constant 0 : i32
    %c0_i32_1 = arith.constant 0 : i32
    return %c0_i32, %c0_i32_0 : i32, i32
  }
  func.func @transform_4(%arg0: i32, %arg1: memref<16xi32, #tpu.memory_space<smem>>) -> (i32, i32) {
    %c0_i32 = arith.constant 0 : i32
    %c0_i32_0 = arith.constant 0 : i32
    %c0_i32_1 = arith.constant 0 : i32
    return %c0_i32, %c0_i32_0 : i32, i32
  }
  func.func @transform_5(%arg0: i32, %arg1: memref<16xi32, #tpu.memory_space<smem>>) -> (i32, i32, i32) {
    %c0_i32 = arith.constant 0 : i32
    %c0_i32_0 = arith.constant 0 : i32
    %c0_i32_1 = arith.constant 0 : i32
    return %arg0, %c0_i32, %c0_i32_0 : i32, i32, i32
  }
  func.func @transform_6(%arg0: i32, %arg1: memref<16xi32, #tpu.memory_space<smem>>) -> (i32, i32, i32) {
    %c0_i32 = arith.constant 0 : i32
    %c0_i32_0 = arith.constant 0 : i32
    %c0_i32_1 = arith.constant 0 : i32
    return %arg0, %c0_i32, %c0_i32_0 : i32, i32, i32
  }
  func.func @transform_7(%arg0: i32, %arg1: memref<16xi32, #tpu.memory_space<smem>>) -> (i32, i32, i32) {
    %c0_i32 = arith.constant 0 : i32
    %c0_i32_0 = arith.constant 0 : i32
    %c0_i32_1 = arith.constant 0 : i32
    return %arg0, %c0_i32, %c0_i32_0 : i32, i32, i32
  }
  func.func @transform_8(%arg0: i32, %arg1: memref<16xi32, #tpu.memory_space<smem>>) -> (i32, i32, i32) {
    %c0_i32 = arith.constant 0 : i32
    %c0_i32_0 = arith.constant 0 : i32
    %c0_i32_1 = arith.constant 0 : i32
    return %arg0, %c0_i32, %c0_i32_0 : i32, i32, i32
  }
  func.func @transform_9(%arg0: i32, %arg1: memref<16xi32, #tpu.memory_space<smem>>) -> (i32, i32, i32) {
    %c0_i32 = arith.constant 0 : i32
    %c0_i32_0 = arith.constant 0 : i32
    %c0_i32_1 = arith.constant 0 : i32
    return %arg0, %c0_i32, %c0_i32_0 : i32, i32, i32
  }
  func.func @transform_10(%arg0: i32, %arg1: memref<16xi32, #tpu.memory_space<smem>>) -> (i32, i32, i32) {
    %c0_i32 = arith.constant 0 : i32
    %c0_i32_0 = arith.constant 0 : i32
    %c0_i32_1 = arith.constant 0 : i32
    return %arg0, %c0_i32, %c0_i32_0 : i32, i32, i32
  }
  func.func @transform_11(%arg0: i32, %arg1: memref<16xi32, #tpu.memory_space<smem>>) -> (i32, i32, i32) {
    %c0_i32 = arith.constant 0 : i32
    %c0_i32_0 = arith.constant 0 : i32
    %c0_i32_1 = arith.constant 0 : i32
    return %arg0, %c0_i32, %c0_i32_0 : i32, i32, i32
  }
  func.func @transform_12(%arg0: i32, %arg1: memref<16xi32, #tpu.memory_space<smem>>) -> (i32, i32, i32) {
    %c0_i32 = arith.constant 0 : i32
    %c0_i32_0 = arith.constant 0 : i32
    %c0_i32_1 = arith.constant 0 : i32
    return %arg0, %c0_i32, %c0_i32_0 : i32, i32, i32
  }
  func.func @transform_13(%arg0: i32, %arg1: memref<16xi32, #tpu.memory_space<smem>>) -> (i32, i32, i32) {
    %c0_i32 = arith.constant 0 : i32
    %c0_i32_0 = arith.constant 0 : i32
    %c0_i32_1 = arith.constant 0 : i32
    return %arg0, %c0_i32, %c0_i32_0 : i32, i32, i32
  }
  func.func @transform_14(%arg0: i32, %arg1: memref<16xi32, #tpu.memory_space<smem>>) -> (i32, i32, i32) {
    %c0_i32 = arith.constant 0 : i32
    %c0_i32_0 = arith.constant 0 : i32
    %c0_i32_1 = arith.constant 0 : i32
    return %arg0, %c0_i32, %c0_i32_0 : i32, i32, i32
  }
  func.func @transform_15(%arg0: i32, %arg1: memref<16xi32, #tpu.memory_space<smem>>) -> (i32, i32, i32) {
    %c0_i32 = arith.constant 0 : i32
    %c0_i32_0 = arith.constant 0 : i32
    %c0_i32_1 = arith.constant 0 : i32
    return %arg0, %c0_i32, %c0_i32_0 : i32, i32, i32
  }
  func.func @transform_16(%arg0: i32, %arg1: memref<16xi32, #tpu.memory_space<smem>>) -> (i32, i32, i32) {
    %c0_i32 = arith.constant 0 : i32
    %c0_i32_0 = arith.constant 0 : i32
    %c0_i32_1 = arith.constant 0 : i32
    return %arg0, %c0_i32, %c0_i32_0 : i32, i32, i32
  }
  func.func @transform_17(%arg0: i32, %arg1: memref<16xi32, #tpu.memory_space<smem>>) -> (i32, i32) {
    %c0_i32 = arith.constant 0 : i32
    %c0_i32_0 = arith.constant 0 : i32
    %c0_i32_1 = arith.constant 0 : i32
    return %c0_i32, %c0_i32_0 : i32, i32
  }
  func.func @transform_18(%arg0: i32, %arg1: memref<16xi32, #tpu.memory_space<smem>>) -> (i32, i32) {
    %c0_i32 = arith.constant 0 : i32
    %c0_i32_0 = arith.constant 0 : i32
    %c0_i32_1 = arith.constant 0 : i32
    return %c0_i32, %c0_i32_0 : i32, i32
  }
  func.func @transform_19(%arg0: i32, %arg1: memref<16xi32, #tpu.memory_space<smem>>) -> (i32, i32) {
    %c0_i32 = arith.constant 0 : i32
    %c0_i32_0 = arith.constant 0 : i32
    %c0_i32_1 = arith.constant 0 : i32
    return %c0_i32, %c0_i32_0 : i32, i32
  }
}

</mosaic_0001>

<llo_original>
// kernel: vit_forward.1
$region0: #{vit_forward.1}
  #allocation0 [shape = 'u32[]', space=smem, size = 0x4, offset = 0x4, fixed_abs, tag = 'smem constant byte address 0x4 - core index']
  #allocation1 [shape = 'u32[144,128]{1,0:T(1,128)}', space=vmem, size = 0x12000, scoped, tag = 'internal scratch']
  #allocation2 [shape = 'f32[18,128]{1,0:T(8,128)}', space=vmem, size = 0x3000, scoped, tag = 'scratch operand']
  #allocation3 [shape = 's32[1]{0}', space=sflag, size = 0x4, scoped, tag = 'scoped memory for vit_forward.1']
  #allocation4 [shape = 'u8[512]{0}', space=smem, size = 0x200, scoped, tag = 'prefetched SMEM operand 0']
  %s0 = inlined_call_operand.vmem [shape: s32[16], index: 0, kind: input, shape index: {}]
  %s1 = inlined_call_operand.vmem [shape: f32[16,768], index: 1, kind: input, shape index: {}]
  %s2 = inlined_call_operand.vmem [shape: f32[768,128], index: 2, kind: input, shape index: {}]
  %s3 = inlined_call_operand.vmem [shape: f32[1,128], index: 3, kind: input, shape index: {}]
  %s4 = inlined_call_operand.vmem [shape: f32[17,128], index: 4, kind: input, shape index: {}]
  %s5 = inlined_call_operand.vmem [shape: f32[1,128], index: 5, kind: input, shape index: {}]
  %s6 = inlined_call_operand.vmem [shape: f32[2,1,128], index: 6, kind: input, shape index: {}]
  %s7 = inlined_call_operand.vmem [shape: f32[2,1,128], index: 7, kind: input, shape index: {}]
  %s8 = inlined_call_operand.hbm [shape: f32[2,128,384], index: 8, kind: input, shape index: {}]
  %s9 = inlined_call_operand.vmem [shape: f32[2,1,384], index: 9, kind: input, shape index: {}]
  %s10 = inlined_call_operand.hbm [shape: f32[2,128,128], index: 10, kind: input, shape index: {}]
  %s11 = inlined_call_operand.vmem [shape: f32[2,1,128], index: 11, kind: input, shape index: {}]
  %s12 = inlined_call_operand.vmem [shape: f32[2,1,128], index: 12, kind: input, shape index: {}]
  %s13 = inlined_call_operand.vmem [shape: f32[2,1,128], index: 13, kind: input, shape index: {}]
  %s14 = inlined_call_operand.hbm [shape: f32[2,128,256], index: 14, kind: input, shape index: {}]
  %s15 = inlined_call_operand.vmem [shape: f32[2,1,256], index: 15, kind: input, shape index: {}]
  %s16 = inlined_call_operand.hbm [shape: f32[2,256,128], index: 16, kind: input, shape index: {}]
  %s17 = inlined_call_operand.vmem [shape: f32[2,1,128], index: 17, kind: input, shape index: {}]
  %s18 = inlined_call_operand.vmem [shape: f32[1,128], index: 18, kind: input, shape index: {}]
  %s19 = inlined_call_operand.vmem [shape: f32[1,128], index: 19, kind: input, shape index: {}]
  %s20 = inlined_call_operand.hbm [shape: f32[2,128], index: 20, kind: output, shape index: {}]
  %s21 = sld [smem:[#allocation0]]
  $region133: #{vit_forward.1} parent=0
    _
  %s23 = ssub.s32 1, %s21
  %s24 = scalar_select 0, %s23, %s21
  %s25 = sshll.u32 %s0, 4
  %s26 = int_to_ptr.vmem [resolvable:$true] %s25
  %28 = dma.vmem_to_smem %s26, 16, [#allocation4], [#allocation3]
  %29 = dma.done [#allocation3], 16
  %30 = sfence
  $region1: #{vit_forward.1} parent=0
    #allocation5 [shape = 'u8[393216]{0}', space=vmem, size = 0x60000, scoped, tag = 'input window, operand 8']
    #allocation6 [shape = 's32[2]{0}', space=sflag, size = 0x8, scoped, tag = 'scoped memory for vit_forward.1']
    #allocation7 [shape = 's32[2]{0}', space=sflag, size = 0x8, scoped, tag = 'scoped memory for vit_forward.1']
    #allocation8 [shape = 'u8[131072]{0}', space=vmem, size = 0x20000, scoped, tag = 'input window, operand 10']
    #allocation9 [shape = 's32[2]{0}', space=sflag, size = 0x8, scoped, tag = 'scoped memory for vit_forward.1']
    #allocation10 [shape = 'u8[262144]{0}', space=vmem, size = 0x40000, scoped, tag = 'input window, operand 14']
    #allocation11 [shape = 'u8[262144]{0}', space=vmem, size = 0x40000, scoped, tag = 'input window, operand 16']
    #allocation12 [shape = 's32[2]{0}', space=sflag, size = 0x8, scoped, tag = 'scoped memory for vit_forward.1']
    #allocation13 [shape = 'u8[1024]{0}', space=vmem, size = 0x400, scoped, tag = 'output window, operand 0, single buffered']
    %31 = vsyncpa [#allocation6], 0
    %s32 = scalar_lea.sflag [#allocation6], 1
    %33 = vsyncpa %s32, 0
    %34 = vsyncpa [#allocation9], 0
    %s35 = scalar_lea.sflag [#allocation9], 1
    %36 = vsyncpa %s35, 0
    %37 = vsyncpa [#allocation12], 0
    %s38 = scalar_lea.sflag [#allocation12], 1
    %39 = vsyncpa %s38, 0
    %40 = vsyncpa [#allocation7], 0
    loop: start=0, step=1, limit=4
    $region2: #{vit_forward.1} parent=1 // loop_pre_header
      _
    $region3: #{vit_forward.1} parent=1 // loop_header
      %s42 = sphi 0, %s46
      %p43 = scmp.ge.s32.totalorder %s42, 4
      %s50 = sphi 0, %s50
      %s52 = sphi 0, %s50
      %s53 = sphi 0, %s52
      %s67 = sphi 0, %s53
      %s71 = sphi 0, %s71
      %s73 = sphi 0, %s71
      %s74 = sphi 0, %s73
      %s88 = sphi 0, %s74
      %s92 = sphi 0, %s92
      %s94 = sphi 0, %s92
      %s95 = sphi 0, %s94
      %s109 = sphi 0, %s95
      %s113 = sphi 0, %s113
      %s115 = sphi 0, %s113
      %s116 = sphi 0, %s115
      %s130 = sphi 0, %s116
      %s134 = sphi 0, %s134
      %s136 = sphi 0, %s134
      %s137 = sphi 0, %s136
      %s151 = sphi 0, %s137
      %s157 = sphi 0, %s159
      %s160 = sphi 0, %s157
      %s161 = sphi 0, %s160
      %s177 = sphi 0, %s161
      %s183 = sphi 0, %s185
      %s186 = sphi 0, %s183
      %s187 = sphi 0, %s186
      %s203 = sphi 0, %s187
      %s209 = sphi 0, %s211
      %s212 = sphi 0, %s209
      %s213 = sphi 0, %s212
      %s229 = sphi 0, %s213
      %s235 = sphi 0, %s237
      %s238 = sphi 0, %s235
      %s239 = sphi 0, %s238
      %s255 = sphi 0, %s239
      %s261 = sphi 0, %s263
      %s264 = sphi 0, %s261
      %s265 = sphi 0, %s264
      %s281 = sphi 0, %s265
      %s287 = sphi 0, %s289
      %s290 = sphi 0, %s287
      %s291 = sphi 0, %s290
      %s307 = sphi 0, %s291
      %s313 = sphi 0, %s315
      %s316 = sphi 0, %s313
      %s317 = sphi 0, %s316
      %s333 = sphi 0, %s317
      %s339 = sphi 0, %s341
      %s342 = sphi 0, %s339
      %s343 = sphi 0, %s342
      %s359 = sphi 0, %s343
      %s365 = sphi 0, %s367
      %s368 = sphi 0, %s365
      %s369 = sphi 0, %s368
      %s385 = sphi 0, %s369
      %s391 = sphi 0, %s393
      %s394 = sphi 0, %s391
      %s395 = sphi 0, %s394
      %s411 = sphi 0, %s395
      %s417 = sphi 0, %s419
      %s420 = sphi 0, %s417
      %s421 = sphi 0, %s420
      %s437 = sphi 0, %s421
      %s443 = sphi 0, %s445
      %s446 = sphi 0, %s443
      %s447 = sphi 0, %s446
      %s463 = sphi 0, %s447
      %s467 = sphi 0, %s467
      %s469 = sphi 0, %s467
      %s470 = sphi 0, %s469
      %s484 = sphi 0, %s470
      %s488 = sphi 0, %s488
      %s490 = sphi 0, %s488
      %s491 = sphi 0, %s490
      %s505 = sphi 0, %s491
      %s509 = sphi 0, %s509
      %s511 = sphi 0, %s509
      %s512 = sphi 0, %s511
      %s526 = sphi 0, %s512
    $region4: #{vit_forward.1} parent=1 // loop_header_branch
      %45 = sbr.rel (%p43) target = $region8
    $region5: #{vit_forward.1} parent=1 // loop_body
      %s47 = ssub.s32 %s42, 1
      %s48 = ssub.s32 %s42, 2
      %s49 = sadd.s32 %s42, 1
      %s51 = sadd.s32 %s50, 1
      %p54 = scmp.eq.s32.totalorder %s42, 1
      %p55 = scmp.ne.s32.totalorder %s50, %s52
      %p56 = scmp.eq.s32.totalorder %s42, 0
      %p57 = por %p55, %p56
      %p58 = scmp.ne.s32.totalorder %s50, %s52
      %p59 = scmp.eq.s32.totalorder %s47, 1
      %p60 = por %p58, %p59
      %p61 = scmp.ne.s32.totalorder %s52, %s53
      %p62 = scmp.eq.s32.totalorder %s47, 0
      %p63 = por %p61, %p62
      %p64 = scmp.ne.s32.totalorder %s52, %s53
      %p65 = scmp.eq.s32.totalorder %s48, 1
      %p66 = por %p64, %p65
      %p68 = scmp.ne.s32.totalorder %s53, %s67
      %p69 = scmp.eq.s32.totalorder %s48, 0
      %p70 = por %p68, %p69
      %s72 = sadd.s32 %s71, 1
      %p75 = scmp.eq.s32.totalorder %s42, 1
      %p76 = scmp.ne.s32.totalorder %s71, %s73
      %p77 = scmp.eq.s32.totalorder %s42, 0
      %p78 = por %p76, %p77
      %p79 = scmp.ne.s32.totalorder %s71, %s73
      %p80 = scmp.eq.s32.totalorder %s47, 1
      %p81 = por %p79, %p80
      %p82 = scmp.ne.s32.totalorder %s73, %s74
      %p83 = scmp.eq.s32.totalorder %s47, 0
      %p84 = por %p82, %p83
      %p85 = scmp.ne.s32.totalorder %s73, %s74
      %p86 = scmp.eq.s32.totalorder %s48, 1
      %p87 = por %p85, %p86
      %p89 = scmp.ne.s32.totalorder %s74, %s88
      %p90 = scmp.eq.s32.totalorder %s48, 0
      %p91 = por %p89, %p90
      %s93 = sadd.s32 %s92, 1
      %p96 = scmp.eq.s32.totalorder %s42, 1
      %p97 = scmp.ne.s32.totalorder %s92, %s94
      %p98 = scmp.eq.s32.totalorder %s42, 0
      %p99 = por %p97, %p98
      %p100 = scmp.ne.s32.totalorder %s92, %s94
      %p101 = scmp.eq.s32.totalorder %s47, 1
      %p102 = por %p100, %p101
      %p103 = scmp.ne.s32.totalorder %s94, %s95
      %p104 = scmp.eq.s32.totalorder %s47, 0
      %p105 = por %p103, %p104
      %p106 = scmp.ne.s32.totalorder %s94, %s95
      %p107 = scmp.eq.s32.totalorder %s48, 1
      %p108 = por %p106, %p107
      %p110 = scmp.ne.s32.totalorder %s95, %s109
      %p111 = scmp.eq.s32.totalorder %s48, 0
      %p112 = por %p110, %p111
      %s114 = sadd.s32 %s113, 1
      %p117 = scmp.eq.s32.totalorder %s42, 1
      %p118 = scmp.ne.s32.totalorder %s113, %s115
      %p119 = scmp.eq.s32.totalorder %s42, 0
      %p120 = por %p118, %p119
      %p121 = scmp.ne.s32.totalorder %s113, %s115
      %p122 = scmp.eq.s32.totalorder %s47, 1
      %p123 = por %p121, %p122
      %p124 = scmp.ne.s32.totalorder %s115, %s116
      %p125 = scmp.eq.s32.totalorder %s47, 0
      %p126 = por %p124, %p125
      %p127 = scmp.ne.s32.totalorder %s115, %s116
      %p128 = scmp.eq.s32.totalorder %s48, 1
      %p129 = por %p127, %p128
      %p131 = scmp.ne.s32.totalorder %s116, %s130
      %p132 = scmp.eq.s32.totalorder %s48, 0
      %p133 = por %p131, %p132
      %s135 = sadd.s32 %s134, 1
      %p138 = scmp.eq.s32.totalorder %s42, 1
      %p139 = scmp.ne.s32.totalorder %s134, %s136
      %p140 = scmp.eq.s32.totalorder %s42, 0
      %p141 = por %p139, %p140
      %p142 = scmp.ne.s32.totalorder %s134, %s136
      %p143 = scmp.eq.s32.totalorder %s47, 1
      %p144 = por %p142, %p143
      %p145 = scmp.ne.s32.totalorder %s136, %s137
      %p146 = scmp.eq.s32.totalorder %s47, 0
      %p147 = por %p145, %p146
      %p148 = scmp.ne.s32.totalorder %s136, %s137
      %p149 = scmp.eq.s32.totalorder %s48, 1
      %p150 = por %p148, %p149
      %p152 = scmp.ne.s32.totalorder %s137, %s151
      %p153 = scmp.eq.s32.totalorder %s48, 0
      %p154 = por %p152, %p153
      %s155 = ssub.s32 %s42, %s49
      %p156 = scmp.eq.s32.totalorder %s155, 0
      %s158 = sadd.s32 %s157, 1
      %s159 = scalar_select %p156, %s157, %s158
      %p162 = pneg %p156
      %p163 = scmp.eq.s32.totalorder %s42, 1
      %p164 = por %p162, %p163
      %p165 = scmp.ne.s32.totalorder %s157, %s160
      %p166 = scmp.eq.s32.totalorder %s42, 0
      %p167 = por %p165, %p166
      %p168 = scmp.ne.s32.totalorder %s157, %s160
      %p169 = scmp.eq.s32.totalorder %s47, 1
      %p170 = por %p168, %p169
      %p171 = scmp.ne.s32.totalorder %s160, %s161
      %p172 = scmp.eq.s32.totalorder %s47, 0
      %p173 = por %p171, %p172
      %p174 = scmp.ne.s32.totalorder %s160, %s161
      %p175 = scmp.eq.s32.totalorder %s48, 1
      %p176 = por %p174, %p175
      %p178 = scmp.ne.s32.totalorder %s161, %s177
      %p179 = scmp.eq.s32.totalorder %s48, 0
      %p180 = por %p178, %p179
      %s181 = ssub.s32 %s42, %s49
      %p182 = scmp.eq.s32.totalorder %s181, 0
      %s184 = sadd.s32 %s183, 1
      %s185 = scalar_select %p182, %s183, %s184
      %p188 = pneg %p182
      %p189 = scmp.eq.s32.totalorder %s42, 1
      %p190 = por %p188, %p189
      %p191 = scmp.ne.s32.totalorder %s183, %s186
      %p192 = scmp.eq.s32.totalorder %s42, 0
      %p193 = por %p191, %p192
      %p194 = scmp.ne.s32.totalorder %s183, %s186
      %p195 = scmp.eq.s32.totalorder %s47, 1
      %p196 = por %p194, %p195
      %p197 = scmp.ne.s32.totalorder %s186, %s187
      %p198 = scmp.eq.s32.totalorder %s47, 0
      %p199 = por %p197, %p198
      %p200 = scmp.ne.s32.totalorder %s186, %s187
      %p201 = scmp.eq.s32.totalorder %s48, 1
      %p202 = por %p200, %p201
      %p204 = scmp.ne.s32.totalorder %s187, %s203
      %p205 = scmp.eq.s32.totalorder %s48, 0
      %p206 = por %p204, %p205
      %s207 = ssub.s32 %s42, %s49
      %p208 = scmp.eq.s32.totalorder %s207, 0
      %s210 = sadd.s32 %s209, 1
      %s211 = scalar_select %p208, %s209, %s210
      %p214 = pneg %p208
      %p215 = scmp.eq.s32.totalorder %s42, 1
      %p216 = por %p214, %p215
      %p217 = scmp.ne.s32.totalorder %s209, %s212
      %p218 = scmp.eq.s32.totalorder %s42, 0
      %p219 = por %p217, %p218
      %p220 = scmp.ne.s32.totalorder %s209, %s212
      %p221 = scmp.eq.s32.totalorder %s47, 1
      %p222 = por %p220, %p221
      %p223 = scmp.ne.s32.totalorder %s212, %s213
      %p224 = scmp.eq.s32.totalorder %s47, 0
      %p225 = por %p223, %p224
      %p226 = scmp.ne.s32.totalorder %s212, %s213
      %p227 = scmp.eq.s32.totalorder %s48, 1
      %p228 = por %p226, %p227
      %p230 = scmp.ne.s32.totalorder %s213, %s229
      %p231 = scmp.eq.s32.totalorder %s48, 0
      %p232 = por %p230, %p231
      %s233 = ssub.s32 %s42, %s49
      %p234 = scmp.eq.s32.totalorder %s233, 0
      %s236 = sadd.s32 %s235, 1
      %s237 = scalar_select %p234, %s235, %s236
      %p240 = pneg %p234
      %p241 = scmp.eq.s32.totalorder %s42, 1
      %p242 = por %p240, %p241
      %p243 = scmp.ne.s32.totalorder %s235, %s238
      %p244 = scmp.eq.s32.totalorder %s42, 0
      %p245 = por %p243, %p244
      %p246 = scmp.ne.s32.totalorder %s235, %s238
      %p247 = scmp.eq.s32.totalorder %s47, 1
      %p248 = por %p246, %p247
      %p249 = scmp.ne.s32.totalorder %s238, %s239
      %p250 = scmp.eq.s32.totalorder %s47, 0
      %p251 = por %p249, %p250
      %p252 = scmp.ne.s32.totalorder %s238, %s239
      %p253 = scmp.eq.s32.totalorder %s48, 1
      %p254 = por %p252, %p253
      %p256 = scmp.ne.s32.totalorder %s239, %s255
      %p257 = scmp.eq.s32.totalorder %s48, 0
      %p258 = por %p256, %p257
      %s259 = ssub.s32 %s42, %s49
      %p260 = scmp.eq.s32.totalorder %s259, 0
      %s262 = sadd.s32 %s261, 1
      %s263 = scalar_select %p260, %s261, %s262
      %p266 = pneg %p260
      %p267 = scmp.eq.s32.totalorder %s42, 1
      %p268 = por %p266, %p267
      %p269 = scmp.ne.s32.totalorder %s261, %s264
      %p270 = scmp.eq.s32.totalorder %s42, 0
      %p271 = por %p269, %p270
      %p272 = scmp.ne.s32.totalorder %s261, %s264
      %p273 = scmp.eq.s32.totalorder %s47, 1
      %p274 = por %p272, %p273
      %p275 = scmp.ne.s32.totalorder %s264, %s265
      %p276 = scmp.eq.s32.totalorder %s47, 0
      %p277 = por %p275, %p276
      %p278 = scmp.ne.s32.totalorder %s264, %s265
      %p279 = scmp.eq.s32.totalorder %s48, 1
      %p280 = por %p278, %p279
      %p282 = scmp.ne.s32.totalorder %s265, %s281
      %p283 = scmp.eq.s32.totalorder %s48, 0
      %p284 = por %p282, %p283
      %s285 = ssub.s32 %s42, %s49
      %p286 = scmp.eq.s32.totalorder %s285, 0
      %s288 = sadd.s32 %s287, 1
      %s289 = scalar_select %p286, %s287, %s288
      %p292 = pneg %p286
      %p293 = scmp.eq.s32.totalorder %s42, 1
      %p294 = por %p292, %p293
      %p295 = scmp.ne.s32.totalorder %s287, %s290
      %p296 = scmp.eq.s32.totalorder %s42, 0
      %p297 = por %p295, %p296
      %p298 = scmp.ne.s32.totalorder %s287, %s290
      %p299 = scmp.eq.s32.totalorder %s47, 1
      %p300 = por %p298, %p299
      %p301 = scmp.ne.s32.totalorder %s290, %s291
      %p302 = scmp.eq.s32.totalorder %s47, 0
      %p303 = por %p301, %p302
      %p304 = scmp.ne.s32.totalorder %s290, %s291
      %p305 = scmp.eq.s32.totalorder %s48, 1
      %p306 = por %p304, %p305
      %p308 = scmp.ne.s32.totalorder %s291, %s307
      %p309 = scmp.eq.s32.totalorder %s48, 0
      %p310 = por %p308, %p309
      %s311 = ssub.s32 %s42, %s49
      %p312 = scmp.eq.s32.totalorder %s311, 0
      %s314 = sadd.s32 %s313, 1
      %s315 = scalar_select %p312, %s313, %s314
      %p318 = pneg %p312
      %p319 = scmp.eq.s32.totalorder %s42, 1
      %p320 = por %p318, %p319
      %p321 = scmp.ne.s32.totalorder %s313, %s316
      %p322 = scmp.eq.s32.totalorder %s42, 0
      %p323 = por %p321, %p322
      %p324 = scmp.ne.s32.totalorder %s313, %s316
      %p325 = scmp.eq.s32.totalorder %s47, 1
      %p326 = por %p324, %p325
      %p327 = scmp.ne.s32.totalorder %s316, %s317
      %p328 = scmp.eq.s32.totalorder %s47, 0
      %p329 = por %p327, %p328
      %p330 = scmp.ne.s32.totalorder %s316, %s317
      %p331 = scmp.eq.s32.totalorder %s48, 1
      %p332 = por %p330, %p331
      %p334 = scmp.ne.s32.totalorder %s317, %s333
      %p335 = scmp.eq.s32.totalorder %s48, 0
      %p336 = por %p334, %p335
      %s337 = ssub.s32 %s42, %s49
      %p338 = scmp.eq.s32.totalorder %s337, 0
      %s340 = sadd.s32 %s339, 1
      %s341 = scalar_select %p338, %s339, %s340
      %p344 = pneg %p338
      %p345 = scmp.eq.s32.totalorder %s42, 1
      %p346 = por %p344, %p345
      %p347 = scmp.ne.s32.totalorder %s339, %s342
      %p348 = scmp.eq.s32.totalorder %s42, 0
      %p349 = por %p347, %p348
      %p350 = scmp.ne.s32.totalorder %s339, %s342
      %p351 = scmp.eq.s32.totalorder %s47, 1
      %p352 = por %p350, %p351
      %p353 = scmp.ne.s32.totalorder %s342, %s343
      %p354 = scmp.eq.s32.totalorder %s47, 0
      %p355 = por %p353, %p354
      %p356 = scmp.ne.s32.totalorder %s342, %s343
      %p357 = scmp.eq.s32.totalorder %s48, 1
      %p358 = por %p356, %p357
      %p360 = scmp.ne.s32.totalorder %s343, %s359
      %p361 = scmp.eq.s32.totalorder %s48, 0
      %p362 = por %p360, %p361
      %s363 = ssub.s32 %s42, %s49
      %p364 = scmp.eq.s32.totalorder %s363, 0
      %s366 = sadd.s32 %s365, 1
      %s367 = scalar_select %p364, %s365, %s366
      %p370 = pneg %p364
      %p371 = scmp.eq.s32.totalorder %s42, 1
      %p372 = por %p370, %p371
      %p373 = scmp.ne.s32.totalorder %s365, %s368
      %p374 = scmp.eq.s32.totalorder %s42, 0
      %p375 = por %p373, %p374
      %p376 = scmp.ne.s32.totalorder %s365, %s368
      %p377 = scmp.eq.s32.totalorder %s47, 1
      %p378 = por %p376, %p377
      %p379 = scmp.ne.s32.totalorder %s368, %s369
      %p380 = scmp.eq.s32.totalorder %s47, 0
      %p381 = por %p379, %p380
      %p382 = scmp.ne.s32.totalorder %s368, %s369
      %p383 = scmp.eq.s32.totalorder %s48, 1
      %p384 = por %p382, %p383
      %p386 = scmp.ne.s32.totalorder %s369, %s385
      %p387 = scmp.eq.s32.totalorder %s48, 0
      %p388 = por %p386, %p387
      %s389 = ssub.s32 %s42, %s49
      %p390 = scmp.eq.s32.totalorder %s389, 0
      %s392 = sadd.s32 %s391, 1
      %s393 = scalar_select %p390, %s391, %s392
      %p396 = pneg %p390
      %p397 = scmp.eq.s32.totalorder %s42, 1
      %p398 = por %p396, %p397
      %p399 = scmp.ne.s32.totalorder %s391, %s394
      %p400 = scmp.eq.s32.totalorder %s42, 0
      %p401 = por %p399, %p400
      %p402 = scmp.ne.s32.totalorder %s391, %s394
      %p403 = scmp.eq.s32.totalorder %s47, 1
      %p404 = por %p402, %p403
      %p405 = scmp.ne.s32.totalorder %s394, %s395
      %p406 = scmp.eq.s32.totalorder %s47, 0
      %p407 = por %p405, %p406
      %p408 = scmp.ne.s32.totalorder %s394, %s395
      %p409 = scmp.eq.s32.totalorder %s48, 1
      %p410 = por %p408, %p409
      %p412 = scmp.ne.s32.totalorder %s395, %s411
      %p413 = scmp.eq.s32.totalorder %s48, 0
      %p414 = por %p412, %p413
      %s415 = ssub.s32 %s42, %s49
      %p416 = scmp.eq.s32.totalorder %s415, 0
      %s418 = sadd.s32 %s417, 1
      %s419 = scalar_select %p416, %s417, %s418
      %p422 = pneg %p416
      %p423 = scmp.eq.s32.totalorder %s42, 1
      %p424 = por %p422, %p423
      %p425 = scmp.ne.s32.totalorder %s417, %s420
      %p426 = scmp.eq.s32.totalorder %s42, 0
      %p427 = por %p425, %p426
      %p428 = scmp.ne.s32.totalorder %s417, %s420
      %p429 = scmp.eq.s32.totalorder %s47, 1
      %p430 = por %p428, %p429
      %p431 = scmp.ne.s32.totalorder %s420, %s421
      %p432 = scmp.eq.s32.totalorder %s47, 0
      %p433 = por %p431, %p432
      %p434 = scmp.ne.s32.totalorder %s420, %s421
      %p435 = scmp.eq.s32.totalorder %s48, 1
      %p436 = por %p434, %p435
      %p438 = scmp.ne.s32.totalorder %s421, %s437
      %p439 = scmp.eq.s32.totalorder %s48, 0
      %p440 = por %p438, %p439
      %s441 = ssub.s32 %s42, %s49
      %p442 = scmp.eq.s32.totalorder %s441, 0
      %s444 = sadd.s32 %s443, 1
      %s445 = scalar_select %p442, %s443, %s444
      %p448 = pneg %p442
      %p449 = scmp.eq.s32.totalorder %s42, 1
      %p450 = por %p448, %p449
      %p451 = scmp.ne.s32.totalorder %s443, %s446
      %p452 = scmp.eq.s32.totalorder %s42, 0
      %p453 = por %p451, %p452
      %p454 = scmp.ne.s32.totalorder %s443, %s446
      %p455 = scmp.eq.s32.totalorder %s47, 1
      %p456 = por %p454, %p455
      %p457 = scmp.ne.s32.totalorder %s446, %s447
      %p458 = scmp.eq.s32.totalorder %s47, 0
      %p459 = por %p457, %p458
      %p460 = scmp.ne.s32.totalorder %s446, %s447
      %p461 = scmp.eq.s32.totalorder %s48, 1
      %p462 = por %p460, %p461
      %p464 = scmp.ne.s32.totalorder %s447, %s463
      %p465 = scmp.eq.s32.totalorder %s48, 0
      %p466 = por %p464, %p465
      %s468 = sadd.s32 %s467, 1
      %p471 = scmp.eq.s32.totalorder %s42, 1
      %p472 = scmp.ne.s32.totalorder %s467, %s469
      %p473 = scmp.eq.s32.totalorder %s42, 0
      %p474 = por %p472, %p473
      %p475 = scmp.ne.s32.totalorder %s467, %s469
      %p476 = scmp.eq.s32.totalorder %s47, 1
      %p477 = por %p475, %p476
      %p478 = scmp.ne.s32.totalorder %s469, %s470
      %p479 = scmp.eq.s32.totalorder %s47, 0
      %p480 = por %p478, %p479
      %p481 = scmp.ne.s32.totalorder %s469, %s470
      %p482 = scmp.eq.s32.totalorder %s48, 1
      %p483 = por %p481, %p482
      %p485 = scmp.ne.s32.totalorder %s470, %s484
      %p486 = scmp.eq.s32.totalorder %s48, 0
      %p487 = por %p485, %p486
      %s489 = sadd.s32 %s488, 1
      %p492 = scmp.eq.s32.totalorder %s42, 1
      %p493 = scmp.ne.s32.totalorder %s488, %s490
      %p494 = scmp.eq.s32.totalorder %s42, 0
      %p495 = por %p493, %p494
      %p496 = scmp.ne.s32.totalorder %s488, %s490
      %p497 = scmp.eq.s32.totalorder %s47, 1
      %p498 = por %p496, %p497
      %p499 = scmp.ne.s32.totalorder %s490, %s491
      %p500 = scmp.eq.s32.totalorder %s47, 0
      %p501 = por %p499, %p500
      %p502 = scmp.ne.s32.totalorder %s490, %s491
      %p503 = scmp.eq.s32.totalorder %s48, 1
      %p504 = por %p502, %p503
      %p506 = scmp.ne.s32.totalorder %s491, %s505
      %p507 = scmp.eq.s32.totalorder %s48, 0
      %p508 = por %p506, %p507
      %s510 = sadd.s32 %s509, 1
      %p513 = scmp.eq.s32.totalorder %s42, 1
      %p514 = scmp.ne.s32.totalorder %s509, %s511
      %p515 = scmp.eq.s32.totalorder %s42, 0
      %p516 = por %p514, %p515
      %p517 = scmp.ne.s32.totalorder %s509, %s511
      %p518 = scmp.eq.s32.totalorder %s47, 1
      %p519 = por %p517, %p518
      %p520 = scmp.ne.s32.totalorder %s511, %s512
      %p521 = scmp.eq.s32.totalorder %s47, 0
      %p522 = por %p520, %p521
      %p523 = scmp.ne.s32.totalorder %s511, %s512
      %p524 = scmp.eq.s32.totalorder %s48, 1
      %p525 = por %p523, %p524
      %p527 = scmp.ne.s32.totalorder %s512, %s526
      %p528 = scmp.eq.s32.totalorder %s48, 0
      %p529 = por %p527, %p528
      %p530 = scmp.le.s32.totalorder 1, %s42
      %p531 = scmp.lt.s32.totalorder %s42, 3
      %p532 = pnand %p530, %p531
      %p533 = pneg %p532
      // Predicated region
      $region9: #{vit_forward.1} parent=5 // pred_check
        _
      $region10: #{vit_forward.1} parent=5 // pred_check_branch
        %535 = sbr.rel (%p532) target = $region12
      $region11: #{vit_forward.1} parent=5 // pred_region
        %s536 = ssub.s32 %s42, 1
        // Predicated region
        $region13: #{vit_forward.1} parent=11 // pred_check
          %p537 = pneg %p63
        $region14: #{vit_forward.1} parent=11 // pred_check_branch
          %539 = sbr.rel (%p537) target = $region16
        $region15: #{vit_forward.1} parent=11 // pred_region
          _
        $region16: #{vit_forward.1} parent=11 // pred_fallthru
          _
        // Predicated region
        $region17: #{vit_forward.1} parent=11 // pred_check
          %p540 = pneg %p84
        $region18: #{vit_forward.1} parent=11 // pred_check_branch
          %542 = sbr.rel (%p540) target = $region20
        $region19: #{vit_forward.1} parent=11 // pred_region
          _
        $region20: #{vit_forward.1} parent=11 // pred_fallthru
          _
        // Predicated region
        $region21: #{vit_forward.1} parent=11 // pred_check
          %p543 = pneg %p105
        $region22: #{vit_forward.1} parent=11 // pred_check_branch
          %545 = sbr.rel (%p543) target = $region24
        $region23: #{vit_forward.1} parent=11 // pred_region
          _
        $region24: #{vit_forward.1} parent=11 // pred_fallthru
          _
        // Predicated region
        $region25: #{vit_forward.1} parent=11 // pred_check
          %p546 = pneg %p126
        $region26: #{vit_forward.1} parent=11 // pred_check_branch
          %548 = sbr.rel (%p546) target = $region28
        $region27: #{vit_forward.1} parent=11 // pred_region
          _
        $region28: #{vit_forward.1} parent=11 // pred_fallthru
          _
        // Predicated region
        $region29: #{vit_forward.1} parent=11 // pred_check
          %p549 = pneg %p147
        $region30: #{vit_forward.1} parent=11 // pred_check_branch
          %551 = sbr.rel (%p549) target = $region32
        $region31: #{vit_forward.1} parent=11 // pred_region
          _
        $region32: #{vit_forward.1} parent=11 // pred_fallthru
          _
        // Predicated region
        $region33: #{vit_forward.1} parent=11 // pred_check
          %p552 = pneg %p480
        $region34: #{vit_forward.1} parent=11 // pred_check_branch
          %554 = sbr.rel (%p552) target = $region36
        $region35: #{vit_forward.1} parent=11 // pred_region
          _
        $region36: #{vit_forward.1} parent=11 // pred_fallthru
          _
        // Predicated region
        $region37: #{vit_forward.1} parent=11 // pred_check
          %p555 = pneg %p501
        $region38: #{vit_forward.1} parent=11 // pred_check_branch
          %557 = sbr.rel (%p555) target = $region40
        $region39: #{vit_forward.1} parent=11 // pred_region
          _
        $region40: #{vit_forward.1} parent=11 // pred_fallthru
          _
      $region12: #{vit_forward.1} parent=5 // pred_fallthru
        _
      %p558 = scmp.lt.s32.totalorder %s42, 2
      // Predicated region
      $region41: #{vit_forward.1} parent=5 // pred_check
        %p559 = pneg %p558
      $region42: #{vit_forward.1} parent=5 // pred_check_branch
        %561 = sbr.rel (%p559) target = $region44
      $region43: #{vit_forward.1} parent=5 // pred_region
        // Predicated region
        $region45: #{vit_forward.1} parent=43 // pred_check
          %p562 = pneg %p167
        $region46: #{vit_forward.1} parent=43 // pred_check_branch
          %564 = sbr.rel (%p562) target = $region48
        $region47: #{vit_forward.1} parent=43 // pred_region
          %p565 = scmp.lt.s32.totalorder %s42, 1
          %s566 = scalar_select %p565, %s42, 1
          %s567 = scalar_lea.vmem %s6, %s566
        $region48: #{vit_forward.1} parent=43 // pred_fallthru
          _
        // Predicated region
        $region49: #{vit_forward.1} parent=43 // pred_check
          %p568 = pneg %p193
        $region50: #{vit_forward.1} parent=43 // pred_check_branch
          %570 = sbr.rel (%p568) target = $region52
        $region51: #{vit_forward.1} parent=43 // pred_region
          %p571 = scmp.lt.s32.totalorder %s42, 1
          %s572 = scalar_select %p571, %s42, 1
          %s573 = scalar_lea.vmem %s7, %s572
        $region52: #{vit_forward.1} parent=43 // pred_fallthru
          _
        // Predicated region
        $region53: #{vit_forward.1} parent=43 // pred_check
          %p574 = pneg %p219
        $region54: #{vit_forward.1} parent=43 // pred_check_branch
          %576 = sbr.rel (%p574) target = $region56
        $region55: #{vit_forward.1} parent=43 // pred_region
          %s577 = sand.u32 %s209, 1
          %s578 = scalar_lea.sflag [#allocation6], %s577
          %s579 = sand.u32 %s209, 1
          %s580 = smul.addr %s579, 384
          %s581 = scalar_lea.vmem [#allocation5], %s580
          %s583 = ssub.s32 6144, 6144
          %584 = vsyncadd %s578, %s583
          %s585 = smul.addr %s42, 48
          %s586 = smul.addr %s585, 128
          %s587 = scalar_lea.hbm %s8, %s586
          %s588 = sshll.u32 %s581, 4
          %s589 = int_to_ptr.vmem [resolvable:$true] %s588
          %594 = dma.hbm_to_vmem [thread:$0]  %s587, 6144, %s589, %s578, 384, 384, 24
        $region56: #{vit_forward.1} parent=43 // pred_fallthru
          _
        // Predicated region
        $region57: #{vit_forward.1} parent=43 // pred_check
          %p595 = pneg %p245
        $region58: #{vit_forward.1} parent=43 // pred_check_branch
          %597 = sbr.rel (%p595) target = $region60
        $region59: #{vit_forward.1} parent=43 // pred_region
          %p598 = scmp.lt.s32.totalorder %s42, 1
          %s599 = scalar_select %p598, %s42, 1
          %s600 = smul.addr %s599, 3
          %s601 = scalar_lea.vmem %s9, %s600
        $region60: #{vit_forward.1} parent=43 // pred_fallthru
          _
        // Predicated region
        $region61: #{vit_forward.1} parent=43 // pred_check
          %p602 = pneg %p271
        $region62: #{vit_forward.1} parent=43 // pred_check_branch
          %604 = sbr.rel (%p602) target = $region64
        $region63: #{vit_forward.1} parent=43 // pred_region
          %s605 = sand.u32 %s42, 1
          %s606 = scalar_lea.sflag [#allocation9], %s605
          %s607 = sand.u32 %s261, 1
          %s608 = smul.addr %s607, 128
          %s609 = scalar_lea.vmem [#allocation8], %s608
          %s611 = ssub.s32 2048, 2048
          %612 = vsyncadd %s606, %s611
          %s613 = smul.addr %s42, 16
          %s614 = smul.addr %s613, 128
          %s615 = scalar_lea.hbm %s10, %s614
          %s616 = sshll.u32 %s609, 4
          %s617 = int_to_ptr.vmem [resolvable:$true] %s616
          %622 = dma.hbm_to_vmem [thread:$0]  %s615, 2048, %s617, %s606, 128, 128, 8
        $region64: #{vit_forward.1} parent=43 // pred_fallthru
          _
        // Predicated region
        $region65: #{vit_forward.1} parent=43 // pred_check
          %p623 = pneg %p297
        $region66: #{vit_forward.1} parent=43 // pred_check_branch
          %625 = sbr.rel (%p623) target = $region68
        $region67: #{vit_forward.1} parent=43 // pred_region
          %p626 = scmp.lt.s32.totalorder %s42, 1
          %s627 = scalar_select %p626, %s42, 1
          %s628 = scalar_lea.vmem %s11, %s627
        $region68: #{vit_forward.1} parent=43 // pred_fallthru
          _
        // Predicated region
        $region69: #{vit_forward.1} parent=43 // pred_check
          %p629 = pneg %p323
        $region70: #{vit_forward.1} parent=43 // pred_check_branch
          %631 = sbr.rel (%p629) target = $region72
        $region71: #{vit_forward.1} parent=43 // pred_region
          %p632 = scmp.lt.s32.totalorder %s42, 1
          %s633 = scalar_select %p632, %s42, 1
          %s634 = scalar_lea.vmem %s12, %s633
        $region72: #{vit_forward.1} parent=43 // pred_fallthru
          _
        // Predicated region
        $region73: #{vit_forward.1} parent=43 // pred_check
          %p635 = pneg %p349
        $region74: #{vit_forward.1} parent=43 // pred_check_branch
          %637 = sbr.rel (%p635) target = $region76
        $region75: #{vit_forward.1} parent=43 // pred_region
          %p638 = scmp.lt.s32.totalorder %s42, 1
          %s639 = scalar_select %p638, %s42, 1
          %s640 = scalar_lea.vmem %s13, %s639
        $region76: #{vit_forward.1} parent=43 // pred_fallthru
          _
        // Predicated region
        $region77: #{vit_forward.1} parent=43 // pred_check
          %p641 = pneg %p375
        $region78: #{vit_forward.1} parent=43 // pred_check_branch
          %643 = sbr.rel (%p641) target = $region80
        $region79: #{vit_forward.1} parent=43 // pred_region
          %s644 = sand.u32 %s42, 1
          %s645 = scalar_lea.sflag [#allocation9], %s644
          %s646 = sand.u32 %s365, 1
          %s647 = smul.addr %s646, 256
          %s648 = scalar_lea.vmem [#allocation10], %s647
          %s650 = ssub.s32 4096, 4096
          %651 = vsyncadd %s645, %s650
          %s652 = smul.addr %s42, 32
          %s653 = smul.addr %s652, 128
          %s654 = scalar_lea.hbm %s14, %s653
          %s655 = sshll.u32 %s648, 4
          %s656 = int_to_ptr.vmem [resolvable:$true] %s655
          %661 = dma.hbm_to_vmem [thread:$0]  %s654, 4096, %s656, %s645, 256, 256, 16
        $region80: #{vit_forward.1} parent=43 // pred_fallthru
          _
        // Predicated region
        $region81: #{vit_forward.1} parent=43 // pred_check
          %p662 = pneg %p401
        $region82: #{vit_forward.1} parent=43 // pred_check_branch
          %664 = sbr.rel (%p662) target = $region84
        $region83: #{vit_forward.1} parent=43 // pred_region
          %p665 = scmp.lt.s32.totalorder %s42, 1
          %s666 = scalar_select %p665, %s42, 1
          %s667 = smul.addr %s666, 2
          %s668 = scalar_lea.vmem %s15, %s667
        $region84: #{vit_forward.1} parent=43 // pred_fallthru
          _
        // Predicated region
        $region85: #{vit_forward.1} parent=43 // pred_check
          %p669 = pneg %p427
        $region86: #{vit_forward.1} parent=43 // pred_check_branch
          %671 = sbr.rel (%p669) target = $region88
        $region87: #{vit_forward.1} parent=43 // pred_region
          %s672 = sand.u32 %s417, 1
          %s673 = scalar_lea.sflag [#allocation12], %s672
          %s674 = sand.u32 %s417, 1
          %s675 = smul.addr %s674, 256
          %s676 = scalar_lea.vmem [#allocation11], %s675
          %s678 = ssub.s32 4096, 4096
          %679 = vsyncadd %s673, %s678
          %s680 = smul.addr %s42, 32
          %s681 = smul.addr %s680, 128
          %s682 = scalar_lea.hbm %s16, %s681
          %s683 = sshll.u32 %s676, 4
          %s684 = int_to_ptr.vmem [resolvable:$true] %s683
          %689 = dma.hbm_to_vmem [thread:$0]  %s682, 4096, %s684, %s673, 128, 128, 8
        $region88: #{vit_forward.1} parent=43 // pred_fallthru
          _
        // Predicated region
        $region89: #{vit_forward.1} parent=43 // pred_check
          %p690 = pneg %p453
        $region90: #{vit_forward.1} parent=43 // pred_check_branch
          %692 = sbr.rel (%p690) target = $region92
        $region91: #{vit_forward.1} parent=43 // pred_region
          %p693 = scmp.lt.s32.totalorder %s42, 1
          %s694 = scalar_select %p693, %s42, 1
          %s695 = scalar_lea.vmem %s17, %s694
        $region92: #{vit_forward.1} parent=43 // pred_fallthru
          _
      $region44: #{vit_forward.1} parent=5 // pred_fallthru
        _
      %p696 = scmp.le.s32.totalorder 1, %s42
      %p697 = scmp.lt.s32.totalorder %s42, 3
      %p698 = pnand %p696, %p697
      %p699 = pneg %p698
      // Predicated region
      $region93: #{vit_forward.1} parent=5 // pred_check
        _
      $region94: #{vit_forward.1} parent=5 // pred_check_branch
        %701 = sbr.rel (%p698) target = $region96
      $region95: #{vit_forward.1} parent=5 // pred_region
        %s702 = ssub.s32 %s42, 1
        %s703 = sand.u32 %s212, 1
        %s704 = scalar_lea.sflag [#allocation6], %s703
        %s705 = sand.u32 %s212, 1
        %s706 = smul.addr %s705, 384
        %s707 = scalar_lea.vmem [#allocation5], %s706
        // Predicated region
        $region97: #{vit_forward.1} parent=95 // pred_check
          %p708 = pneg %p225
        $region98: #{vit_forward.1} parent=95 // pred_check_branch
          %710 = sbr.rel (%p708) target = $region100
        $region99: #{vit_forward.1} parent=95 // pred_region
          %711 = dma.done %s704, 6144
        $region100: #{vit_forward.1} parent=95 // pred_fallthru
          _
        %s712 = sand.u32 %s47, 1
        %s713 = scalar_lea.sflag [#allocation9], %s712
        %s714 = sand.u32 %s264, 1
        %s715 = smul.addr %s714, 128
        %s716 = scalar_lea.vmem [#allocation8], %s715
        // Predicated region
        $region101: #{vit_forward.1} parent=95 // pred_check
          %p717 = pneg %p277
        $region102: #{vit_forward.1} parent=95 // pred_check_branch
          %719 = sbr.rel (%p717) target = $region104
        $region103: #{vit_forward.1} parent=95 // pred_region
          %720 = dma.done %s713, 2048
        $region104: #{vit_forward.1} parent=95 // pred_fallthru
          _
        %s721 = sand.u32 %s47, 1
        %s722 = scalar_lea.sflag [#allocation9], %s721
        %s723 = sand.u32 %s368, 1
        %s724 = smul.addr %s723, 256
        %s725 = scalar_lea.vmem [#allocation10], %s724
        // Predicated region
        $region105: #{vit_forward.1} parent=95 // pred_check
          %p726 = pneg %p381
        $region106: #{vit_forward.1} parent=95 // pred_check_branch
          %728 = sbr.rel (%p726) target = $region108
        $region107: #{vit_forward.1} parent=95 // pred_region
          %729 = dma.done %s722, 4096
        $region108: #{vit_forward.1} parent=95 // pred_fallthru
          _
        %s730 = sand.u32 %s420, 1
        %s731 = scalar_lea.sflag [#allocation12], %s730
        %s732 = sand.u32 %s420, 1
        %s733 = smul.addr %s732, 256
        %s734 = scalar_lea.vmem [#allocation11], %s733
        // Predicated region
        $region109: #{vit_forward.1} parent=95 // pred_check
          %p735 = pneg %p433
        $region110: #{vit_forward.1} parent=95 // pred_check_branch
          %737 = sbr.rel (%p735) target = $region112
        $region111: #{vit_forward.1} parent=95 // pred_region
          %738 = dma.done %s731, 4096
        $region112: #{vit_forward.1} parent=95 // pred_fallthru
          _
        %p739 = pneg %p63
        %p740 = pneg %p60
        %p741 = pneg %p84
        %p742 = pneg %p81
        %p743 = pneg %p105
        %p744 = pneg %p102
        %p745 = pneg %p126
        %p746 = pneg %p123
        %p747 = pneg %p147
        %p748 = pneg %p144
        %p749 = scmp.lt.s32.totalorder %s47, 1
        %s750 = scalar_select %p749, %s47, 1
        %s751 = scalar_lea.vmem %s6, %s750
        %p752 = pneg %p173
        %p753 = pneg %p170
        %p754 = scmp.lt.s32.totalorder %s47, 1
        %s755 = scalar_select %p754, %s47, 1
        %s756 = scalar_lea.vmem %s7, %s755
        %p757 = pneg %p199
        %p758 = pneg %p196
        %s759 = sand.u32 %s212, 1
        %s760 = scalar_lea.sflag [#allocation6], %s759
        %s761 = sand.u32 %s212, 1
        %s762 = smul.addr %s761, 384
        %s763 = scalar_lea.vmem [#allocation5], %s762
        %p764 = pneg %p225
        %p765 = pneg %p222
        %p766 = scmp.lt.s32.totalorder %s47, 1
        %s767 = scalar_select %p766, %s47, 1
        %s768 = smul.addr %s767, 3
        %s769 = scalar_lea.vmem %s9, %s768
        %p770 = pneg %p251
        %p771 = pneg %p248
        %s772 = sand.u32 %s47, 1
        %s773 = scalar_lea.sflag [#allocation9], %s772
        %s774 = sand.u32 %s264, 1
        %s775 = smul.addr %s774, 128
        %s776 = scalar_lea.vmem [#allocation8], %s775
        %p777 = pneg %p277
        %p778 = pneg %p274
        %p779 = scmp.lt.s32.totalorder %s47, 1
        %s780 = scalar_select %p779, %s47, 1
        %s781 = scalar_lea.vmem %s11, %s780
        %p782 = pneg %p303
        %p783 = pneg %p300
        %p784 = scmp.lt.s32.totalorder %s47, 1
        %s785 = scalar_select %p784, %s47, 1
        %s786 = scalar_lea.vmem %s12, %s785
        %p787 = pneg %p329
        %p788 = pneg %p326
        %p789 = scmp.lt.s32.totalorder %s47, 1
        %s790 = scalar_select %p789, %s47, 1
        %s791 = scalar_lea.vmem %s13, %s790
        %p792 = pneg %p355
        %p793 = pneg %p352
        %s794 = sand.u32 %s47, 1
        %s795 = scalar_lea.sflag [#allocation9], %s794
        %s796 = sand.u32 %s368, 1
        %s797 = smul.addr %s796, 256
        %s798 = scalar_lea.vmem [#allocation10], %s797
        %p799 = pneg %p381
        %p800 = pneg %p378
        %p801 = scmp.lt.s32.totalorder %s47, 1
        %s802 = scalar_select %p801, %s47, 1
        %s803 = smul.addr %s802, 2
        %s804 = scalar_lea.vmem %s15, %s803
        %p805 = pneg %p407
        %p806 = pneg %p404
        %s807 = sand.u32 %s420, 1
        %s808 = scalar_lea.sflag [#allocation12], %s807
        %s809 = sand.u32 %s420, 1
        %s810 = smul.addr %s809, 256
        %s811 = scalar_lea.vmem [#allocation11], %s810
        %p812 = pneg %p433
        %p813 = pneg %p430
        %p814 = scmp.lt.s32.totalorder %s47, 1
        %s815 = scalar_select %p814, %s47, 1
        %s816 = scalar_lea.vmem %s17, %s815
        %p817 = pneg %p459
        %p818 = pneg %p456
        %p819 = pneg %p480
        %p820 = pneg %p477
        %p821 = pneg %p501
        %p822 = pneg %p498
        %p823 = pneg %p522
        %p824 = pneg %p519
        %p825 = scmp.lt.s32.totalorder %s47, 1
        %s826 = scalar_select %p825, %s47, 1
        %s827 = scalar_lea.vmem %s6, %s826
        %p828 = scmp.lt.s32.totalorder %s47, 1
        %s829 = scalar_select %p828, %s47, 1
        %s830 = scalar_lea.vmem %s7, %s829
        %p831 = scmp.lt.s32.totalorder %s47, 1
        %s832 = scalar_select %p831, %s47, 1
        %s833 = smul.addr %s832, 3
        %s834 = scalar_lea.vmem %s9, %s833
        %p835 = scmp.lt.s32.totalorder %s47, 1
        %s836 = scalar_select %p835, %s47, 1
        %s837 = scalar_lea.vmem %s11, %s836
        %p838 = scmp.lt.s32.totalorder %s47, 1
        %s839 = scalar_select %p838, %s47, 1
        %s840 = scalar_lea.vmem %s12, %s839
        %p841 = scmp.lt.s32.totalorder %s47, 1
        %s842 = scalar_select %p841, %s47, 1
        %s843 = scalar_lea.vmem %s13, %s842
        %p844 = scmp.lt.s32.totalorder %s47, 1
        %s845 = scalar_select %p844, %s47, 1
        %s846 = smul.addr %s845, 2
        %s847 = scalar_lea.vmem %s15, %s846
        %p848 = scmp.lt.s32.totalorder %s47, 1
        %s849 = scalar_select %p848, %s47, 1
        %s850 = scalar_lea.vmem %s17, %s849
        %p851 = scmp.eq.s32.totalorder %s47, 0
        // Predicated region
        $region113: #{vit_forward.1} parent=95 // pred_check
          %p852 = pneg %p851
        $region114: #{vit_forward.1} parent=95 // pred_check_branch
          %854 = sbr.rel (%p852) target = $region116
        $region115: #{vit_forward.1} parent=95 // pred_region
          %v855 = vld [vmem:[%s1] sm:$0xff]
          %v856 = vld [vmem:[%s1 + $0x8] sm:$0xff]
          %v857 = vld [vmem:[%s1 + $0x10] sm:$0xff]
          %v858 = vld [vmem:[%s1 + $0x18] sm:$0xff]
          %v859 = vld [vmem:[%s1 + $0x20] sm:$0xff]
          %v860 = vld [vmem:[%s1 + $0x28] sm:$0xff]
          %v861 = vld [vmem:[%s1 + $0x30] sm:$0xff]
          %v862 = vld [vmem:[%s1 + $0x38] sm:$0xff]
          %v863 = vld [vmem:[%s1 + $0x40] sm:$0xff]
          %v864 = vld [vmem:[%s1 + $0x48] sm:$0xff]
          %v865 = vld [vmem:[%s1 + $0x50] sm:$0xff]
          %v866 = vld [vmem:[%s1 + $0x58] sm:$0xff]
          %v867 = vld [vmem:[%s2] sm:$0xff]
          %v868 = vld [vmem:[%s2 + $0x8] sm:$0xff]
          %v869 = vld [vmem:[%s2 + $0x10] sm:$0xff]
          %v870 = vld [vmem:[%s2 + $0x18] sm:$0xff]
          %v871 = vld [vmem:[%s2 + $0x20] sm:$0xff]
          %v872 = vld [vmem:[%s2 + $0x28] sm:$0xff]
          %v873 = vld [vmem:[%s2 + $0x30] sm:$0xff]
          %v874 = vld [vmem:[%s2 + $0x38] sm:$0xff]
          %v875 = vld [vmem:[%s2 + $0x40] sm:$0xff]
          %v876 = vld [vmem:[%s2 + $0x48] sm:$0xff]
          %v877 = vld [vmem:[%s2 + $0x50] sm:$0xff]
          %v878 = vld [vmem:[%s2 + $0x58] sm:$0xff]
          %v879 = vld [vmem:[%s2 + $0x60] sm:$0xff]
          %v880 = vld [vmem:[%s2 + $0x68] sm:$0xff]
          %v881 = vld [vmem:[%s2 + $0x70] sm:$0xff]
          %v882 = vld [vmem:[%s2 + $0x78] sm:$0xff]
          %v883 = vld [vmem:[%s2 + $0x80] sm:$0xff]
          %v884 = vld [vmem:[%s2 + $0x88] sm:$0xff]
          %v885 = vld [vmem:[%s2 + $0x90] sm:$0xff]
          %v886 = vld [vmem:[%s2 + $0x98] sm:$0xff]
          %v887 = vld [vmem:[%s2 + $0xa0] sm:$0xff]
          %v888 = vld [vmem:[%s2 + $0xa8] sm:$0xff]
          %v889 = vld [vmem:[%s2 + $0xb0] sm:$0xff]
          %v890 = vld [vmem:[%s2 + $0xb8] sm:$0xff]
          %v891 = vld [vmem:[%s2 + $0xc0] sm:$0xff]
          %v892 = vld [vmem:[%s2 + $0xc8] sm:$0xff]
          %v893 = vld [vmem:[%s2 + $0xd0] sm:$0xff]
          %v894 = vld [vmem:[%s2 + $0xd8] sm:$0xff]
          %v895 = vld [vmem:[%s2 + $0xe0] sm:$0xff]
          %v896 = vld [vmem:[%s2 + $0xe8] sm:$0xff]
          %v897 = vld [vmem:[%s2 + $0xf0] sm:$0xff]
          %v898 = vld [vmem:[%s2 + $0xf8] sm:$0xff]
          %v899 = vld [vmem:[%s2 + $0x100] sm:$0xff]
          %v900 = vld [vmem:[%s2 + $0x108] sm:$0xff]
          %v901 = vld [vmem:[%s2 + $0x110] sm:$0xff]
          %v902 = vld [vmem:[%s2 + $0x118] sm:$0xff]
          %v903 = vld [vmem:[%s2 + $0x120] sm:$0xff]
          %v904 = vld [vmem:[%s2 + $0x128] sm:$0xff]
          %v905 = vld [vmem:[%s2 + $0x130] sm:$0xff]
          %v906 = vld [vmem:[%s2 + $0x138] sm:$0xff]
          %v907 = vld [vmem:[%s2 + $0x140] sm:$0xff]
          %v908 = vld [vmem:[%s2 + $0x148] sm:$0xff]
          %v909 = vld [vmem:[%s2 + $0x150] sm:$0xff]
          %v910 = vld [vmem:[%s2 + $0x158] sm:$0xff]
          %v911 = vld [vmem:[%s2 + $0x160] sm:$0xff]
          %v912 = vld [vmem:[%s2 + $0x168] sm:$0xff]
          %v913 = vld [vmem:[%s2 + $0x170] sm:$0xff]
          %v914 = vld [vmem:[%s2 + $0x178] sm:$0xff]
          %v915 = vld [vmem:[%s2 + $0x180] sm:$0xff]
          %v916 = vld [vmem:[%s2 + $0x188] sm:$0xff]
          %v917 = vld [vmem:[%s2 + $0x190] sm:$0xff]
          %v918 = vld [vmem:[%s2 + $0x198] sm:$0xff]
          %v919 = vld [vmem:[%s2 + $0x1a0] sm:$0xff]
          %v920 = vld [vmem:[%s2 + $0x1a8] sm:$0xff]
          %v921 = vld [vmem:[%s2 + $0x1b0] sm:$0xff]
          %v922 = vld [vmem:[%s2 + $0x1b8] sm:$0xff]
          %v923 = vld [vmem:[%s2 + $0x1c0] sm:$0xff]
          %v924 = vld [vmem:[%s2 + $0x1c8] sm:$0xff]
          %v925 = vld [vmem:[%s2 + $0x1d0] sm:$0xff]
          %v926 = vld [vmem:[%s2 + $0x1d8] sm:$0xff]
          %v927 = vld [vmem:[%s2 + $0x1e0] sm:$0xff]
          %v928 = vld [vmem:[%s2 + $0x1e8] sm:$0xff]
          %v929 = vld [vmem:[%s2 + $0x1f0] sm:$0xff]
          %v930 = vld [vmem:[%s2 + $0x1f8] sm:$0xff]
          %v931 = vld [vmem:[%s2 + $0x200] sm:$0xff]
          %v932 = vld [vmem:[%s2 + $0x208] sm:$0xff]
          %v933 = vld [vmem:[%s2 + $0x210] sm:$0xff]
          %v934 = vld [vmem:[%s2 + $0x218] sm:$0xff]
          %v935 = vld [vmem:[%s2 + $0x220] sm:$0xff]
          %v936 = vld [vmem:[%s2 + $0x228] sm:$0xff]
          %v937 = vld [vmem:[%s2 + $0x230] sm:$0xff]
          %v938 = vld [vmem:[%s2 + $0x238] sm:$0xff]
          %v939 = vld [vmem:[%s2 + $0x240] sm:$0xff]
          %v940 = vld [vmem:[%s2 + $0x248] sm:$0xff]
          %v941 = vld [vmem:[%s2 + $0x250] sm:$0xff]
          %v942 = vld [vmem:[%s2 + $0x258] sm:$0xff]
          %v943 = vld [vmem:[%s2 + $0x260] sm:$0xff]
          %v944 = vld [vmem:[%s2 + $0x268] sm:$0xff]
          %v945 = vld [vmem:[%s2 + $0x270] sm:$0xff]
          %v946 = vld [vmem:[%s2 + $0x278] sm:$0xff]
          %v947 = vld [vmem:[%s2 + $0x280] sm:$0xff]
          %v948 = vld [vmem:[%s2 + $0x288] sm:$0xff]
          %v949 = vld [vmem:[%s2 + $0x290] sm:$0xff]
          %v950 = vld [vmem:[%s2 + $0x298] sm:$0xff]
          %v951 = vld [vmem:[%s2 + $0x2a0] sm:$0xff]
          %v952 = vld [vmem:[%s2 + $0x2a8] sm:$0xff]
          %v953 = vld [vmem:[%s2 + $0x2b0] sm:$0xff]
          %v954 = vld [vmem:[%s2 + $0x2b8] sm:$0xff]
          %v955 = vld [vmem:[%s2 + $0x2c0] sm:$0xff]
          %v956 = vld [vmem:[%s2 + $0x2c8] sm:$0xff]
          %v957 = vld [vmem:[%s2 + $0x2d0] sm:$0xff]
          %v958 = vld [vmem:[%s2 + $0x2d8] sm:$0xff]
          %v959 = vld [vmem:[%s2 + $0x2e0] sm:$0xff]
          %v960 = vld [vmem:[%s2 + $0x2e8] sm:$0xff]
          %v961 = vld [vmem:[%s2 + $0x2f0] sm:$0xff]
          %v962 = vld [vmem:[%s2 + $0x2f8] sm:$0xff]
          %v963 = vld [vmem:[%s3] sm:$0x1]
          %v965 = vlaneseq
          %v966 = vshrl.u32 %v965, 7
          %v967 = vsub.s32 0, %v966
          %v968 = vrot.slane %v963, %v967
          %970 = vmatprep.subr.mxu0 0.0
          %971 = vmatpush1.msra.mxu0 %v882
          %972 = vmatprep.subr.mxu0 0.0
          %973 = vmatpush1.msra.mxu0 %v881
          %974 = vmatprep.subr.mxu0 0.0
          %975 = vmatpush1.msra.mxu0 %v880
          %976 = vmatprep.subr.mxu0 0.0
          %977 = vmatpush1.msra.mxu0 %v879
          %978 = vmatprep.subr.mxu0 0.0
          %979 = vmatpush1.msra.mxu0 %v878
          %980 = vmatprep.subr.mxu0 0.0
          %981 = vmatpush1.msra.mxu0 %v877
          %982 = vmatprep.subr.mxu0 0.0
          %983 = vmatpush1.msra.mxu0 %v876
          %984 = vmatprep.subr.mxu0 0.0
          %985 = vmatpush1.msra.mxu0 %v875
          %986 = vmatprep.subr.mxu0 0.0
          %987 = vmatpush1.msra.mxu0 %v874
          %988 = vmatprep.subr.mxu0 0.0
          %989 = vmatpush1.msra.mxu0 %v873
          %990 = vmatprep.subr.mxu0 0.0
          %991 = vmatpush1.msra.mxu0 %v872
          %992 = vmatprep.subr.mxu0 0.0
          %993 = vmatpush1.msra.mxu0 %v871
          %994 = vmatprep.subr.mxu0 0.0
          %995 = vmatpush1.msra.mxu0 %v870
          %996 = vmatprep.subr.mxu0 0.0
          %997 = vmatpush1.msra.mxu0 %v869
          %998 = vmatprep.subr.mxu0 0.0
          %999 = vmatpush1.msra.mxu0 %v868
          %1000 = vmatprep.subr.mxu0 0.0
          %1001 = vmatpush1.msra.mxu0 %v867
          %1002 = vmatprep.subr.mxu0 0.0
          %1003 = vmatpush2.msra.mxu0 %v898
          %1004 = vmatprep.subr.mxu0 0.0
          %1005 = vmatpush2.msra.mxu0 %v897
          %1006 = vmatprep.subr.mxu0 0.0
          %1007 = vmatpush2.msra.mxu0 %v896
          %1008 = vmatprep.subr.mxu0 0.0
          %1009 = vmatpush2.msra.mxu0 %v895
          %1010 = vmatprep.subr.mxu0 0.0
          %1011 = vmatpush2.msra.mxu0 %v894
          %1012 = vmatprep.subr.mxu0 0.0
          %1013 = vmatpush2.msra.mxu0 %v893
          %1014 = vmatprep.subr.mxu0 0.0
          %1015 = vmatpush2.msra.mxu0 %v892
          %1016 = vmatprep.subr.mxu0 0.0
          %1017 = vmatpush2.msra.mxu0 %v891
          %1018 = vmatprep.subr.mxu0 0.0
          %1019 = vmatpush2.msra.mxu0 %v890
          %1020 = vmatprep.subr.mxu0 0.0
          %1021 = vmatpush2.msra.mxu0 %v889
          %1022 = vmatprep.subr.mxu0 0.0
          %1023 = vmatpush2.msra.mxu0 %v888
          %1024 = vmatprep.subr.mxu0 0.0
          %1025 = vmatpush2.msra.mxu0 %v887
          %1026 = vmatprep.subr.mxu0 0.0
          %1027 = vmatpush2.msra.mxu0 %v886
          %1028 = vmatprep.subr.mxu0 0.0
          %1029 = vmatpush2.msra.mxu0 %v885
          %1030 = vmatprep.subr.mxu0 0.0
          %1031 = vmatpush2.msra.mxu0 %v884
          %1032 = vmatprep.subr.mxu0 0.0
          %1033 = vmatpush2.msra.mxu0 %v883
          %1034 = vmatprep.mubr.f32.mxu0 %v856
          %1035 = vmatmul.mubr.f32.gmra.mxu0 %v855
          %v1036 = vpop.f32.mrf.mxu0
          %v1037 = vadd.f32 %v968, %v1036
          %v1038 = vpop.f32.mrf.mxu0
          %1039 = vmatprep.mubr.f32.mxu0 %v862
          %1040 = vmatmul.mubr.f32.gmra.mxu0 %v861
          %v1041 = vpop.f32.mrf.mxu0
          %v1042 = vadd.f32 %v968, %v1041
          %v1043 = vpop.f32.mrf.mxu0
          %1044 = vdwg.mxu0
          %1045 = vmatprep.subr.mxu0 0.0
          %1046 = vmatpush1.msra.mxu0 %v914
          %1047 = vmatprep.subr.mxu0 0.0
          %1048 = vmatpush1.msra.mxu0 %v913
          %1049 = vmatprep.subr.mxu0 0.0
          %1050 = vmatpush1.msra.mxu0 %v912
          %1051 = vmatprep.subr.mxu0 0.0
          %1052 = vmatpush1.msra.mxu0 %v911
          %1053 = vmatprep.subr.mxu0 0.0
          %1054 = vmatpush1.msra.mxu0 %v910
          %1055 = vmatprep.subr.mxu0 0.0
          %1056 = vmatpush1.msra.mxu0 %v909
          %1057 = vmatprep.subr.mxu0 0.0
          %1058 = vmatpush1.msra.mxu0 %v908
          %1059 = vmatprep.subr.mxu0 0.0
          %1060 = vmatpush1.msra.mxu0 %v907
          %1061 = vmatprep.subr.mxu0 0.0
          %1062 = vmatpush1.msra.mxu0 %v906
          %1063 = vmatprep.subr.mxu0 0.0
          %1064 = vmatpush1.msra.mxu0 %v905
          %1065 = vmatprep.subr.mxu0 0.0
          %1066 = vmatpush1.msra.mxu0 %v904
          %1067 = vmatprep.subr.mxu0 0.0
          %1068 = vmatpush1.msra.mxu0 %v903
          %1069 = vmatprep.subr.mxu0 0.0
          %1070 = vmatpush1.msra.mxu0 %v902
          %1071 = vmatprep.subr.mxu0 0.0
          %1072 = vmatpush1.msra.mxu0 %v901
          %1073 = vmatprep.subr.mxu0 0.0
          %1074 = vmatpush1.msra.mxu0 %v900
          %1075 = vmatprep.subr.mxu0 0.0
          %1076 = vmatpush1.msra.mxu0 %v899
          %1077 = vmatprep.subr.mxu0 0.0
          %1078 = vmatpush2.msra.mxu0 %v930
          %1079 = vmatprep.subr.mxu0 0.0
          %1080 = vmatpush2.msra.mxu0 %v929
          %1081 = vmatprep.subr.mxu0 0.0
          %1082 = vmatpush2.msra.mxu0 %v928
          %1083 = vmatprep.subr.mxu0 0.0
          %1084 = vmatpush2.msra.mxu0 %v927
          %1085 = vmatprep.subr.mxu0 0.0
          %1086 = vmatpush2.msra.mxu0 %v926
          %1087 = vmatprep.subr.mxu0 0.0
          %1088 = vmatpush2.msra.mxu0 %v925
          %1089 = vmatprep.subr.mxu0 0.0
          %1090 = vmatpush2.msra.mxu0 %v924
          %1091 = vmatprep.subr.mxu0 0.0
          %1092 = vmatpush2.msra.mxu0 %v923
          %1093 = vmatprep.subr.mxu0 0.0
          %1094 = vmatpush2.msra.mxu0 %v922
          %1095 = vmatprep.subr.mxu0 0.0
          %1096 = vmatpush2.msra.mxu0 %v921
          %1097 = vmatprep.subr.mxu0 0.0
          %1098 = vmatpush2.msra.mxu0 %v920
          %1099 = vmatprep.subr.mxu0 0.0
          %1100 = vmatpush2.msra.mxu0 %v919
          %1101 = vmatprep.subr.mxu0 0.0
          %1102 = vmatpush2.msra.mxu0 %v918
          %1103 = vmatprep.subr.mxu0 0.0
          %1104 = vmatpush2.msra.mxu0 %v917
          %1105 = vmatprep.subr.mxu0 0.0
          %1106 = vmatpush2.msra.mxu0 %v916
          %1107 = vmatprep.subr.mxu0 0.0
          %1108 = vmatpush2.msra.mxu0 %v915
          %1109 = vmatprep.mubr.f32.mxu0 %v858
          %1110 = vmatmul.mubr.f32.gmra.mxu0 %v857
          %v1111 = vpop.f32.mrf.mxu0
          %v1112 = vadd.f32 %v1037, %v1111
          %v1113 = vpop.f32.mrf.mxu0
          %1114 = vmatprep.mubr.f32.mxu0 %v864
          %1115 = vmatmul.mubr.f32.gmra.mxu0 %v863
          %v1116 = vpop.f32.mrf.mxu0
          %v1117 = vadd.f32 %v1042, %v1116
          %v1118 = vpop.f32.mrf.mxu0
          %1119 = vdwg.mxu0
          %1120 = vmatprep.subr.mxu0 0.0
          %1121 = vmatpush1.msra.mxu0 %v946
          %1122 = vmatprep.subr.mxu0 0.0
          %1123 = vmatpush1.msra.mxu0 %v945
          %1124 = vmatprep.subr.mxu0 0.0
          %1125 = vmatpush1.msra.mxu0 %v944
          %1126 = vmatprep.subr.mxu0 0.0
          %1127 = vmatpush1.msra.mxu0 %v943
          %1128 = vmatprep.subr.mxu0 0.0
          %1129 = vmatpush1.msra.mxu0 %v942
          %1130 = vmatprep.subr.mxu0 0.0
          %1131 = vmatpush1.msra.mxu0 %v941
          %1132 = vmatprep.subr.mxu0 0.0
          %1133 = vmatpush1.msra.mxu0 %v940
          %1134 = vmatprep.subr.mxu0 0.0
          %1135 = vmatpush1.msra.mxu0 %v939
          %1136 = vmatprep.subr.mxu0 0.0
          %1137 = vmatpush1.msra.mxu0 %v938
          %1138 = vmatprep.subr.mxu0 0.0
          %1139 = vmatpush1.msra.mxu0 %v937
          %1140 = vmatprep.subr.mxu0 0.0
          %1141 = vmatpush1.msra.mxu0 %v936
          %1142 = vmatprep.subr.mxu0 0.0
          %1143 = vmatpush1.msra.mxu0 %v935
          %1144 = vmatprep.subr.mxu0 0.0
          %1145 = vmatpush1.msra.mxu0 %v934
          %1146 = vmatprep.subr.mxu0 0.0
          %1147 = vmatpush1.msra.mxu0 %v933
          %1148 = vmatprep.subr.mxu0 0.0
          %1149 = vmatpush1.msra.mxu0 %v932
          %1150 = vmatprep.subr.mxu0 0.0
          %1151 = vmatpush1.msra.mxu0 %v931
          %1152 = vmatprep.subr.mxu0 0.0
          %1153 = vmatpush2.msra.mxu0 %v962
          %1154 = vmatprep.subr.mxu0 0.0
          %1155 = vmatpush2.msra.mxu0 %v961
          %1156 = vmatprep.subr.mxu0 0.0
          %1157 = vmatpush2.msra.mxu0 %v960
          %1158 = vmatprep.subr.mxu0 0.0
          %1159 = vmatpush2.msra.mxu0 %v959
          %1160 = vmatprep.subr.mxu0 0.0
          %1161 = vmatpush2.msra.mxu0 %v958
          %1162 = vmatprep.subr.mxu0 0.0
          %1163 = vmatpush2.msra.mxu0 %v957
          %1164 = vmatprep.subr.mxu0 0.0
          %1165 = vmatpush2.msra.mxu0 %v956
          %1166 = vmatprep.subr.mxu0 0.0
          %1167 = vmatpush2.msra.mxu0 %v955
          %1168 = vmatprep.subr.mxu0 0.0
          %1169 = vmatpush2.msra.mxu0 %v954
          %1170 = vmatprep.subr.mxu0 0.0
          %1171 = vmatpush2.msra.mxu0 %v953
          %1172 = vmatprep.subr.mxu0 0.0
          %1173 = vmatpush2.msra.mxu0 %v952
          %1174 = vmatprep.subr.mxu0 0.0
          %1175 = vmatpush2.msra.mxu0 %v951
          %1176 = vmatprep.subr.mxu0 0.0
          %1177 = vmatpush2.msra.mxu0 %v950
          %1178 = vmatprep.subr.mxu0 0.0
          %1179 = vmatpush2.msra.mxu0 %v949
          %1180 = vmatprep.subr.mxu0 0.0
          %1181 = vmatpush2.msra.mxu0 %v948
          %1182 = vmatprep.subr.mxu0 0.0
          %1183 = vmatpush2.msra.mxu0 %v947
          %1184 = vmatprep.mubr.f32.mxu0 %v860
          %1185 = vmatmul.mubr.f32.gmra.mxu0 %v859
          %v1186 = vpop.f32.mrf.mxu0
          %v1187 = vadd.f32 %v1112, %v1186
          %v1188 = vpop.f32.mrf.mxu0
          %1189 = vmatprep.mubr.f32.mxu0 %v866
          %1190 = vmatmul.mubr.f32.gmra.mxu0 %v865
          %v1191 = vpop.f32.mrf.mxu0
          %v1192 = vadd.f32 %v1117, %v1191
          %v1193 = vpop.f32.mrf.mxu0
          %1194 = vdwg.mxu0
          %v1195 = vld [vmem:[%s5] sm:$0x1]
          %v1196 = vld [vmem:[%s4] sm:$0x1]
          %v1197 = vadd.f32 %v1195, %v1196
          %1198 = vst [vmem:[#allocation2] sm:$0x1] %v1197
          %s1199 = sld [smem:[#allocation4]]
          %s1200 = scalar_lea.vmem %s4, %s1199
          %v1201 = vld [vmem:[%s1200] sm:$0x1]
          %v1202 = vadd.f32 %v1187, %v1201
          %1203 = vst [vmem:[#allocation2 + $0x1] sm:$0x1] %v1202
          %s1204 = sld [smem:[#allocation4 + $0x1]]
          %s1205 = scalar_lea.vmem %s4, %s1204
          %v1206 = vld [vmem:[%s1205] sm:$0x1]
          %v1208 = vrot.slane %v1206, 7
          %v1210 = vadd.f32 %v1187, %v1208
          %1211 = vst [vmem:[#allocation2 + $0x1] sm:$0x2] %v1210
          %s1212 = sld [smem:[#allocation4 + $0x2]]
          %s1213 = scalar_lea.vmem %s4, %s1212
          %v1214 = vld [vmem:[%s1213] sm:$0x1]
          %v1216 = vrot.slane %v1214, 6
          %v1218 = vadd.f32 %v1187, %v1216
          %1219 = vst [vmem:[#allocation2 + $0x1] sm:$0x4] %v1218
          %s1220 = sld [smem:[#allocation4 + $0x3]]
          %s1221 = scalar_lea.vmem %s4, %s1220
          %v1222 = vld [vmem:[%s1221] sm:$0x1]
          %v1224 = vrot.slane %v1222, 5
          %v1226 = vadd.f32 %v1187, %v1224
          %1227 = vst [vmem:[#allocation2 + $0x1] sm:$0x8] %v1226
          %s1228 = sld [smem:[#allocation4 + $0x4]]
          %s1229 = scalar_lea.vmem %s4, %s1228
          %v1230 = vld [vmem:[%s1229] sm:$0x1]
          %v1232 = vrot.slane %v1230, 4
          %v1234 = vadd.f32 %v1187, %v1232
          %1235 = vst [vmem:[#allocation2 + $0x1] sm:$0x10] %v1234
          %s1236 = sld [smem:[#allocation4 + $0x5]]
          %s1237 = scalar_lea.vmem %s4, %s1236
          %v1238 = vld [vmem:[%s1237] sm:$0x1]
          %v1240 = vrot.slane %v1238, 3
          %v1242 = vadd.f32 %v1187, %v1240
          %1243 = vst [vmem:[#allocation2 + $0x1] sm:$0x20] %v1242
          %s1244 = sld [smem:[#allocation4 + $0x6]]
          %s1245 = scalar_lea.vmem %s4, %s1244
          %v1246 = vld [vmem:[%s1245] sm:$0x1]
          %v1248 = vrot.slane %v1246, 2
          %v1250 = vadd.f32 %v1187, %v1248
          %1251 = vst [vmem:[#allocation2 + $0x1] sm:$0x40] %v1250
          %s1252 = sld [smem:[#allocation4 + $0x7]]
          %s1253 = scalar_lea.vmem %s4, %s1252
          %v1254 = vld [vmem:[%s1253] sm:$0x1]
          %v1256 = vrot.slane %v1254, 1
          %v1258 = vadd.f32 %v1187, %v1256
          %1259 = vst [vmem:[#allocation2 + $0x1] sm:$0x80] %v1258
          %1260 = vst [vmem:[#allocation2 + $0x9] sm:$0x1] %v1197
          %s1261 = sld [smem:[#allocation4 + $0x8]]
          %s1262 = scalar_lea.vmem %s4, %s1261
          %v1263 = vld [vmem:[%s1262] sm:$0x1]
          %v1264 = vadd.f32 %v1192, %v1263
          %1265 = vst [vmem:[#allocation2 + $0xa] sm:$0x1] %v1264
          %s1266 = sld [smem:[#allocation4 + $0x9]]
          %s1267 = scalar_lea.vmem %s4, %s1266
          %v1268 = vld [vmem:[%s1267] sm:$0x1]
          %v1270 = vrot.slane %v1268, 7
          %v1272 = vadd.f32 %v1192, %v1270
          %1273 = vst [vmem:[#allocation2 + $0xa] sm:$0x2] %v1272
          %s1274 = sld [smem:[#allocation4 + $0xa]]
          %s1275 = scalar_lea.vmem %s4, %s1274
          %v1276 = vld [vmem:[%s1275] sm:$0x1]
          %v1278 = vrot.slane %v1276, 6
          %v1280 = vadd.f32 %v1192, %v1278
          %1281 = vst [vmem:[#allocation2 + $0xa] sm:$0x4] %v1280
          %s1282 = sld [smem:[#allocation4 + $0xb]]
          %s1283 = scalar_lea.vmem %s4, %s1282
          %v1284 = vld [vmem:[%s1283] sm:$0x1]
          %v1286 = vrot.slane %v1284, 5
          %v1288 = vadd.f32 %v1192, %v1286
          %1289 = vst [vmem:[#allocation2 + $0xa] sm:$0x8] %v1288
          %s1290 = sld [smem:[#allocation4 + $0xc]]
          %s1291 = scalar_lea.vmem %s4, %s1290
          %v1292 = vld [vmem:[%s1291] sm:$0x1]
          %v1294 = vrot.slane %v1292, 4
          %v1296 = vadd.f32 %v1192, %v1294
          %1297 = vst [vmem:[#allocation2 + $0xa] sm:$0x10] %v1296
          %s1298 = sld [smem:[#allocation4 + $0xd]]
          %s1299 = scalar_lea.vmem %s4, %s1298
          %v1300 = vld [vmem:[%s1299] sm:$0x1]
          %v1302 = vrot.slane %v1300, 3
          %v1304 = vadd.f32 %v1192, %v1302
          %1305 = vst [vmem:[#allocation2 + $0xa] sm:$0x20] %v1304
          %s1306 = sld [smem:[#allocation4 + $0xe]]
          %s1307 = scalar_lea.vmem %s4, %s1306
          %v1308 = vld [vmem:[%s1307] sm:$0x1]
          %v1310 = vrot.slane %v1308, 2
          %v1312 = vadd.f32 %v1192, %v1310
          %1313 = vst [vmem:[#allocation2 + $0xa] sm:$0x40] %v1312
          %s1314 = sld [smem:[#allocation4 + $0xf]]
          %s1315 = scalar_lea.vmem %s4, %s1314
          %v1316 = vld [vmem:[%s1315] sm:$0x1]
          %v1318 = vrot.slane %v1316, 1
          %v1320 = vadd.f32 %v1192, %v1318
          %1321 = vst [vmem:[#allocation2 + $0xa] sm:$0x80] %v1320
        $region116: #{vit_forward.1} parent=95 // pred_fallthru
          _
        %v1322 = vld [vmem:[#allocation2] sm:$0xff]
        %v1323 = vld [vmem:[#allocation2 + $0x8] sm:$0xff]
        %v1324 = vld [vmem:[#allocation2 + $0x10] sm:$0x3]
        %v1325 = vld [vmem:[%s827] sm:$0x1]
        %v1326 = vld [vmem:[%s830] sm:$0x1]
        %1327 = vadd.xlane.f32.xlu0 %v1322
        %v1328 = vpop.xlane.xlu0 %1327
        %1329 = vadd.xlane.f32.xlu0 %v1323
        %v1330 = vpop.xlane.xlu0 %1329
        %vm1331 = vcmask 1041408
        %v1332 = vsel %vm1331, %v1324, 0.0
        %1333 = vadd.xlane.f32.xlu0 %v1332
        %v1334 = vpop.xlane.xlu0 %1333
        %v1335 = vrcp.pop 128.0
        %v1336 = vmul.f32 %v1328, %v1335
        %v1337 = vmul.f32 %v1330, %v1335
        %v1338 = vmul.f32 %v1334, %v1335
        %v1339 = vsub.f32 %v1322, %v1336
        %v1340 = vsub.f32 %v1323, %v1337
        %v1341 = vsub.f32 %v1324, %v1338
        %v1342 = vmul.f32 %v1339, %v1339
        %v1343 = vmul.f32 %v1340, %v1340
        %v1344 = vmul.f32 %v1341, %v1341
        %1345 = vadd.xlane.f32.xlu0 %v1342
        %v1346 = vpop.xlane.xlu0 %1345
        %1347 = vadd.xlane.f32.xlu0 %v1343
        %v1348 = vpop.xlane.xlu0 %1347
        %v1349 = vsel %vm1331, %v1344, 0.0
        %1350 = vadd.xlane.f32.xlu0 %v1349
        %v1351 = vpop.xlane.xlu0 %1350
        %v1352 = vmul.f32 %v1346, %v1335
        %v1353 = vmul.f32 %v1348, %v1335
        %v1354 = vmul.f32 %v1351, %v1335
        %v1355 = vadd.f32 %v1352, 1e-06
        %v1356 = vadd.f32 %v1353, 1e-06
        %v1357 = vadd.f32 %v1354, 1e-06
        %v1358 = vrsqrt.pop %v1355
        %v1359 = vrsqrt.pop %v1356
        %v1360 = vrsqrt.pop %v1357
        %v1361 = vmul.f32 %v1339, %v1358
        %v1362 = vmul.f32 %v1340, %v1359
        %v1363 = vmul.f32 %v1341, %v1360
        %v1365 = vlaneseq
        %v1366 = vshrl.u32 %v1365, 7
        %v1367 = vsub.s32 0, %v1366
        %v1368 = vrot.slane %v1325, %v1367
        %v1370 = vmul.f32 %v1361, %v1368
        %v1371 = vmul.f32 %v1362, %v1368
        %v1372 = vmul.f32 %v1363, %v1368
        %v1374 = vlaneseq
        %v1375 = vshrl.u32 %v1374, 7
        %v1376 = vsub.s32 0, %v1375
        %v1377 = vrot.slane %v1326, %v1376
        %v1379 = vadd.f32 %v1370, %v1377
        %v1380 = vadd.f32 %v1371, %v1377
        %v1381 = vadd.f32 %v1372, %v1377
        %v1382 = vld [vmem:[%s707] sm:$0xff]
        %v1383 = vld [vmem:[%s707 + $0x8] sm:$0xff]
        %v1384 = vld [vmem:[%s707 + $0x10] sm:$0xff]
        %v1385 = vld [vmem:[%s707 + $0x18] sm:$0xff]
        %v1386 = vld [vmem:[%s707 + $0x20] sm:$0xff]
        %v1387 = vld [vmem:[%s707 + $0x28] sm:$0xff]
        %v1388 = vld [vmem:[%s707 + $0x30] sm:$0xff]
        %v1389 = vld [vmem:[%s707 + $0x38] sm:$0xff]
        %v1390 = vld [vmem:[%s707 + $0x40] sm:$0xff]
        %v1391 = vld [vmem:[%s707 + $0x48] sm:$0xff]
        %v1392 = vld [vmem:[%s707 + $0x50] sm:$0xff]
        %v1393 = vld [vmem:[%s707 + $0x58] sm:$0xff]
        %v1394 = vld [vmem:[%s707 + $0x60] sm:$0xff]
        %v1395 = vld [vmem:[%s707 + $0x68] sm:$0xff]
        %v1396 = vld [vmem:[%s707 + $0x70] sm:$0xff]
        %v1397 = vld [vmem:[%s707 + $0x78] sm:$0xff]
        %v1398 = vld [vmem:[%s707 + $0x80] sm:$0xff]
        %v1399 = vld [vmem:[%s707 + $0x88] sm:$0xff]
        %v1400 = vld [vmem:[%s707 + $0x90] sm:$0xff]
        %v1401 = vld [vmem:[%s707 + $0x98] sm:$0xff]
        %v1402 = vld [vmem:[%s707 + $0xa0] sm:$0xff]
        %v1403 = vld [vmem:[%s707 + $0xa8] sm:$0xff]
        %v1404 = vld [vmem:[%s707 + $0xb0] sm:$0xff]
        %v1405 = vld [vmem:[%s707 + $0xb8] sm:$0xff]
        %v1406 = vld [vmem:[%s707 + $0xc0] sm:$0xff]
        %v1407 = vld [vmem:[%s707 + $0xc8] sm:$0xff]
        %v1408 = vld [vmem:[%s707 + $0xd0] sm:$0xff]
        %v1409 = vld [vmem:[%s707 + $0xd8] sm:$0xff]
        %v1410 = vld [vmem:[%s707 + $0xe0] sm:$0xff]
        %v1411 = vld [vmem:[%s707 + $0xe8] sm:$0xff]
        %v1412 = vld [vmem:[%s707 + $0xf0] sm:$0xff]
        %v1413 = vld [vmem:[%s707 + $0xf8] sm:$0xff]
        %v1414 = vld [vmem:[%s707 + $0x100] sm:$0xff]
        %v1415 = vld [vmem:[%s707 + $0x108] sm:$0xff]
        %v1416 = vld [vmem:[%s707 + $0x110] sm:$0xff]
        %v1417 = vld [vmem:[%s707 + $0x118] sm:$0xff]
        %v1418 = vld [vmem:[%s707 + $0x120] sm:$0xff]
        %v1419 = vld [vmem:[%s707 + $0x128] sm:$0xff]
        %v1420 = vld [vmem:[%s707 + $0x130] sm:$0xff]
        %v1421 = vld [vmem:[%s707 + $0x138] sm:$0xff]
        %v1422 = vld [vmem:[%s707 + $0x140] sm:$0xff]
        %v1423 = vld [vmem:[%s707 + $0x148] sm:$0xff]
        %v1424 = vld [vmem:[%s707 + $0x150] sm:$0xff]
        %v1425 = vld [vmem:[%s707 + $0x158] sm:$0xff]
        %v1426 = vld [vmem:[%s707 + $0x160] sm:$0xff]
        %v1427 = vld [vmem:[%s707 + $0x168] sm:$0xff]
        %v1428 = vld [vmem:[%s707 + $0x170] sm:$0xff]
        %v1429 = vld [vmem:[%s707 + $0x178] sm:$0xff]
        %v1430 = vld [vmem:[%s834] sm:$0x7]
        %v1432 = vlaneseq
        %v1433 = vshrl.u32 %v1432, 7
        %v1434 = vsub.s32 0, %v1433
        %v1435 = vrot.slane %v1430, %v1434
        %v1436 = vlaneseq
        %v1437 = vshrl.u32 %v1436, 7
        %v1438 = vsub.s32 1, %v1437
        %v1439 = vrot.slane %v1430, %v1438
        %v1440 = vlaneseq
        %v1441 = vshrl.u32 %v1440, 7
        %v1442 = vsub.s32 2, %v1441
        %v1443 = vrot.slane %v1430, %v1442
        %1447 = vmatprep.subr.mxu0 %v1428
        %1448 = vmatpush1.msra.mxu0 %v1427
        %1449 = vmatprep.subr.mxu0 %v1425
        %1450 = vmatpush1.msra.mxu0 %v1424
        %1451 = vmatprep.subr.mxu0 %v1422
        %1452 = vmatpush1.msra.mxu0 %v1421
        %1453 = vmatprep.subr.mxu0 %v1419
        %1454 = vmatpush1.msra.mxu0 %v1418
        %1455 = vmatprep.subr.mxu0 %v1416
        %1456 = vmatpush1.msra.mxu0 %v1415
        %1457 = vmatprep.subr.mxu0 %v1413
        %1458 = vmatpush1.msra.mxu0 %v1412
        %1459 = vmatprep.subr.mxu0 %v1410
        %1460 = vmatpush1.msra.mxu0 %v1409
        %1461 = vmatprep.subr.mxu0 %v1407
        %1462 = vmatpush1.msra.mxu0 %v1406
        %1463 = vmatprep.subr.mxu0 %v1404
        %1464 = vmatpush1.msra.mxu0 %v1403
        %1465 = vmatprep.subr.mxu0 %v1401
        %1466 = vmatpush1.msra.mxu0 %v1400
        %1467 = vmatprep.subr.mxu0 %v1398
        %1468 = vmatpush1.msra.mxu0 %v1397
        %1469 = vmatprep.subr.mxu0 %v1395
        %1470 = vmatpush1.msra.mxu0 %v1394
        %1471 = vmatprep.subr.mxu0 %v1392
        %1472 = vmatpush1.msra.mxu0 %v1391
        %1473 = vmatprep.subr.mxu0 %v1389
        %1474 = vmatpush1.msra.mxu0 %v1388
        %1475 = vmatprep.subr.mxu0 %v1386
        %1476 = vmatpush1.msra.mxu0 %v1385
        %1477 = vmatprep.subr.mxu0 %v1383
        %1478 = vmatpush1.msra.mxu0 %v1382
        %1479 = vmatprep.subr.mxu0 0.0
        %1480 = vmatpush2.msra.mxu0 0.0
        %1481 = vmatprep.subr.mxu0 0.0
        %1482 = vmatpush2.msra.mxu0 0.0
        %1483 = vmatprep.subr.mxu0 0.0
        %1484 = vmatpush2.msra.mxu0 0.0
        %1485 = vmatprep.subr.mxu0 0.0
        %1486 = vmatpush2.msra.mxu0 0.0
        %1487 = vmatprep.subr.mxu0 0.0
        %1488 = vmatpush2.msra.mxu0 0.0
        %1489 = vmatprep.subr.mxu0 0.0
        %1490 = vmatpush2.msra.mxu0 0.0
        %1491 = vmatprep.subr.mxu0 0.0
        %1492 = vmatpush2.msra.mxu0 0.0
        %1493 = vmatprep.subr.mxu0 0.0
        %1494 = vmatpush2.msra.mxu0 0.0
        %1495 = vmatprep.subr.mxu0 0.0
        %1496 = vmatpush2.msra.mxu0 0.0
        %1497 = vmatprep.subr.mxu0 0.0
        %1498 = vmatpush2.msra.mxu0 0.0
        %1499 = vmatprep.subr.mxu0 0.0
        %1500 = vmatpush2.msra.mxu0 0.0
        %1501 = vmatprep.subr.mxu0 0.0
        %1502 = vmatpush2.msra.mxu0 0.0
        %1503 = vmatprep.subr.mxu0 0.0
        %1504 = vmatpush2.msra.mxu0 0.0
        %1505 = vmatprep.subr.mxu0 0.0
        %1506 = vmatpush2.msra.mxu0 0.0
        %1507 = vmatprep.subr.mxu0 0.0
        %1508 = vmatpush2.msra.mxu0 0.0
        %1509 = vmatprep.subr.mxu0 0.0
        %1510 = vmatpush2.msra.mxu0 0.0
        %1511 = vmatprep.mubr.f32.mxu0 0.0
        %1512 = vmatmul.mubr.f32.gmra.mxu0 %v1379
        %v1513 = vpop.f32.mrf.mxu0
        %v1514 = vadd.f32 %v1435, %v1513
        %v1515 = vpop.f32.mrf.mxu0
        %v1516 = vadd.f32 %v1439, %v1515
        %1517 = vmatprep.mubr.f32.mxu0 0.0
        %1518 = vmatmul.mubr.f32.gmra.mxu0 %v1380
        %v1519 = vpop.f32.mrf.mxu0
        %v1520 = vadd.f32 %v1435, %v1519
        %v1521 = vpop.f32.mrf.mxu0
        %v1522 = vadd.f32 %v1439, %v1521
        %1523 = vmatprep.mubr.f32.mxu0 0.0
        %1524 = vmatmul.mubr.f32.gmra.mxu0 %v1381
        %v1525 = vpop.f32.mrf.mxu0
        %v1526 = vadd.f32 %v1435, %v1525
        %v1527 = vpop.f32.mrf.mxu0
        %v1528 = vadd.f32 %v1439, %v1527
        %1529 = vdwg.mxu0
        %1530 = vmatprep.subr.mxu0 0.0
        %1531 = vmatpush1.msra.mxu0 %v1429
        %1532 = vmatprep.subr.mxu0 0.0
        %1533 = vmatpush1.msra.mxu0 %v1426
        %1534 = vmatprep.subr.mxu0 0.0
        %1535 = vmatpush1.msra.mxu0 %v1423
        %1536 = vmatprep.subr.mxu0 0.0
        %1537 = vmatpush1.msra.mxu0 %v1420
        %1538 = vmatprep.subr.mxu0 0.0
        %1539 = vmatpush1.msra.mxu0 %v1417
        %1540 = vmatprep.subr.mxu0 0.0
        %1541 = vmatpush1.msra.mxu0 %v1414
        %1542 = vmatprep.subr.mxu0 0.0
        %1543 = vmatpush1.msra.mxu0 %v1411
        %1544 = vmatprep.subr.mxu0 0.0
        %1545 = vmatpush1.msra.mxu0 %v1408
        %1546 = vmatprep.subr.mxu0 0.0
        %1547 = vmatpush1.msra.mxu0 %v1405
        %1548 = vmatprep.subr.mxu0 0.0
        %1549 = vmatpush1.msra.mxu0 %v1402
        %1550 = vmatprep.subr.mxu0 0.0
        %1551 = vmatpush1.msra.mxu0 %v1399
        %1552 = vmatprep.subr.mxu0 0.0
        %1553 = vmatpush1.msra.mxu0 %v1396
        %1554 = vmatprep.subr.mxu0 0.0
        %1555 = vmatpush1.msra.mxu0 %v1393
        %1556 = vmatprep.subr.mxu0 0.0
        %1557 = vmatpush1.msra.mxu0 %v1390
        %1558 = vmatprep.subr.mxu0 0.0
        %1559 = vmatpush1.msra.mxu0 %v1387
        %1560 = vmatprep.subr.mxu0 0.0
        %1561 = vmatpush1.msra.mxu0 %v1384
        %1562 = vmatprep.subr.mxu0 0.0
        %1563 = vmatpush2.msra.mxu0 0.0
        %1564 = vmatprep.subr.mxu0 0.0
        %1565 = vmatpush2.msra.mxu0 0.0
        %1566 = vmatprep.subr.mxu0 0.0
        %1567 = vmatpush2.msra.mxu0 0.0
        %1568 = vmatprep.subr.mxu0 0.0
        %1569 = vmatpush2.msra.mxu0 0.0
        %1570 = vmatprep.subr.mxu0 0.0
        %1571 = vmatpush2.msra.mxu0 0.0
        %1572 = vmatprep.subr.mxu0 0.0
        %1573 = vmatpush2.msra.mxu0 0.0
        %1574 = vmatprep.subr.mxu0 0.0
        %1575 = vmatpush2.msra.mxu0 0.0
        %1576 = vmatprep.subr.mxu0 0.0
        %1577 = vmatpush2.msra.mxu0 0.0
        %1578 = vmatprep.subr.mxu0 0.0
        %1579 = vmatpush2.msra.mxu0 0.0
        %1580 = vmatprep.subr.mxu0 0.0
        %1581 = vmatpush2.msra.mxu0 0.0
        %1582 = vmatprep.subr.mxu0 0.0
        %1583 = vmatpush2.msra.mxu0 0.0
        %1584 = vmatprep.subr.mxu0 0.0
        %1585 = vmatpush2.msra.mxu0 0.0
        %1586 = vmatprep.subr.mxu0 0.0
        %1587 = vmatpush2.msra.mxu0 0.0
        %1588 = vmatprep.subr.mxu0 0.0
        %1589 = vmatpush2.msra.mxu0 0.0
        %1590 = vmatprep.subr.mxu0 0.0
        %1591 = vmatpush2.msra.mxu0 0.0
        %1592 = vmatprep.subr.mxu0 0.0
        %1593 = vmatpush2.msra.mxu0 0.0
        %1594 = vmatprep.mubr.f32.mxu0 0.0
        %1595 = vmatmul.mubr.f32.gmra.mxu0 %v1379
        %v1596 = vpop.f32.mrf.mxu0
        %v1597 = vadd.f32 %v1443, %v1596
        %v1598 = vpop.f32.mrf.mxu0
        %1599 = vmatprep.mubr.f32.mxu0 0.0
        %1600 = vmatmul.mubr.f32.gmra.mxu0 %v1380
        %v1601 = vpop.f32.mrf.mxu0
        %v1602 = vadd.f32 %v1443, %v1601
        %v1603 = vpop.f32.mrf.mxu0
        %1604 = vmatprep.mubr.f32.mxu0 0.0
        %1605 = vmatmul.mubr.f32.gmra.mxu0 %v1381
        %v1606 = vpop.f32.mrf.mxu0
        %v1607 = vadd.f32 %v1443, %v1606
        %v1608 = vpop.f32.mrf.mxu0
        %1609 = vdwg.mxu0
        %v1610 = vmul.f32 %v1514, 0.17677669
        %v1611 = vmul.f32 %v1520, 0.17677669
        %v1612 = vmul.f32 %v1526, 0.17677669
        %vm1613 = vcmask 261120
        %v1615 = vsel %vm1613, %v1610, 0
        %v1618 = vsel %vm1613, %v1611, 0
        %v1621 = vsel %vm1613, %v1516, 0
        %v1624 = vsel %vm1613, %v1522, 0
        %1626 = vmatprep.subr.mxu0 0.0
        %1627 = vmatpush1.xpose.msra.mxu0 0.0
        %1628 = vmatprep.subr.mxu0 0.0
        %1629 = vmatpush1.xpose.msra.mxu0 0.0
        %1630 = vmatprep.subr.mxu0 0.0
        %1631 = vmatpush1.xpose.msra.mxu0 0.0
        %1632 = vmatprep.subr.mxu0 0.0
        %1633 = vmatpush1.xpose.msra.mxu0 0.0
        %1634 = vmatprep.subr.mxu0 0.0
        %1635 = vmatpush1.xpose.msra.mxu0 0.0
        %1636 = vmatprep.subr.mxu0 0.0
        %1637 = vmatpush1.xpose.msra.mxu0 0.0
        %1638 = vmatprep.subr.mxu0 0.0
        %1639 = vmatpush1.xpose.msra.mxu0 0.0
        %1640 = vmatprep.subr.mxu0 0.0
        %1641 = vmatpush1.xpose.msra.mxu0 0.0
        %1642 = vmatprep.subr.mxu0 0.0
        %1643 = vmatpush1.xpose.msra.mxu0 0.0
        %1644 = vmatprep.subr.mxu0 0.0
        %1645 = vmatpush1.xpose.msra.mxu0 0.0
        %1646 = vmatprep.subr.mxu0 0.0
        %1647 = vmatpush1.xpose.msra.mxu0 0.0
        %1648 = vmatprep.subr.mxu0 0.0
        %1649 = vmatpush1.xpose.msra.mxu0 0.0
        %1650 = vmatprep.subr.mxu0 0.0
        %1651 = vmatpush1.xpose.msra.mxu0 0.0
        %1652 = vmatprep.subr.mxu0 0.0
        %1653 = vmatpush1.xpose.msra.mxu0 0.0
        %1654 = vmatprep.subr.mxu0 0.0
        %1655 = vmatpush1.xpose.msra.mxu0 %v1624
        %1656 = vmatprep.subr.mxu0 0.0
        %1657 = vmatpush1.xpose.msra.mxu0 %v1621
        %1658 = vmatprep.subr.mxu0 0.0
        %1659 = vmatpush2.xpose.msra.mxu0 0.0
        %1660 = vmatprep.subr.mxu0 0.0
        %1661 = vmatpush2.xpose.msra.mxu0 0.0
        %1662 = vmatprep.subr.mxu0 0.0
        %1663 = vmatpush2.xpose.msra.mxu0 0.0
        %1664 = vmatprep.subr.mxu0 0.0
        %1665 = vmatpush2.xpose.msra.mxu0 0.0
        %1666 = vmatprep.subr.mxu0 0.0
        %1667 = vmatpush2.xpose.msra.mxu0 0.0
        %1668 = vmatprep.subr.mxu0 0.0
        %1669 = vmatpush2.xpose.msra.mxu0 0.0
        %1670 = vmatprep.subr.mxu0 0.0
        %1671 = vmatpush2.xpose.msra.mxu0 0.0
        %1672 = vmatprep.subr.mxu0 0.0
        %1673 = vmatpush2.xpose.msra.mxu0 0.0
        %1674 = vmatprep.subr.mxu0 0.0
        %1675 = vmatpush2.xpose.msra.mxu0 0.0
        %1676 = vmatprep.subr.mxu0 0.0
        %1677 = vmatpush2.xpose.msra.mxu0 0.0
        %1678 = vmatprep.subr.mxu0 0.0
        %1679 = vmatpush2.xpose.msra.mxu0 0.0
        %1680 = vmatprep.subr.mxu0 0.0
        %1681 = vmatpush2.xpose.msra.mxu0 0.0
        %1682 = vmatprep.subr.mxu0 0.0
        %1683 = vmatpush2.xpose.msra.mxu0 0.0
        %1684 = vmatprep.subr.mxu0 0.0
        %1685 = vmatpush2.xpose.msra.mxu0 0.0
        %1686 = vmatprep.subr.mxu0 0.0
        %1687 = vmatpush2.xpose.msra.mxu0 0.0
        %1688 = vmatprep.subr.mxu0 0.0
        %1689 = vmatpush2.xpose.msra.mxu0 0.0
        %1690 = vmatprep.mubr.f32.mxu0 0.0
        %1691 = vmatmul.mubr.f32.gmra.mxu0 %v1615
        %v1692 = vpop.f32.mrf.mxu0
        %v1693 = vadd.f32 0.0, %v1692
        %v1694 = vpop.f32.mrf.mxu0
        %1695 = vmatprep.mubr.f32.mxu0 0.0
        %1696 = vmatmul.mubr.f32.gmra.mxu0 %v1618
        %v1697 = vpop.f32.mrf.mxu0
        %v1698 = vadd.f32 0.0, %v1697
        %v1699 = vpop.f32.mrf.mxu0
        %1700 = vdwg.mxu0
        %vm1701 = vcmask 72704
        %v1702 = vsel %vm1701, %v1693, -inf
        %1703 = vmax.xlane.f32.xlu0 %v1702
        %v1704 = vpop.xlane.xlu0 %1703
        %vm1705 = vcmask 65536
        %v1706 = vsel %vm1705, %v1698, -inf
        %1707 = vmax.xlane.f32.xlu0 %v1706
        %v1708 = vpop.xlane.xlu0 %1707
        %v1709 = vsub.f32 %v1693, %v1704
        %v1710 = vsub.f32 %v1698, %v1708
        %v1711 = vmul.f32 %v1709, 1.442695
        %v1712 = vpow.pop %v1711
        %v1713 = vmul.f32 %v1710, 1.442695
        %v1714 = vpow.pop %v1713
        %v1715 = vsel %vm1701, %v1712, 0.0
        %1716 = vadd.xlane.f32.xlu0 %v1715
        %v1717 = vpop.xlane.xlu0 %1716
        %v1718 = vsel %vm1705, %v1714, 0.0
        %1719 = vadd.xlane.f32.xlu0 %v1718
        %v1720 = vpop.xlane.xlu0 %1719
        %v1721 = vrcp.pop %v1717
        %v1722 = vrcp.pop %v1720
        %v1723 = vmul.f32 %v1712, %v1721
        %v1724 = vmul.f32 %v1714, %v1722
        %v1726 = vsel %vm1701, %v1723, 0
        %v1729 = vsel %vm1701, %v1724, 0
        %vm1731 = vcmask 1040384
        %v1733 = vsel %vm1731, %v1602, 0
        %1735 = vmatprep.subr.mxu0 0.0
        %1736 = vmatpush1.msra.mxu0 0.0
        %1737 = vmatprep.subr.mxu0 0.0
        %1738 = vmatpush1.msra.mxu0 0.0
        %1739 = vmatprep.subr.mxu0 0.0
        %1740 = vmatpush1.msra.mxu0 0.0
        %1741 = vmatprep.subr.mxu0 0.0
        %1742 = vmatpush1.msra.mxu0 0.0
        %1743 = vmatprep.subr.mxu0 0.0
        %1744 = vmatpush1.msra.mxu0 0.0
        %1745 = vmatprep.subr.mxu0 0.0
        %1746 = vmatpush1.msra.mxu0 0.0
        %1747 = vmatprep.subr.mxu0 0.0
        %1748 = vmatpush1.msra.mxu0 0.0
        %1749 = vmatprep.subr.mxu0 0.0
        %1750 = vmatpush1.msra.mxu0 0.0
        %1751 = vmatprep.subr.mxu0 0.0
        %1752 = vmatpush1.msra.mxu0 0.0
        %1753 = vmatprep.subr.mxu0 0.0
        %1754 = vmatpush1.msra.mxu0 0.0
        %1755 = vmatprep.subr.mxu0 0.0
        %1756 = vmatpush1.msra.mxu0 0.0
        %1757 = vmatprep.subr.mxu0 0.0
        %1758 = vmatpush1.msra.mxu0 0.0
        %1759 = vmatprep.subr.mxu0 0.0
        %1760 = vmatpush1.msra.mxu0 0.0
        %1761 = vmatprep.subr.mxu0 0.0
        %1762 = vmatpush1.msra.mxu0 0.0
        %1763 = vmatprep.subr.mxu0 0.0
        %1764 = vmatpush1.msra.mxu0 %v1733
        %1765 = vmatprep.subr.mxu0 0.0
        %1766 = vmatpush1.msra.mxu0 %v1597
        %1767 = vmatprep.subr.mxu0 0.0
        %1768 = vmatpush2.msra.mxu0 0.0
        %1769 = vmatprep.subr.mxu0 0.0
        %1770 = vmatpush2.msra.mxu0 0.0
        %1771 = vmatprep.subr.mxu0 0.0
        %1772 = vmatpush2.msra.mxu0 0.0
        %1773 = vmatprep.subr.mxu0 0.0
        %1774 = vmatpush2.msra.mxu0 0.0
        %1775 = vmatprep.subr.mxu0 0.0
        %1776 = vmatpush2.msra.mxu0 0.0
        %1777 = vmatprep.subr.mxu0 0.0
        %1778 = vmatpush2.msra.mxu0 0.0
        %1779 = vmatprep.subr.mxu0 0.0
        %1780 = vmatpush2.msra.mxu0 0.0
        %1781 = vmatprep.subr.mxu0 0.0
        %1782 = vmatpush2.msra.mxu0 0.0
        %1783 = vmatprep.subr.mxu0 0.0
        %1784 = vmatpush2.msra.mxu0 0.0
        %1785 = vmatprep.subr.mxu0 0.0
        %1786 = vmatpush2.msra.mxu0 0.0
        %1787 = vmatprep.subr.mxu0 0.0
        %1788 = vmatpush2.msra.mxu0 0.0
        %1789 = vmatprep.subr.mxu0 0.0
        %1790 = vmatpush2.msra.mxu0 0.0
        %1791 = vmatprep.subr.mxu0 0.0
        %1792 = vmatpush2.msra.mxu0 0.0
        %1793 = vmatprep.subr.mxu0 0.0
        %1794 = vmatpush2.msra.mxu0 0.0
        %1795 = vmatprep.subr.mxu0 0.0
        %1796 = vmatpush2.msra.mxu0 0.0
        %1797 = vmatprep.subr.mxu0 0.0
        %1798 = vmatpush2.msra.mxu0 0.0
        %1799 = vmatprep.mubr.f32.mxu0 0.0
        %1800 = vmatmul.mubr.f32.gmra.mxu0 %v1726
        %v1801 = vpop.f32.mrf.mxu0
        %v1802 = vadd.f32 0.0, %v1801
        %v1803 = vpop.f32.mrf.mxu0
        %1804 = vmatprep.mubr.f32.mxu0 0.0
        %1805 = vmatmul.mubr.f32.gmra.mxu0 %v1729
        %v1806 = vpop.f32.mrf.mxu0
        %v1807 = vadd.f32 0.0, %v1806
        %v1808 = vpop.f32.mrf.mxu0
        %1809 = vdwg.mxu0
        %1810 = vrot.lane.b32.xlu0 %v1610, 96
        %v1811 = vpop.permute.xlu0 %1810
        %1812 = vrot.lane.b32.xlu0 %v1611, 96
        %v1813 = vpop.permute.xlu0 %1812
        %1814 = vrot.lane.b32.xlu0 %v1516, 96
        %v1815 = vpop.permute.xlu0 %1814
        %1816 = vrot.lane.b32.xlu0 %v1522, 96
        %v1817 = vpop.permute.xlu0 %1816
        %v1818 = vsel %vm1613, %v1811, 0
        %v1820 = vsel %vm1613, %v1813, 0
        %v1822 = vsel %vm1613, %v1815, 0
        %v1824 = vsel %vm1613, %v1817, 0
        %1826 = vmatprep.subr.mxu0 0.0
        %1827 = vmatpush1.xpose.msra.mxu0 0.0
        %1828 = vmatprep.subr.mxu0 0.0
        %1829 = vmatpush1.xpose.msra.mxu0 0.0
        %1830 = vmatprep.subr.mxu0 0.0
        %1831 = vmatpush1.xpose.msra.mxu0 0.0
        %1832 = vmatprep.subr.mxu0 0.0
        %1833 = vmatpush1.xpose.msra.mxu0 0.0
        %1834 = vmatprep.subr.mxu0 0.0
        %1835 = vmatpush1.xpose.msra.mxu0 0.0
        %1836 = vmatprep.subr.mxu0 0.0
        %1837 = vmatpush1.xpose.msra.mxu0 0.0
        %1838 = vmatprep.subr.mxu0 0.0
        %1839 = vmatpush1.xpose.msra.mxu0 0.0
        %1840 = vmatprep.subr.mxu0 0.0
        %1841 = vmatpush1.xpose.msra.mxu0 0.0
        %1842 = vmatprep.subr.mxu0 0.0
        %1843 = vmatpush1.xpose.msra.mxu0 0.0
        %1844 = vmatprep.subr.mxu0 0.0
        %1845 = vmatpush1.xpose.msra.mxu0 0.0
        %1846 = vmatprep.subr.mxu0 0.0
        %1847 = vmatpush1.xpose.msra.mxu0 0.0
        %1848 = vmatprep.subr.mxu0 0.0
        %1849 = vmatpush1.xpose.msra.mxu0 0.0
        %1850 = vmatprep.subr.mxu0 0.0
        %1851 = vmatpush1.xpose.msra.mxu0 0.0
        %1852 = vmatprep.subr.mxu0 0.0
        %1853 = vmatpush1.xpose.msra.mxu0 0.0
        %1854 = vmatprep.subr.mxu0 0.0
        %1855 = vmatpush1.xpose.msra.mxu0 %v1824
        %1856 = vmatprep.subr.mxu0 0.0
        %1857 = vmatpush1.xpose.msra.mxu0 %v1822
        %1858 = vmatprep.subr.mxu0 0.0
        %1859 = vmatpush2.xpose.msra.mxu0 0.0
        %1860 = vmatprep.subr.mxu0 0.0
        %1861 = vmatpush2.xpose.msra.mxu0 0.0
        %1862 = vmatprep.subr.mxu0 0.0
        %1863 = vmatpush2.xpose.msra.mxu0 0.0
        %1864 = vmatprep.subr.mxu0 0.0
        %1865 = vmatpush2.xpose.msra.mxu0 0.0
        %1866 = vmatprep.subr.mxu0 0.0
        %1867 = vmatpush2.xpose.msra.mxu0 0.0
        %1868 = vmatprep.subr.mxu0 0.0
        %1869 = vmatpush2.xpose.msra.mxu0 0.0
        %1870 = vmatprep.subr.mxu0 0.0
        %1871 = vmatpush2.xpose.msra.mxu0 0.0
        %1872 = vmatprep.subr.mxu0 0.0
        %1873 = vmatpush2.xpose.msra.mxu0 0.0
        %1874 = vmatprep.subr.mxu0 0.0
        %1875 = vmatpush2.xpose.msra.mxu0 0.0
        %1876 = vmatprep.subr.mxu0 0.0
        %1877 = vmatpush2.xpose.msra.mxu0 0.0
        %1878 = vmatprep.subr.mxu0 0.0
        %1879 = vmatpush2.xpose.msra.mxu0 0.0
        %1880 = vmatprep.subr.mxu0 0.0
        %1881 = vmatpush2.xpose.msra.mxu0 0.0
        %1882 = vmatprep.subr.mxu0 0.0
        %1883 = vmatpush2.xpose.msra.mxu0 0.0
        %1884 = vmatprep.subr.mxu0 0.0
        %1885 = vmatpush2.xpose.msra.mxu0 0.0
        %1886 = vmatprep.subr.mxu0 0.0
        %1887 = vmatpush2.xpose.msra.mxu0 0.0
        %1888 = vmatprep.subr.mxu0 0.0
        %1889 = vmatpush2.xpose.msra.mxu0 0.0
        %1890 = vmatprep.mubr.f32.mxu0 0.0
        %1891 = vmatmul.mubr.f32.gmra.mxu0 %v1818
        %v1892 = vpop.f32.mrf.mxu0
        %v1893 = vadd.f32 0.0, %v1892
        %v1894 = vpop.f32.mrf.mxu0
        %1895 = vmatprep.mubr.f32.mxu0 0.0
        %1896 = vmatmul.mubr.f32.gmra.mxu0 %v1820
        %v1897 = vpop.f32.mrf.mxu0
        %v1898 = vadd.f32 0.0, %v1897
        %v1899 = vpop.f32.mrf.mxu0
        %1900 = vdwg.mxu0
        %v1901 = vsel %vm1701, %v1893, -inf
        %1902 = vmax.xlane.f32.xlu0 %v1901
        %v1903 = vpop.xlane.xlu0 %1902
        %v1904 = vsel %vm1705, %v1898, -inf
        %1905 = vmax.xlane.f32.xlu0 %v1904
        %v1906 = vpop.xlane.xlu0 %1905
        %v1907 = vsub.f32 %v1893, %v1903
        %v1908 = vsub.f32 %v1898, %v1906
        %v1909 = vmul.f32 %v1907, 1.442695
        %v1910 = vpow.pop %v1909
        %v1911 = vmul.f32 %v1908, 1.442695
        %v1912 = vpow.pop %v1911
        %v1913 = vsel %vm1701, %v1910, 0.0
        %1914 = vadd.xlane.f32.xlu0 %v1913
        %v1915 = vpop.xlane.xlu0 %1914
        %v1916 = vsel %vm1705, %v1912, 0.0
        %1917 = vadd.xlane.f32.xlu0 %v1916
        %v1918 = vpop.xlane.xlu0 %1917
        %v1919 = vrcp.pop %v1915
        %v1920 = vrcp.pop %v1918
        %v1921 = vmul.f32 %v1910, %v1919
        %v1922 = vmul.f32 %v1912, %v1920
        %1924 = vrot.lane.b32.xlu0 %v1597, 96
        %v1925 = vpop.permute.xlu0 %1924
        %1926 = vrot.lane.b32.xlu0 %v1602, 96
        %v1927 = vpop.permute.xlu0 %1926
        %v1930 = vsel %vm1701, %v1921, 0
        %v1933 = vsel %vm1701, %v1922, 0
        %v1935 = vsel %vm1731, %v1927, 0
        %1937 = vmatprep.subr.mxu0 0.0
        %1938 = vmatpush1.msra.mxu0 0.0
        %1939 = vmatprep.subr.mxu0 0.0
        %1940 = vmatpush1.msra.mxu0 0.0
        %1941 = vmatprep.subr.mxu0 0.0
        %1942 = vmatpush1.msra.mxu0 0.0
        %1943 = vmatprep.subr.mxu0 0.0
        %1944 = vmatpush1.msra.mxu0 0.0
        %1945 = vmatprep.subr.mxu0 0.0
        %1946 = vmatpush1.msra.mxu0 0.0
        %1947 = vmatprep.subr.mxu0 0.0
        %1948 = vmatpush1.msra.mxu0 0.0
        %1949 = vmatprep.subr.mxu0 0.0
        %1950 = vmatpush1.msra.mxu0 0.0
        %1951 = vmatprep.subr.mxu0 0.0
        %1952 = vmatpush1.msra.mxu0 0.0
        %1953 = vmatprep.subr.mxu0 0.0
        %1954 = vmatpush1.msra.mxu0 0.0
        %1955 = vmatprep.subr.mxu0 0.0
        %1956 = vmatpush1.msra.mxu0 0.0
        %1957 = vmatprep.subr.mxu0 0.0
        %1958 = vmatpush1.msra.mxu0 0.0
        %1959 = vmatprep.subr.mxu0 0.0
        %1960 = vmatpush1.msra.mxu0 0.0
        %1961 = vmatprep.subr.mxu0 0.0
        %1962 = vmatpush1.msra.mxu0 0.0
        %1963 = vmatprep.subr.mxu0 0.0
        %1964 = vmatpush1.msra.mxu0 0.0
        %1965 = vmatprep.subr.mxu0 0.0
        %1966 = vmatpush1.msra.mxu0 %v1935
        %1967 = vmatprep.subr.mxu0 0.0
        %1968 = vmatpush1.msra.mxu0 %v1925
        %1969 = vmatprep.subr.mxu0 0.0
        %1970 = vmatpush2.msra.mxu0 0.0
        %1971 = vmatprep.subr.mxu0 0.0
        %1972 = vmatpush2.msra.mxu0 0.0
        %1973 = vmatprep.subr.mxu0 0.0
        %1974 = vmatpush2.msra.mxu0 0.0
        %1975 = vmatprep.subr.mxu0 0.0
        %1976 = vmatpush2.msra.mxu0 0.0
        %1977 = vmatprep.subr.mxu0 0.0
        %1978 = vmatpush2.msra.mxu0 0.0
        %1979 = vmatprep.subr.mxu0 0.0
        %1980 = vmatpush2.msra.mxu0 0.0
        %1981 = vmatprep.subr.mxu0 0.0
        %1982 = vmatpush2.msra.mxu0 0.0
        %1983 = vmatprep.subr.mxu0 0.0
        %1984 = vmatpush2.msra.mxu0 0.0
        %1985 = vmatprep.subr.mxu0 0.0
        %1986 = vmatpush2.msra.mxu0 0.0
        %1987 = vmatprep.subr.mxu0 0.0
        %1988 = vmatpush2.msra.mxu0 0.0
        %1989 = vmatprep.subr.mxu0 0.0
        %1990 = vmatpush2.msra.mxu0 0.0
        %1991 = vmatprep.subr.mxu0 0.0
        %1992 = vmatpush2.msra.mxu0 0.0
        %1993 = vmatprep.subr.mxu0 0.0
        %1994 = vmatpush2.msra.mxu0 0.0
        %1995 = vmatprep.subr.mxu0 0.0
        %1996 = vmatpush2.msra.mxu0 0.0
        %1997 = vmatprep.subr.mxu0 0.0
        %1998 = vmatpush2.msra.mxu0 0.0
        %1999 = vmatprep.subr.mxu0 0.0
        %2000 = vmatpush2.msra.mxu0 0.0
        %2001 = vmatprep.mubr.f32.mxu0 0.0
        %2002 = vmatmul.mubr.f32.gmra.mxu0 %v1930
        %v2003 = vpop.f32.mrf.mxu0
        %v2004 = vadd.f32 0.0, %v2003
        %v2005 = vpop.f32.mrf.mxu0
        %2006 = vmatprep.mubr.f32.mxu0 0.0
        %2007 = vmatmul.mubr.f32.gmra.mxu0 %v1933
        %v2008 = vpop.f32.mrf.mxu0
        %v2009 = vadd.f32 0.0, %v2008
        %v2010 = vpop.f32.mrf.mxu0
        %2011 = vdwg.mxu0
        %2012 = vrot.lane.b32.xlu0 %v1610, 64
        %v2013 = vpop.permute.xlu0 %2012
        %2014 = vrot.lane.b32.xlu0 %v1611, 64
        %v2015 = vpop.permute.xlu0 %2014
        %2016 = vrot.lane.b32.xlu0 %v1516, 64
        %v2017 = vpop.permute.xlu0 %2016
        %2018 = vrot.lane.b32.xlu0 %v1522, 64
        %v2019 = vpop.permute.xlu0 %2018
        %v2020 = vsel %vm1613, %v2013, 0
        %v2022 = vsel %vm1613, %v2015, 0
        %v2024 = vsel %vm1613, %v2017, 0
        %v2026 = vsel %vm1613, %v2019, 0
        %2028 = vmatprep.subr.mxu0 0.0
        %2029 = vmatpush1.xpose.msra.mxu0 0.0
        %2030 = vmatprep.subr.mxu0 0.0
        %2031 = vmatpush1.xpose.msra.mxu0 0.0
        %2032 = vmatprep.subr.mxu0 0.0
        %2033 = vmatpush1.xpose.msra.mxu0 0.0
        %2034 = vmatprep.subr.mxu0 0.0
        %2035 = vmatpush1.xpose.msra.mxu0 0.0
        %2036 = vmatprep.subr.mxu0 0.0
        %2037 = vmatpush1.xpose.msra.mxu0 0.0
        %2038 = vmatprep.subr.mxu0 0.0
        %2039 = vmatpush1.xpose.msra.mxu0 0.0
        %2040 = vmatprep.subr.mxu0 0.0
        %2041 = vmatpush1.xpose.msra.mxu0 0.0
        %2042 = vmatprep.subr.mxu0 0.0
        %2043 = vmatpush1.xpose.msra.mxu0 0.0
        %2044 = vmatprep.subr.mxu0 0.0
        %2045 = vmatpush1.xpose.msra.mxu0 0.0
        %2046 = vmatprep.subr.mxu0 0.0
        %2047 = vmatpush1.xpose.msra.mxu0 0.0
        %2048 = vmatprep.subr.mxu0 0.0
        %2049 = vmatpush1.xpose.msra.mxu0 0.0
        %2050 = vmatprep.subr.mxu0 0.0
        %2051 = vmatpush1.xpose.msra.mxu0 0.0
        %2052 = vmatprep.subr.mxu0 0.0
        %2053 = vmatpush1.xpose.msra.mxu0 0.0
        %2054 = vmatprep.subr.mxu0 0.0
        %2055 = vmatpush1.xpose.msra.mxu0 0.0
        %2056 = vmatprep.subr.mxu0 0.0
        %2057 = vmatpush1.xpose.msra.mxu0 %v2026
        %2058 = vmatprep.subr.mxu0 0.0
        %2059 = vmatpush1.xpose.msra.mxu0 %v2024
        %2060 = vmatprep.subr.mxu0 0.0
        %2061 = vmatpush2.xpose.msra.mxu0 0.0
        %2062 = vmatprep.subr.mxu0 0.0
        %2063 = vmatpush2.xpose.msra.mxu0 0.0
        %2064 = vmatprep.subr.mxu0 0.0
        %2065 = vmatpush2.xpose.msra.mxu0 0.0
        %2066 = vmatprep.subr.mxu0 0.0
        %2067 = vmatpush2.xpose.msra.mxu0 0.0
        %2068 = vmatprep.subr.mxu0 0.0
        %2069 = vmatpush2.xpose.msra.mxu0 0.0
        %2070 = vmatprep.subr.mxu0 0.0
        %2071 = vmatpush2.xpose.msra.mxu0 0.0
        %2072 = vmatprep.subr.mxu0 0.0
        %2073 = vmatpush2.xpose.msra.mxu0 0.0
        %2074 = vmatprep.subr.mxu0 0.0
        %2075 = vmatpush2.xpose.msra.mxu0 0.0
        %2076 = vmatprep.subr.mxu0 0.0
        %2077 = vmatpush2.xpose.msra.mxu0 0.0
        %2078 = vmatprep.subr.mxu0 0.0
        %2079 = vmatpush2.xpose.msra.mxu0 0.0
        %2080 = vmatprep.subr.mxu0 0.0
        %2081 = vmatpush2.xpose.msra.mxu0 0.0
        %2082 = vmatprep.subr.mxu0 0.0
        %2083 = vmatpush2.xpose.msra.mxu0 0.0
        %2084 = vmatprep.subr.mxu0 0.0
        %2085 = vmatpush2.xpose.msra.mxu0 0.0
        %2086 = vmatprep.subr.mxu0 0.0
        %2087 = vmatpush2.xpose.msra.mxu0 0.0
        %2088 = vmatprep.subr.mxu0 0.0
        %2089 = vmatpush2.xpose.msra.mxu0 0.0
        %2090 = vmatprep.subr.mxu0 0.0
        %2091 = vmatpush2.xpose.msra.mxu0 0.0
        %2092 = vmatprep.mubr.f32.mxu0 0.0
        %2093 = vmatmul.mubr.f32.gmra.mxu0 %v2020
        %v2094 = vpop.f32.mrf.mxu0
        %v2095 = vadd.f32 0.0, %v2094
        %v2096 = vpop.f32.mrf.mxu0
        %2097 = vmatprep.mubr.f32.mxu0 0.0
        %2098 = vmatmul.mubr.f32.gmra.mxu0 %v2022
        %v2099 = vpop.f32.mrf.mxu0
        %v2100 = vadd.f32 0.0, %v2099
        %v2101 = vpop.f32.mrf.mxu0
        %2102 = vdwg.mxu0
        %v2103 = vsel %vm1701, %v2095, -inf
        %2104 = vmax.xlane.f32.xlu0 %v2103
        %v2105 = vpop.xlane.xlu0 %2104
        %v2106 = vsel %vm1705, %v2100, -inf
        %2107 = vmax.xlane.f32.xlu0 %v2106
        %v2108 = vpop.xlane.xlu0 %2107
        %v2109 = vsub.f32 %v2095, %v2105
        %v2110 = vsub.f32 %v2100, %v2108
        %v2111 = vmul.f32 %v2109, 1.442695
        %v2112 = vpow.pop %v2111
        %v2113 = vmul.f32 %v2110, 1.442695
        %v2114 = vpow.pop %v2113
        %v2115 = vsel %vm1701, %v2112, 0.0
        %2116 = vadd.xlane.f32.xlu0 %v2115
        %v2117 = vpop.xlane.xlu0 %2116
        %v2118 = vsel %vm1705, %v2114, 0.0
        %2119 = vadd.xlane.f32.xlu0 %v2118
        %v2120 = vpop.xlane.xlu0 %2119
        %v2121 = vrcp.pop %v2117
        %v2122 = vrcp.pop %v2120
        %v2123 = vmul.f32 %v2112, %v2121
        %v2124 = vmul.f32 %v2114, %v2122
        %2125 = vrot.lane.b32.xlu0 %v1597, 64
        %v2126 = vpop.permute.xlu0 %2125
        %2127 = vrot.lane.b32.xlu0 %v1602, 64
        %v2128 = vpop.permute.xlu0 %2127
        %v2131 = vsel %vm1701, %v2123, 0
        %v2134 = vsel %vm1701, %v2124, 0
        %v2136 = vsel %vm1731, %v2128, 0
        %2138 = vmatprep.subr.mxu0 0.0
        %2139 = vmatpush1.msra.mxu0 0.0
        %2140 = vmatprep.subr.mxu0 0.0
        %2141 = vmatpush1.msra.mxu0 0.0
        %2142 = vmatprep.subr.mxu0 0.0
        %2143 = vmatpush1.msra.mxu0 0.0
        %2144 = vmatprep.subr.mxu0 0.0
        %2145 = vmatpush1.msra.mxu0 0.0
        %2146 = vmatprep.subr.mxu0 0.0
        %2147 = vmatpush1.msra.mxu0 0.0
        %2148 = vmatprep.subr.mxu0 0.0
        %2149 = vmatpush1.msra.mxu0 0.0
        %2150 = vmatprep.subr.mxu0 0.0
        %2151 = vmatpush1.msra.mxu0 0.0
        %2152 = vmatprep.subr.mxu0 0.0
        %2153 = vmatpush1.msra.mxu0 0.0
        %2154 = vmatprep.subr.mxu0 0.0
        %2155 = vmatpush1.msra.mxu0 0.0
        %2156 = vmatprep.subr.mxu0 0.0
        %2157 = vmatpush1.msra.mxu0 0.0
        %2158 = vmatprep.subr.mxu0 0.0
        %2159 = vmatpush1.msra.mxu0 0.0
        %2160 = vmatprep.subr.mxu0 0.0
        %2161 = vmatpush1.msra.mxu0 0.0
        %2162 = vmatprep.subr.mxu0 0.0
        %2163 = vmatpush1.msra.mxu0 0.0
        %2164 = vmatprep.subr.mxu0 0.0
        %2165 = vmatpush1.msra.mxu0 0.0
        %2166 = vmatprep.subr.mxu0 0.0
        %2167 = vmatpush1.msra.mxu0 %v2136
        %2168 = vmatprep.subr.mxu0 0.0
        %2169 = vmatpush1.msra.mxu0 %v2126
        %2170 = vmatprep.subr.mxu0 0.0
        %2171 = vmatpush2.msra.mxu0 0.0
        %2172 = vmatprep.subr.mxu0 0.0
        %2173 = vmatpush2.msra.mxu0 0.0
        %2174 = vmatprep.subr.mxu0 0.0
        %2175 = vmatpush2.msra.mxu0 0.0
        %2176 = vmatprep.subr.mxu0 0.0
        %2177 = vmatpush2.msra.mxu0 0.0
        %2178 = vmatprep.subr.mxu0 0.0
        %2179 = vmatpush2.msra.mxu0 0.0
        %2180 = vmatprep.subr.mxu0 0.0
        %2181 = vmatpush2.msra.mxu0 0.0
        %2182 = vmatprep.subr.mxu0 0.0
        %2183 = vmatpush2.msra.mxu0 0.0
        %2184 = vmatprep.subr.mxu0 0.0
        %2185 = vmatpush2.msra.mxu0 0.0
        %2186 = vmatprep.subr.mxu0 0.0
        %2187 = vmatpush2.msra.mxu0 0.0
        %2188 = vmatprep.subr.mxu0 0.0
        %2189 = vmatpush2.msra.mxu0 0.0
        %2190 = vmatprep.subr.mxu0 0.0
        %2191 = vmatpush2.msra.mxu0 0.0
        %2192 = vmatprep.subr.mxu0 0.0
        %2193 = vmatpush2.msra.mxu0 0.0
        %2194 = vmatprep.subr.mxu0 0.0
        %2195 = vmatpush2.msra.mxu0 0.0
        %2196 = vmatprep.subr.mxu0 0.0
        %2197 = vmatpush2.msra.mxu0 0.0
        %2198 = vmatprep.subr.mxu0 0.0
        %2199 = vmatpush2.msra.mxu0 0.0
        %2200 = vmatprep.subr.mxu0 0.0
        %2201 = vmatpush2.msra.mxu0 0.0
        %2202 = vmatprep.mubr.f32.mxu0 0.0
        %2203 = vmatmul.mubr.f32.gmra.mxu0 %v2131
        %v2204 = vpop.f32.mrf.mxu0
        %v2205 = vadd.f32 0.0, %v2204
        %v2206 = vpop.f32.mrf.mxu0
        %2207 = vmatprep.mubr.f32.mxu0 0.0
        %2208 = vmatmul.mubr.f32.gmra.mxu0 %v2134
        %v2209 = vpop.f32.mrf.mxu0
        %v2210 = vadd.f32 0.0, %v2209
        %v2211 = vpop.f32.mrf.mxu0
        %2212 = vdwg.mxu0
        %2213 = vrot.lane.b32.xlu0 %v1610, 32
        %v2214 = vpop.permute.xlu0 %2213
        %2215 = vrot.lane.b32.xlu0 %v1611, 32
        %v2216 = vpop.permute.xlu0 %2215
        %2217 = vrot.lane.b32.xlu0 %v1516, 32
        %v2218 = vpop.permute.xlu0 %2217
        %2219 = vrot.lane.b32.xlu0 %v1522, 32
        %v2220 = vpop.permute.xlu0 %2219
        %v2221 = vsel %vm1613, %v2214, 0
        %v2223 = vsel %vm1613, %v2216, 0
        %v2225 = vsel %vm1613, %v2218, 0
        %v2227 = vsel %vm1613, %v2220, 0
        %2229 = vmatprep.subr.mxu0 0.0
        %2230 = vmatpush1.xpose.msra.mxu0 0.0
        %2231 = vmatprep.subr.mxu0 0.0
        %2232 = vmatpush1.xpose.msra.mxu0 0.0
        %2233 = vmatprep.subr.mxu0 0.0
        %2234 = vmatpush1.xpose.msra.mxu0 0.0
        %2235 = vmatprep.subr.mxu0 0.0
        %2236 = vmatpush1.xpose.msra.mxu0 0.0
        %2237 = vmatprep.subr.mxu0 0.0
        %2238 = vmatpush1.xpose.msra.mxu0 0.0
        %2239 = vmatprep.subr.mxu0 0.0
        %2240 = vmatpush1.xpose.msra.mxu0 0.0
        %2241 = vmatprep.subr.mxu0 0.0
        %2242 = vmatpush1.xpose.msra.mxu0 0.0
        %2243 = vmatprep.subr.mxu0 0.0
        %2244 = vmatpush1.xpose.msra.mxu0 0.0
        %2245 = vmatprep.subr.mxu0 0.0
        %2246 = vmatpush1.xpose.msra.mxu0 0.0
        %2247 = vmatprep.subr.mxu0 0.0
        %2248 = vmatpush1.xpose.msra.mxu0 0.0
        %2249 = vmatprep.subr.mxu0 0.0
        %2250 = vmatpush1.xpose.msra.mxu0 0.0
        %2251 = vmatprep.subr.mxu0 0.0
        %2252 = vmatpush1.xpose.msra.mxu0 0.0
        %2253 = vmatprep.subr.mxu0 0.0
        %2254 = vmatpush1.xpose.msra.mxu0 0.0
        %2255 = vmatprep.subr.mxu0 0.0
        %2256 = vmatpush1.xpose.msra.mxu0 0.0
        %2257 = vmatprep.subr.mxu0 0.0
        %2258 = vmatpush1.xpose.msra.mxu0 %v2227
        %2259 = vmatprep.subr.mxu0 0.0
        %2260 = vmatpush1.xpose.msra.mxu0 %v2225
        %2261 = vmatprep.subr.mxu0 0.0
        %2262 = vmatpush2.xpose.msra.mxu0 0.0
        %2263 = vmatprep.subr.mxu0 0.0
        %2264 = vmatpush2.xpose.msra.mxu0 0.0
        %2265 = vmatprep.subr.mxu0 0.0
        %2266 = vmatpush2.xpose.msra.mxu0 0.0
        %2267 = vmatprep.subr.mxu0 0.0
        %2268 = vmatpush2.xpose.msra.mxu0 0.0
        %2269 = vmatprep.subr.mxu0 0.0
        %2270 = vmatpush2.xpose.msra.mxu0 0.0
        %2271 = vmatprep.subr.mxu0 0.0
        %2272 = vmatpush2.xpose.msra.mxu0 0.0
        %2273 = vmatprep.subr.mxu0 0.0
        %2274 = vmatpush2.xpose.msra.mxu0 0.0
        %2275 = vmatprep.subr.mxu0 0.0
        %2276 = vmatpush2.xpose.msra.mxu0 0.0
        %2277 = vmatprep.subr.mxu0 0.0
        %2278 = vmatpush2.xpose.msra.mxu0 0.0
        %2279 = vmatprep.subr.mxu0 0.0
        %2280 = vmatpush2.xpose.msra.mxu0 0.0
        %2281 = vmatprep.subr.mxu0 0.0
        %2282 = vmatpush2.xpose.msra.mxu0 0.0
        %2283 = vmatprep.subr.mxu0 0.0
        %2284 = vmatpush2.xpose.msra.mxu0 0.0
        %2285 = vmatprep.subr.mxu0 0.0
        %2286 = vmatpush2.xpose.msra.mxu0 0.0
        %2287 = vmatprep.subr.mxu0 0.0
        %2288 = vmatpush2.xpose.msra.mxu0 0.0
        %2289 = vmatprep.subr.mxu0 0.0
        %2290 = vmatpush2.xpose.msra.mxu0 0.0
        %2291 = vmatprep.subr.mxu0 0.0
        %2292 = vmatpush2.xpose.msra.mxu0 0.0
        %2293 = vmatprep.mubr.f32.mxu0 0.0
        %2294 = vmatmul.mubr.f32.gmra.mxu0 %v2221
        %v2295 = vpop.f32.mrf.mxu0
        %v2296 = vadd.f32 0.0, %v2295
        %v2297 = vpop.f32.mrf.mxu0
        %2298 = vmatprep.mubr.f32.mxu0 0.0
        %2299 = vmatmul.mubr.f32.gmra.mxu0 %v2223
        %v2300 = vpop.f32.mrf.mxu0
        %v2301 = vadd.f32 0.0, %v2300
        %v2302 = vpop.f32.mrf.mxu0
        %2303 = vdwg.mxu0
        %v2304 = vsel %vm1701, %v2296, -inf
        %2305 = vmax.xlane.f32.xlu0 %v2304
        %v2306 = vpop.xlane.xlu0 %2305
        %v2307 = vsel %vm1705, %v2301, -inf
        %2308 = vmax.xlane.f32.xlu0 %v2307
        %v2309 = vpop.xlane.xlu0 %2308
        %v2310 = vsub.f32 %v2296, %v2306
        %v2311 = vsub.f32 %v2301, %v2309
        %v2312 = vmul.f32 %v2310, 1.442695
        %v2313 = vpow.pop %v2312
        %v2314 = vmul.f32 %v2311, 1.442695
        %v2315 = vpow.pop %v2314
        %v2316 = vsel %vm1701, %v2313, 0.0
        %2317 = vadd.xlane.f32.xlu0 %v2316
        %v2318 = vpop.xlane.xlu0 %2317
        %v2319 = vsel %vm1705, %v2315, 0.0
        %2320 = vadd.xlane.f32.xlu0 %v2319
        %v2321 = vpop.xlane.xlu0 %2320
        %v2322 = vrcp.pop %v2318
        %v2323 = vrcp.pop %v2321
        %v2324 = vmul.f32 %v2313, %v2322
        %v2325 = vmul.f32 %v2315, %v2323
        %2326 = vrot.lane.b32.xlu0 %v1597, 32
        %v2327 = vpop.permute.xlu0 %2326
        %2328 = vrot.lane.b32.xlu0 %v1602, 32
        %v2329 = vpop.permute.xlu0 %2328
        %v2332 = vsel %vm1701, %v2324, 0
        %v2335 = vsel %vm1701, %v2325, 0
        %v2337 = vsel %vm1731, %v2329, 0
        %2339 = vmatprep.subr.mxu0 0.0
        %2340 = vmatpush1.msra.mxu0 0.0
        %2341 = vmatprep.subr.mxu0 0.0
        %2342 = vmatpush1.msra.mxu0 0.0
        %2343 = vmatprep.subr.mxu0 0.0
        %2344 = vmatpush1.msra.mxu0 0.0
        %2345 = vmatprep.subr.mxu0 0.0
        %2346 = vmatpush1.msra.mxu0 0.0
        %2347 = vmatprep.subr.mxu0 0.0
        %2348 = vmatpush1.msra.mxu0 0.0
        %2349 = vmatprep.subr.mxu0 0.0
        %2350 = vmatpush1.msra.mxu0 0.0
        %2351 = vmatprep.subr.mxu0 0.0
        %2352 = vmatpush1.msra.mxu0 0.0
        %2353 = vmatprep.subr.mxu0 0.0
        %2354 = vmatpush1.msra.mxu0 0.0
        %2355 = vmatprep.subr.mxu0 0.0
        %2356 = vmatpush1.msra.mxu0 0.0
        %2357 = vmatprep.subr.mxu0 0.0
        %2358 = vmatpush1.msra.mxu0 0.0
        %2359 = vmatprep.subr.mxu0 0.0
        %2360 = vmatpush1.msra.mxu0 0.0
        %2361 = vmatprep.subr.mxu0 0.0
        %2362 = vmatpush1.msra.mxu0 0.0
        %2363 = vmatprep.subr.mxu0 0.0
        %2364 = vmatpush1.msra.mxu0 0.0
        %2365 = vmatprep.subr.mxu0 0.0
        %2366 = vmatpush1.msra.mxu0 0.0
        %2367 = vmatprep.subr.mxu0 0.0
        %2368 = vmatpush1.msra.mxu0 %v2337
        %2369 = vmatprep.subr.mxu0 0.0
        %2370 = vmatpush1.msra.mxu0 %v2327
        %2371 = vmatprep.subr.mxu0 0.0
        %2372 = vmatpush2.msra.mxu0 0.0
        %2373 = vmatprep.subr.mxu0 0.0
        %2374 = vmatpush2.msra.mxu0 0.0
        %2375 = vmatprep.subr.mxu0 0.0
        %2376 = vmatpush2.msra.mxu0 0.0
        %2377 = vmatprep.subr.mxu0 0.0
        %2378 = vmatpush2.msra.mxu0 0.0
        %2379 = vmatprep.subr.mxu0 0.0
        %2380 = vmatpush2.msra.mxu0 0.0
        %2381 = vmatprep.subr.mxu0 0.0
        %2382 = vmatpush2.msra.mxu0 0.0
        %2383 = vmatprep.subr.mxu0 0.0
        %2384 = vmatpush2.msra.mxu0 0.0
        %2385 = vmatprep.subr.mxu0 0.0
        %2386 = vmatpush2.msra.mxu0 0.0
        %2387 = vmatprep.subr.mxu0 0.0
        %2388 = vmatpush2.msra.mxu0 0.0
        %2389 = vmatprep.subr.mxu0 0.0
        %2390 = vmatpush2.msra.mxu0 0.0
        %2391 = vmatprep.subr.mxu0 0.0
        %2392 = vmatpush2.msra.mxu0 0.0
        %2393 = vmatprep.subr.mxu0 0.0
        %2394 = vmatpush2.msra.mxu0 0.0
        %2395 = vmatprep.subr.mxu0 0.0
        %2396 = vmatpush2.msra.mxu0 0.0
        %2397 = vmatprep.subr.mxu0 0.0
        %2398 = vmatpush2.msra.mxu0 0.0
        %2399 = vmatprep.subr.mxu0 0.0
        %2400 = vmatpush2.msra.mxu0 0.0
        %2401 = vmatprep.subr.mxu0 0.0
        %2402 = vmatpush2.msra.mxu0 0.0
        %2403 = vmatprep.mubr.f32.mxu0 0.0
        %2404 = vmatmul.mubr.f32.gmra.mxu0 %v2332
        %v2405 = vpop.f32.mrf.mxu0
        %v2406 = vadd.f32 0.0, %v2405
        %v2407 = vpop.f32.mrf.mxu0
        %2408 = vmatprep.mubr.f32.mxu0 0.0
        %2409 = vmatmul.mubr.f32.gmra.mxu0 %v2335
        %v2410 = vpop.f32.mrf.mxu0
        %v2411 = vadd.f32 0.0, %v2410
        %v2412 = vpop.f32.mrf.mxu0
        %2413 = vdwg.mxu0
        %2416 = vrot.lane.b32.xlu0 %v2004, 32
        %v2417 = vpop.permute.xlu0 %2416
        %2418 = vrot.lane.b32.xlu0 %v2009, 32
        %v2419 = vpop.permute.xlu0 %2418
        %2424 = vrot.lane.b32.xlu0 %v2205, 64
        %v2425 = vpop.permute.xlu0 %2424
        %2426 = vrot.lane.b32.xlu0 %v2210, 64
        %v2427 = vpop.permute.xlu0 %2426
        %2432 = vrot.lane.b32.xlu0 %v2406, 96
        %v2433 = vpop.permute.xlu0 %2432
        %2434 = vrot.lane.b32.xlu0 %v2411, 96
        %v2435 = vpop.permute.xlu0 %2434
        %v2438 = vsel %vm1613, %v1802, %v2417
        %v2439 = vsel %vm1613, %v1807, %v2419
        %vm2440 = vcmask 523264
        %v2441 = vsel %vm2440, %v2438, %v2425
        %v2442 = vsel %vm2440, %v2439, %v2427
        %vm2443 = vcmask 785408
        %v2444 = vsel %vm2443, %v2441, %v2433
        %v2445 = vsel %vm2443, %v2442, %v2435
        %vm2447 = vcmask 1046528
        %v2448 = vrot.slane %v1611, 1
        %v2449 = vrot.slane %v1612, 1
        %v2450 = vsel %vm2447, %v2448, %v2449
        %v2452 = vrot.slane %v1522, 1
        %v2453 = vrot.slane %v1528, 1
        %v2454 = vsel %vm2447, %v2452, %v2453
        %v2455 = vsel %vm1613, %v2450, 0
        %v2457 = vsel %vm1613, %v2449, 0
        %v2459 = vsel %vm1613, %v2454, 0
        %v2461 = vsel %vm1613, %v2453, 0
        %2463 = vmatprep.subr.mxu0 0.0
        %2464 = vmatpush1.xpose.msra.mxu0 0.0
        %2465 = vmatprep.subr.mxu0 0.0
        %2466 = vmatpush1.xpose.msra.mxu0 0.0
        %2467 = vmatprep.subr.mxu0 0.0
        %2468 = vmatpush1.xpose.msra.mxu0 0.0
        %2469 = vmatprep.subr.mxu0 0.0
        %2470 = vmatpush1.xpose.msra.mxu0 0.0
        %2471 = vmatprep.subr.mxu0 0.0
        %2472 = vmatpush1.xpose.msra.mxu0 0.0
        %2473 = vmatprep.subr.mxu0 0.0
        %2474 = vmatpush1.xpose.msra.mxu0 0.0
        %2475 = vmatprep.subr.mxu0 0.0
        %2476 = vmatpush1.xpose.msra.mxu0 0.0
        %2477 = vmatprep.subr.mxu0 0.0
        %2478 = vmatpush1.xpose.msra.mxu0 0.0
        %2479 = vmatprep.subr.mxu0 0.0
        %2480 = vmatpush1.xpose.msra.mxu0 0.0
        %2481 = vmatprep.subr.mxu0 0.0
        %2482 = vmatpush1.xpose.msra.mxu0 0.0
        %2483 = vmatprep.subr.mxu0 0.0
        %2484 = vmatpush1.xpose.msra.mxu0 0.0
        %2485 = vmatprep.subr.mxu0 0.0
        %2486 = vmatpush1.xpose.msra.mxu0 0.0
        %2487 = vmatprep.subr.mxu0 0.0
        %2488 = vmatpush1.xpose.msra.mxu0 0.0
        %2489 = vmatprep.subr.mxu0 0.0
        %2490 = vmatpush1.xpose.msra.mxu0 0.0
        %2491 = vmatprep.subr.mxu0 0.0
        %2492 = vmatpush1.xpose.msra.mxu0 %v2461
        %2493 = vmatprep.subr.mxu0 0.0
        %2494 = vmatpush1.xpose.msra.mxu0 %v2459
        %2495 = vmatprep.subr.mxu0 0.0
        %2496 = vmatpush2.xpose.msra.mxu0 0.0
        %2497 = vmatprep.subr.mxu0 0.0
        %2498 = vmatpush2.xpose.msra.mxu0 0.0
        %2499 = vmatprep.subr.mxu0 0.0
        %2500 = vmatpush2.xpose.msra.mxu0 0.0
        %2501 = vmatprep.subr.mxu0 0.0
        %2502 = vmatpush2.xpose.msra.mxu0 0.0
        %2503 = vmatprep.subr.mxu0 0.0
        %2504 = vmatpush2.xpose.msra.mxu0 0.0
        %2505 = vmatprep.subr.mxu0 0.0
        %2506 = vmatpush2.xpose.msra.mxu0 0.0
        %2507 = vmatprep.subr.mxu0 0.0
        %2508 = vmatpush2.xpose.msra.mxu0 0.0
        %2509 = vmatprep.subr.mxu0 0.0
        %2510 = vmatpush2.xpose.msra.mxu0 0.0
        %2511 = vmatprep.subr.mxu0 0.0
        %2512 = vmatpush2.xpose.msra.mxu0 0.0
        %2513 = vmatprep.subr.mxu0 0.0
        %2514 = vmatpush2.xpose.msra.mxu0 0.0
        %2515 = vmatprep.subr.mxu0 0.0
        %2516 = vmatpush2.xpose.msra.mxu0 0.0
        %2517 = vmatprep.subr.mxu0 0.0
        %2518 = vmatpush2.xpose.msra.mxu0 0.0
        %2519 = vmatprep.subr.mxu0 0.0
        %2520 = vmatpush2.xpose.msra.mxu0 0.0
        %2521 = vmatprep.subr.mxu0 0.0
        %2522 = vmatpush2.xpose.msra.mxu0 0.0
        %2523 = vmatprep.subr.mxu0 0.0
        %2524 = vmatpush2.xpose.msra.mxu0 0.0
        %2525 = vmatprep.subr.mxu0 0.0
        %2526 = vmatpush2.xpose.msra.mxu0 0.0
        %2527 = vmatprep.mubr.f32.mxu0 0.0
        %2528 = vmatmul.mubr.f32.gmra.mxu0 %v2455
        %v2529 = vpop.f32.mrf.mxu0
        %v2530 = vadd.f32 0.0, %v2529
        %v2531 = vpop.f32.mrf.mxu0
        %2532 = vmatprep.mubr.f32.mxu0 0.0
        %2533 = vmatmul.mubr.f32.gmra.mxu0 %v2457
        %v2534 = vpop.f32.mrf.mxu0
        %v2535 = vadd.f32 0.0, %v2534
        %v2536 = vpop.f32.mrf.mxu0
        %2537 = vdwg.mxu0
        %v2538 = vsel %vm1701, %v2530, -inf
        %2539 = vmax.xlane.f32.xlu0 %v2538
        %v2540 = vpop.xlane.xlu0 %2539
        %v2541 = vsel %vm1705, %v2535, -inf
        %2542 = vmax.xlane.f32.xlu0 %v2541
        %v2543 = vpop.xlane.xlu0 %2542
        %v2544 = vsub.f32 %v2530, %v2540
        %v2545 = vsub.f32 %v2535, %v2543
        %v2546 = vmul.f32 %v2544, 1.442695
        %v2547 = vpow.pop %v2546
        %v2548 = vmul.f32 %v2545, 1.442695
        %v2549 = vpow.pop %v2548
        %v2550 = vsel %vm1701, %v2547, 0.0
        %2551 = vadd.xlane.f32.xlu0 %v2550
        %v2552 = vpop.xlane.xlu0 %2551
        %v2553 = vsel %vm1705, %v2549, 0.0
        %2554 = vadd.xlane.f32.xlu0 %v2553
        %v2555 = vpop.xlane.xlu0 %2554
        %v2556 = vrcp.pop %v2552
        %v2557 = vrcp.pop %v2555
        %v2558 = vmul.f32 %v2547, %v2556
        %v2559 = vmul.f32 %v2549, %v2557
        %v2561 = vrot.slane %v1602, 1
        %v2562 = vrot.slane %v1607, 1
        %v2563 = vsel %vm2447, %v2561, %v2562
        %v2566 = vsel %vm1701, %v2558, 0
        %v2569 = vsel %vm1701, %v2559, 0
        %v2571 = vsel %vm1731, %v2562, 0
        %2573 = vmatprep.subr.mxu0 0.0
        %2574 = vmatpush1.msra.mxu0 0.0
        %2575 = vmatprep.subr.mxu0 0.0
        %2576 = vmatpush1.msra.mxu0 0.0
        %2577 = vmatprep.subr.mxu0 0.0
        %2578 = vmatpush1.msra.mxu0 0.0
        %2579 = vmatprep.subr.mxu0 0.0
        %2580 = vmatpush1.msra.mxu0 0.0
        %2581 = vmatprep.subr.mxu0 0.0
        %2582 = vmatpush1.msra.mxu0 0.0
        %2583 = vmatprep.subr.mxu0 0.0
        %2584 = vmatpush1.msra.mxu0 0.0
        %2585 = vmatprep.subr.mxu0 0.0
        %2586 = vmatpush1.msra.mxu0 0.0
        %2587 = vmatprep.subr.mxu0 0.0
        %2588 = vmatpush1.msra.mxu0 0.0
        %2589 = vmatprep.subr.mxu0 0.0
        %2590 = vmatpush1.msra.mxu0 0.0
        %2591 = vmatprep.subr.mxu0 0.0
        %2592 = vmatpush1.msra.mxu0 0.0
        %2593 = vmatprep.subr.mxu0 0.0
        %2594 = vmatpush1.msra.mxu0 0.0
        %2595 = vmatprep.subr.mxu0 0.0
        %2596 = vmatpush1.msra.mxu0 0.0
        %2597 = vmatprep.subr.mxu0 0.0
        %2598 = vmatpush1.msra.mxu0 0.0
        %2599 = vmatprep.subr.mxu0 0.0
        %2600 = vmatpush1.msra.mxu0 0.0
        %2601 = vmatprep.subr.mxu0 0.0
        %2602 = vmatpush1.msra.mxu0 %v2571
        %2603 = vmatprep.subr.mxu0 0.0
        %2604 = vmatpush1.msra.mxu0 %v2563
        %2605 = vmatprep.subr.mxu0 0.0
        %2606 = vmatpush2.msra.mxu0 0.0
        %2607 = vmatprep.subr.mxu0 0.0
        %2608 = vmatpush2.msra.mxu0 0.0
        %2609 = vmatprep.subr.mxu0 0.0
        %2610 = vmatpush2.msra.mxu0 0.0
        %2611 = vmatprep.subr.mxu0 0.0
        %2612 = vmatpush2.msra.mxu0 0.0
        %2613 = vmatprep.subr.mxu0 0.0
        %2614 = vmatpush2.msra.mxu0 0.0
        %2615 = vmatprep.subr.mxu0 0.0
        %2616 = vmatpush2.msra.mxu0 0.0
        %2617 = vmatprep.subr.mxu0 0.0
        %2618 = vmatpush2.msra.mxu0 0.0
        %2619 = vmatprep.subr.mxu0 0.0
        %2620 = vmatpush2.msra.mxu0 0.0
        %2621 = vmatprep.subr.mxu0 0.0
        %2622 = vmatpush2.msra.mxu0 0.0
        %2623 = vmatprep.subr.mxu0 0.0
        %2624 = vmatpush2.msra.mxu0 0.0
        %2625 = vmatprep.subr.mxu0 0.0
        %2626 = vmatpush2.msra.mxu0 0.0
        %2627 = vmatprep.subr.mxu0 0.0
        %2628 = vmatpush2.msra.mxu0 0.0
        %2629 = vmatprep.subr.mxu0 0.0
        %2630 = vmatpush2.msra.mxu0 0.0
        %2631 = vmatprep.subr.mxu0 0.0
        %2632 = vmatpush2.msra.mxu0 0.0
        %2633 = vmatprep.subr.mxu0 0.0
        %2634 = vmatpush2.msra.mxu0 0.0
        %2635 = vmatprep.subr.mxu0 0.0
        %2636 = vmatpush2.msra.mxu0 0.0
        %2637 = vmatprep.mubr.f32.mxu0 0.0
        %2638 = vmatmul.mubr.f32.gmra.mxu0 %v2566
        %v2639 = vpop.f32.mrf.mxu0
        %v2640 = vadd.f32 0.0, %v2639
        %v2641 = vpop.f32.mrf.mxu0
        %2642 = vmatprep.mubr.f32.mxu0 0.0
        %2643 = vmatmul.mubr.f32.gmra.mxu0 %v2569
        %v2644 = vpop.f32.mrf.mxu0
        %v2645 = vadd.f32 0.0, %v2644
        %v2646 = vpop.f32.mrf.mxu0
        %2647 = vdwg.mxu0
        %2648 = vrot.lane.b32.xlu0 %v2450, 96
        %v2649 = vpop.permute.xlu0 %2648
        %2650 = vrot.lane.b32.xlu0 %v2449, 96
        %v2651 = vpop.permute.xlu0 %2650
        %2652 = vrot.lane.b32.xlu0 %v2454, 96
        %v2653 = vpop.permute.xlu0 %2652
        %2654 = vrot.lane.b32.xlu0 %v2453, 96
        %v2655 = vpop.permute.xlu0 %2654
        %v2656 = vsel %vm1613, %v2649, 0
        %v2658 = vsel %vm1613, %v2651, 0
        %v2660 = vsel %vm1613, %v2653, 0
        %v2662 = vsel %vm1613, %v2655, 0
        %2664 = vmatprep.subr.mxu0 0.0
        %2665 = vmatpush1.xpose.msra.mxu0 0.0
        %2666 = vmatprep.subr.mxu0 0.0
        %2667 = vmatpush1.xpose.msra.mxu0 0.0
        %2668 = vmatprep.subr.mxu0 0.0
        %2669 = vmatpush1.xpose.msra.mxu0 0.0
        %2670 = vmatprep.subr.mxu0 0.0
        %2671 = vmatpush1.xpose.msra.mxu0 0.0
        %2672 = vmatprep.subr.mxu0 0.0
        %2673 = vmatpush1.xpose.msra.mxu0 0.0
        %2674 = vmatprep.subr.mxu0 0.0
        %2675 = vmatpush1.xpose.msra.mxu0 0.0
        %2676 = vmatprep.subr.mxu0 0.0
        %2677 = vmatpush1.xpose.msra.mxu0 0.0
        %2678 = vmatprep.subr.mxu0 0.0
        %2679 = vmatpush1.xpose.msra.mxu0 0.0
        %2680 = vmatprep.subr.mxu0 0.0
        %2681 = vmatpush1.xpose.msra.mxu0 0.0
        %2682 = vmatprep.subr.mxu0 0.0
        %2683 = vmatpush1.xpose.msra.mxu0 0.0
        %2684 = vmatprep.subr.mxu0 0.0
        %2685 = vmatpush1.xpose.msra.mxu0 0.0
        %2686 = vmatprep.subr.mxu0 0.0
        %2687 = vmatpush1.xpose.msra.mxu0 0.0
        %2688 = vmatprep.subr.mxu0 0.0
        %2689 = vmatpush1.xpose.msra.mxu0 0.0
        %2690 = vmatprep.subr.mxu0 0.0
        %2691 = vmatpush1.xpose.msra.mxu0 0.0
        %2692 = vmatprep.subr.mxu0 0.0
        %2693 = vmatpush1.xpose.msra.mxu0 %v2662
        %2694 = vmatprep.subr.mxu0 0.0
        %2695 = vmatpush1.xpose.msra.mxu0 %v2660
        %2696 = vmatprep.subr.mxu0 0.0
        %2697 = vmatpush2.xpose.msra.mxu0 0.0
        %2698 = vmatprep.subr.mxu0 0.0
        %2699 = vmatpush2.xpose.msra.mxu0 0.0
        %2700 = vmatprep.subr.mxu0 0.0
        %2701 = vmatpush2.xpose.msra.mxu0 0.0
        %2702 = vmatprep.subr.mxu0 0.0
        %2703 = vmatpush2.xpose.msra.mxu0 0.0
        %2704 = vmatprep.subr.mxu0 0.0
        %2705 = vmatpush2.xpose.msra.mxu0 0.0
        %2706 = vmatprep.subr.mxu0 0.0
        %2707 = vmatpush2.xpose.msra.mxu0 0.0
        %2708 = vmatprep.subr.mxu0 0.0
        %2709 = vmatpush2.xpose.msra.mxu0 0.0
        %2710 = vmatprep.subr.mxu0 0.0
        %2711 = vmatpush2.xpose.msra.mxu0 0.0
        %2712 = vmatprep.subr.mxu0 0.0
        %2713 = vmatpush2.xpose.msra.mxu0 0.0
        %2714 = vmatprep.subr.mxu0 0.0
        %2715 = vmatpush2.xpose.msra.mxu0 0.0
        %2716 = vmatprep.subr.mxu0 0.0
        %2717 = vmatpush2.xpose.msra.mxu0 0.0
        %2718 = vmatprep.subr.mxu0 0.0
        %2719 = vmatpush2.xpose.msra.mxu0 0.0
        %2720 = vmatprep.subr.mxu0 0.0
        %2721 = vmatpush2.xpose.msra.mxu0 0.0
        %2722 = vmatprep.subr.mxu0 0.0
        %2723 = vmatpush2.xpose.msra.mxu0 0.0
        %2724 = vmatprep.subr.mxu0 0.0
        %2725 = vmatpush2.xpose.msra.mxu0 0.0
        %2726 = vmatprep.subr.mxu0 0.0
        %2727 = vmatpush2.xpose.msra.mxu0 0.0
        %2728 = vmatprep.mubr.f32.mxu0 0.0
        %2729 = vmatmul.mubr.f32.gmra.mxu0 %v2656
        %v2730 = vpop.f32.mrf.mxu0
        %v2731 = vadd.f32 0.0, %v2730
        %v2732 = vpop.f32.mrf.mxu0
        %2733 = vmatprep.mubr.f32.mxu0 0.0
        %2734 = vmatmul.mubr.f32.gmra.mxu0 %v2658
        %v2735 = vpop.f32.mrf.mxu0
        %v2736 = vadd.f32 0.0, %v2735
        %v2737 = vpop.f32.mrf.mxu0
        %2738 = vdwg.mxu0
        %v2739 = vsel %vm1701, %v2731, -inf
        %2740 = vmax.xlane.f32.xlu0 %v2739
        %v2741 = vpop.xlane.xlu0 %2740
        %v2742 = vsel %vm1705, %v2736, -inf
        %2743 = vmax.xlane.f32.xlu0 %v2742
        %v2744 = vpop.xlane.xlu0 %2743
        %v2745 = vsub.f32 %v2731, %v2741
        %v2746 = vsub.f32 %v2736, %v2744
        %v2747 = vmul.f32 %v2745, 1.442695
        %v2748 = vpow.pop %v2747
        %v2749 = vmul.f32 %v2746, 1.442695
        %v2750 = vpow.pop %v2749
        %v2751 = vsel %vm1701, %v2748, 0.0
        %2752 = vadd.xlane.f32.xlu0 %v2751
        %v2753 = vpop.xlane.xlu0 %2752
        %v2754 = vsel %vm1705, %v2750, 0.0
        %2755 = vadd.xlane.f32.xlu0 %v2754
        %v2756 = vpop.xlane.xlu0 %2755
        %v2757 = vrcp.pop %v2753
        %v2758 = vrcp.pop %v2756
        %v2759 = vmul.f32 %v2748, %v2757
        %v2760 = vmul.f32 %v2750, %v2758
        %2761 = vrot.lane.b32.xlu0 %v2563, 96
        %v2762 = vpop.permute.xlu0 %2761
        %2763 = vrot.lane.b32.xlu0 %v2562, 96
        %v2764 = vpop.permute.xlu0 %2763
        %v2767 = vsel %vm1701, %v2759, 0
        %v2770 = vsel %vm1701, %v2760, 0
        %v2772 = vsel %vm1731, %v2764, 0
        %2774 = vmatprep.subr.mxu0 0.0
        %2775 = vmatpush1.msra.mxu0 0.0
        %2776 = vmatprep.subr.mxu0 0.0
        %2777 = vmatpush1.msra.mxu0 0.0
        %2778 = vmatprep.subr.mxu0 0.0
        %2779 = vmatpush1.msra.mxu0 0.0
        %2780 = vmatprep.subr.mxu0 0.0
        %2781 = vmatpush1.msra.mxu0 0.0
        %2782 = vmatprep.subr.mxu0 0.0
        %2783 = vmatpush1.msra.mxu0 0.0
        %2784 = vmatprep.subr.mxu0 0.0
        %2785 = vmatpush1.msra.mxu0 0.0
        %2786 = vmatprep.subr.mxu0 0.0
        %2787 = vmatpush1.msra.mxu0 0.0
        %2788 = vmatprep.subr.mxu0 0.0
        %2789 = vmatpush1.msra.mxu0 0.0
        %2790 = vmatprep.subr.mxu0 0.0
        %2791 = vmatpush1.msra.mxu0 0.0
        %2792 = vmatprep.subr.mxu0 0.0
        %2793 = vmatpush1.msra.mxu0 0.0
        %2794 = vmatprep.subr.mxu0 0.0
        %2795 = vmatpush1.msra.mxu0 0.0
        %2796 = vmatprep.subr.mxu0 0.0
        %2797 = vmatpush1.msra.mxu0 0.0
        %2798 = vmatprep.subr.mxu0 0.0
        %2799 = vmatpush1.msra.mxu0 0.0
        %2800 = vmatprep.subr.mxu0 0.0
        %2801 = vmatpush1.msra.mxu0 0.0
        %2802 = vmatprep.subr.mxu0 0.0
        %2803 = vmatpush1.msra.mxu0 %v2772
        %2804 = vmatprep.subr.mxu0 0.0
        %2805 = vmatpush1.msra.mxu0 %v2762
        %2806 = vmatprep.subr.mxu0 0.0
        %2807 = vmatpush2.msra.mxu0 0.0
        %2808 = vmatprep.subr.mxu0 0.0
        %2809 = vmatpush2.msra.mxu0 0.0
        %2810 = vmatprep.subr.mxu0 0.0
        %2811 = vmatpush2.msra.mxu0 0.0
        %2812 = vmatprep.subr.mxu0 0.0
        %2813 = vmatpush2.msra.mxu0 0.0
        %2814 = vmatprep.subr.mxu0 0.0
        %2815 = vmatpush2.msra.mxu0 0.0
        %2816 = vmatprep.subr.mxu0 0.0
        %2817 = vmatpush2.msra.mxu0 0.0
        %2818 = vmatprep.subr.mxu0 0.0
        %2819 = vmatpush2.msra.mxu0 0.0
        %2820 = vmatprep.subr.mxu0 0.0
        %2821 = vmatpush2.msra.mxu0 0.0
        %2822 = vmatprep.subr.mxu0 0.0
        %2823 = vmatpush2.msra.mxu0 0.0
        %2824 = vmatprep.subr.mxu0 0.0
        %2825 = vmatpush2.msra.mxu0 0.0
        %2826 = vmatprep.subr.mxu0 0.0
        %2827 = vmatpush2.msra.mxu0 0.0
        %2828 = vmatprep.subr.mxu0 0.0
        %2829 = vmatpush2.msra.mxu0 0.0
        %2830 = vmatprep.subr.mxu0 0.0
        %2831 = vmatpush2.msra.mxu0 0.0
        %2832 = vmatprep.subr.mxu0 0.0
        %2833 = vmatpush2.msra.mxu0 0.0
        %2834 = vmatprep.subr.mxu0 0.0
        %2835 = vmatpush2.msra.mxu0 0.0
        %2836 = vmatprep.subr.mxu0 0.0
        %2837 = vmatpush2.msra.mxu0 0.0
        %2838 = vmatprep.mubr.f32.mxu0 0.0
        %2839 = vmatmul.mubr.f32.gmra.mxu0 %v2767
        %v2840 = vpop.f32.mrf.mxu0
        %v2841 = vadd.f32 0.0, %v2840
        %v2842 = vpop.f32.mrf.mxu0
        %2843 = vmatprep.mubr.f32.mxu0 0.0
        %2844 = vmatmul.mubr.f32.gmra.mxu0 %v2770
        %v2845 = vpop.f32.mrf.mxu0
        %v2846 = vadd.f32 0.0, %v2845
        %v2847 = vpop.f32.mrf.mxu0
        %2848 = vdwg.mxu0
        %2849 = vrot.lane.b32.xlu0 %v2450, 64
        %v2850 = vpop.permute.xlu0 %2849
        %2851 = vrot.lane.b32.xlu0 %v2449, 64
        %v2852 = vpop.permute.xlu0 %2851
        %2853 = vrot.lane.b32.xlu0 %v2454, 64
        %v2854 = vpop.permute.xlu0 %2853
        %2855 = vrot.lane.b32.xlu0 %v2453, 64
        %v2856 = vpop.permute.xlu0 %2855
        %v2857 = vsel %vm1613, %v2850, 0
        %v2859 = vsel %vm1613, %v2852, 0
        %v2861 = vsel %vm1613, %v2854, 0
        %v2863 = vsel %vm1613, %v2856, 0
        %2865 = vmatprep.subr.mxu0 0.0
        %2866 = vmatpush1.xpose.msra.mxu0 0.0
        %2867 = vmatprep.subr.mxu0 0.0
        %2868 = vmatpush1.xpose.msra.mxu0 0.0
        %2869 = vmatprep.subr.mxu0 0.0
        %2870 = vmatpush1.xpose.msra.mxu0 0.0
        %2871 = vmatprep.subr.mxu0 0.0
        %2872 = vmatpush1.xpose.msra.mxu0 0.0
        %2873 = vmatprep.subr.mxu0 0.0
        %2874 = vmatpush1.xpose.msra.mxu0 0.0
        %2875 = vmatprep.subr.mxu0 0.0
        %2876 = vmatpush1.xpose.msra.mxu0 0.0
        %2877 = vmatprep.subr.mxu0 0.0
        %2878 = vmatpush1.xpose.msra.mxu0 0.0
        %2879 = vmatprep.subr.mxu0 0.0
        %2880 = vmatpush1.xpose.msra.mxu0 0.0
        %2881 = vmatprep.subr.mxu0 0.0
        %2882 = vmatpush1.xpose.msra.mxu0 0.0
        %2883 = vmatprep.subr.mxu0 0.0
        %2884 = vmatpush1.xpose.msra.mxu0 0.0
        %2885 = vmatprep.subr.mxu0 0.0
        %2886 = vmatpush1.xpose.msra.mxu0 0.0
        %2887 = vmatprep.subr.mxu0 0.0
        %2888 = vmatpush1.xpose.msra.mxu0 0.0
        %2889 = vmatprep.subr.mxu0 0.0
        %2890 = vmatpush1.xpose.msra.mxu0 0.0
        %2891 = vmatprep.subr.mxu0 0.0
        %2892 = vmatpush1.xpose.msra.mxu0 0.0
        %2893 = vmatprep.subr.mxu0 0.0
        %2894 = vmatpush1.xpose.msra.mxu0 %v2863
        %2895 = vmatprep.subr.mxu0 0.0
        %2896 = vmatpush1.xpose.msra.mxu0 %v2861
        %2897 = vmatprep.subr.mxu0 0.0
        %2898 = vmatpush2.xpose.msra.mxu0 0.0
        %2899 = vmatprep.subr.mxu0 0.0
        %2900 = vmatpush2.xpose.msra.mxu0 0.0
        %2901 = vmatprep.subr.mxu0 0.0
        %2902 = vmatpush2.xpose.msra.mxu0 0.0
        %2903 = vmatprep.subr.mxu0 0.0
        %2904 = vmatpush2.xpose.msra.mxu0 0.0
        %2905 = vmatprep.subr.mxu0 0.0
        %2906 = vmatpush2.xpose.msra.mxu0 0.0
        %2907 = vmatprep.subr.mxu0 0.0
        %2908 = vmatpush2.xpose.msra.mxu0 0.0
        %2909 = vmatprep.subr.mxu0 0.0
        %2910 = vmatpush2.xpose.msra.mxu0 0.0
        %2911 = vmatprep.subr.mxu0 0.0
        %2912 = vmatpush2.xpose.msra.mxu0 0.0
        %2913 = vmatprep.subr.mxu0 0.0
        %2914 = vmatpush2.xpose.msra.mxu0 0.0
        %2915 = vmatprep.subr.mxu0 0.0
        %2916 = vmatpush2.xpose.msra.mxu0 0.0
        %2917 = vmatprep.subr.mxu0 0.0
        %2918 = vmatpush2.xpose.msra.mxu0 0.0
        %2919 = vmatprep.subr.mxu0 0.0
        %2920 = vmatpush2.xpose.msra.mxu0 0.0
        %2921 = vmatprep.subr.mxu0 0.0
        %2922 = vmatpush2.xpose.msra.mxu0 0.0
        %2923 = vmatprep.subr.mxu0 0.0
        %2924 = vmatpush2.xpose.msra.mxu0 0.0
        %2925 = vmatprep.subr.mxu0 0.0
        %2926 = vmatpush2.xpose.msra.mxu0 0.0
        %2927 = vmatprep.subr.mxu0 0.0
        %2928 = vmatpush2.xpose.msra.mxu0 0.0
        %2929 = vmatprep.mubr.f32.mxu0 0.0
        %2930 = vmatmul.mubr.f32.gmra.mxu0 %v2857
        %v2931 = vpop.f32.mrf.mxu0
        %v2932 = vadd.f32 0.0, %v2931
        %v2933 = vpop.f32.mrf.mxu0
        %2934 = vmatprep.mubr.f32.mxu0 0.0
        %2935 = vmatmul.mubr.f32.gmra.mxu0 %v2859
        %v2936 = vpop.f32.mrf.mxu0
        %v2937 = vadd.f32 0.0, %v2936
        %v2938 = vpop.f32.mrf.mxu0
        %2939 = vdwg.mxu0
        %v2940 = vsel %vm1701, %v2932, -inf
        %2941 = vmax.xlane.f32.xlu0 %v2940
        %v2942 = vpop.xlane.xlu0 %2941
        %v2943 = vsel %vm1705, %v2937, -inf
        %2944 = vmax.xlane.f32.xlu0 %v2943
        %v2945 = vpop.xlane.xlu0 %2944
        %v2946 = vsub.f32 %v2932, %v2942
        %v2947 = vsub.f32 %v2937, %v2945
        %v2948 = vmul.f32 %v2946, 1.442695
        %v2949 = vpow.pop %v2948
        %v2950 = vmul.f32 %v2947, 1.442695
        %v2951 = vpow.pop %v2950
        %v2952 = vsel %vm1701, %v2949, 0.0
        %2953 = vadd.xlane.f32.xlu0 %v2952
        %v2954 = vpop.xlane.xlu0 %2953
        %v2955 = vsel %vm1705, %v2951, 0.0
        %2956 = vadd.xlane.f32.xlu0 %v2955
        %v2957 = vpop.xlane.xlu0 %2956
        %v2958 = vrcp.pop %v2954
        %v2959 = vrcp.pop %v2957
        %v2960 = vmul.f32 %v2949, %v2958
        %v2961 = vmul.f32 %v2951, %v2959
        %2962 = vrot.lane.b32.xlu0 %v2563, 64
        %v2963 = vpop.permute.xlu0 %2962
        %2964 = vrot.lane.b32.xlu0 %v2562, 64
        %v2965 = vpop.permute.xlu0 %2964
        %v2968 = vsel %vm1701, %v2960, 0
        %v2971 = vsel %vm1701, %v2961, 0
        %v2973 = vsel %vm1731, %v2965, 0
        %2975 = vmatprep.subr.mxu0 0.0
        %2976 = vmatpush1.msra.mxu0 0.0
        %2977 = vmatprep.subr.mxu0 0.0
        %2978 = vmatpush1.msra.mxu0 0.0
        %2979 = vmatprep.subr.mxu0 0.0
        %2980 = vmatpush1.msra.mxu0 0.0
        %2981 = vmatprep.subr.mxu0 0.0
        %2982 = vmatpush1.msra.mxu0 0.0
        %2983 = vmatprep.subr.mxu0 0.0
        %2984 = vmatpush1.msra.mxu0 0.0
        %2985 = vmatprep.subr.mxu0 0.0
        %2986 = vmatpush1.msra.mxu0 0.0
        %2987 = vmatprep.subr.mxu0 0.0
        %2988 = vmatpush1.msra.mxu0 0.0
        %2989 = vmatprep.subr.mxu0 0.0
        %2990 = vmatpush1.msra.mxu0 0.0
        %2991 = vmatprep.subr.mxu0 0.0
        %2992 = vmatpush1.msra.mxu0 0.0
        %2993 = vmatprep.subr.mxu0 0.0
        %2994 = vmatpush1.msra.mxu0 0.0
        %2995 = vmatprep.subr.mxu0 0.0
        %2996 = vmatpush1.msra.mxu0 0.0
        %2997 = vmatprep.subr.mxu0 0.0
        %2998 = vmatpush1.msra.mxu0 0.0
        %2999 = vmatprep.subr.mxu0 0.0
        %3000 = vmatpush1.msra.mxu0 0.0
        %3001 = vmatprep.subr.mxu0 0.0
        %3002 = vmatpush1.msra.mxu0 0.0
        %3003 = vmatprep.subr.mxu0 0.0
        %3004 = vmatpush1.msra.mxu0 %v2973
        %3005 = vmatprep.subr.mxu0 0.0
        %3006 = vmatpush1.msra.mxu0 %v2963
        %3007 = vmatprep.subr.mxu0 0.0
        %3008 = vmatpush2.msra.mxu0 0.0
        %3009 = vmatprep.subr.mxu0 0.0
        %3010 = vmatpush2.msra.mxu0 0.0
        %3011 = vmatprep.subr.mxu0 0.0
        %3012 = vmatpush2.msra.mxu0 0.0
        %3013 = vmatprep.subr.mxu0 0.0
        %3014 = vmatpush2.msra.mxu0 0.0
        %3015 = vmatprep.subr.mxu0 0.0
        %3016 = vmatpush2.msra.mxu0 0.0
        %3017 = vmatprep.subr.mxu0 0.0
        %3018 = vmatpush2.msra.mxu0 0.0
        %3019 = vmatprep.subr.mxu0 0.0
        %3020 = vmatpush2.msra.mxu0 0.0
        %3021 = vmatprep.subr.mxu0 0.0
        %3022 = vmatpush2.msra.mxu0 0.0
        %3023 = vmatprep.subr.mxu0 0.0
        %3024 = vmatpush2.msra.mxu0 0.0
        %3025 = vmatprep.subr.mxu0 0.0
        %3026 = vmatpush2.msra.mxu0 0.0
        %3027 = vmatprep.subr.mxu0 0.0
        %3028 = vmatpush2.msra.mxu0 0.0
        %3029 = vmatprep.subr.mxu0 0.0
        %3030 = vmatpush2.msra.mxu0 0.0
        %3031 = vmatprep.subr.mxu0 0.0
        %3032 = vmatpush2.msra.mxu0 0.0
        %3033 = vmatprep.subr.mxu0 0.0
        %3034 = vmatpush2.msra.mxu0 0.0
        %3035 = vmatprep.subr.mxu0 0.0
        %3036 = vmatpush2.msra.mxu0 0.0
        %3037 = vmatprep.subr.mxu0 0.0
        %3038 = vmatpush2.msra.mxu0 0.0
        %3039 = vmatprep.mubr.f32.mxu0 0.0
        %3040 = vmatmul.mubr.f32.gmra.mxu0 %v2968
        %v3041 = vpop.f32.mrf.mxu0
        %v3042 = vadd.f32 0.0, %v3041
        %v3043 = vpop.f32.mrf.mxu0
        %3044 = vmatprep.mubr.f32.mxu0 0.0
        %3045 = vmatmul.mubr.f32.gmra.mxu0 %v2971
        %v3046 = vpop.f32.mrf.mxu0
        %v3047 = vadd.f32 0.0, %v3046
        %v3048 = vpop.f32.mrf.mxu0
        %3049 = vdwg.mxu0
        %3050 = vrot.lane.b32.xlu0 %v2450, 32
        %v3051 = vpop.permute.xlu0 %3050
        %3052 = vrot.lane.b32.xlu0 %v2449, 32
        %v3053 = vpop.permute.xlu0 %3052
        %3054 = vrot.lane.b32.xlu0 %v2454, 32
        %v3055 = vpop.permute.xlu0 %3054
        %3056 = vrot.lane.b32.xlu0 %v2453, 32
        %v3057 = vpop.permute.xlu0 %3056
        %v3058 = vsel %vm1613, %v3051, 0
        %v3060 = vsel %vm1613, %v3053, 0
        %v3062 = vsel %vm1613, %v3055, 0
        %v3064 = vsel %vm1613, %v3057, 0
        %3066 = vmatprep.subr.mxu0 0.0
        %3067 = vmatpush1.xpose.msra.mxu0 0.0
        %3068 = vmatprep.subr.mxu0 0.0
        %3069 = vmatpush1.xpose.msra.mxu0 0.0
        %3070 = vmatprep.subr.mxu0 0.0
        %3071 = vmatpush1.xpose.msra.mxu0 0.0
        %3072 = vmatprep.subr.mxu0 0.0
        %3073 = vmatpush1.xpose.msra.mxu0 0.0
        %3074 = vmatprep.subr.mxu0 0.0
        %3075 = vmatpush1.xpose.msra.mxu0 0.0
        %3076 = vmatprep.subr.mxu0 0.0
        %3077 = vmatpush1.xpose.msra.mxu0 0.0
        %3078 = vmatprep.subr.mxu0 0.0
        %3079 = vmatpush1.xpose.msra.mxu0 0.0
        %3080 = vmatprep.subr.mxu0 0.0
        %3081 = vmatpush1.xpose.msra.mxu0 0.0
        %3082 = vmatprep.subr.mxu0 0.0
        %3083 = vmatpush1.xpose.msra.mxu0 0.0
        %3084 = vmatprep.subr.mxu0 0.0
        %3085 = vmatpush1.xpose.msra.mxu0 0.0
        %3086 = vmatprep.subr.mxu0 0.0
        %3087 = vmatpush1.xpose.msra.mxu0 0.0
        %3088 = vmatprep.subr.mxu0 0.0
        %3089 = vmatpush1.xpose.msra.mxu0 0.0
        %3090 = vmatprep.subr.mxu0 0.0
        %3091 = vmatpush1.xpose.msra.mxu0 0.0
        %3092 = vmatprep.subr.mxu0 0.0
        %3093 = vmatpush1.xpose.msra.mxu0 0.0
        %3094 = vmatprep.subr.mxu0 0.0
        %3095 = vmatpush1.xpose.msra.mxu0 %v3064
        %3096 = vmatprep.subr.mxu0 0.0
        %3097 = vmatpush1.xpose.msra.mxu0 %v3062
        %3098 = vmatprep.subr.mxu0 0.0
        %3099 = vmatpush2.xpose.msra.mxu0 0.0
        %3100 = vmatprep.subr.mxu0 0.0
        %3101 = vmatpush2.xpose.msra.mxu0 0.0
        %3102 = vmatprep.subr.mxu0 0.0
        %3103 = vmatpush2.xpose.msra.mxu0 0.0
        %3104 = vmatprep.subr.mxu0 0.0
        %3105 = vmatpush2.xpose.msra.mxu0 0.0
        %3106 = vmatprep.subr.mxu0 0.0
        %3107 = vmatpush2.xpose.msra.mxu0 0.0
        %3108 = vmatprep.subr.mxu0 0.0
        %3109 = vmatpush2.xpose.msra.mxu0 0.0
        %3110 = vmatprep.subr.mxu0 0.0
        %3111 = vmatpush2.xpose.msra.mxu0 0.0
        %3112 = vmatprep.subr.mxu0 0.0
        %3113 = vmatpush2.xpose.msra.mxu0 0.0
        %3114 = vmatprep.subr.mxu0 0.0
        %3115 = vmatpush2.xpose.msra.mxu0 0.0
        %3116 = vmatprep.subr.mxu0 0.0
        %3117 = vmatpush2.xpose.msra.mxu0 0.0
        %3118 = vmatprep.subr.mxu0 0.0
        %3119 = vmatpush2.xpose.msra.mxu0 0.0
        %3120 = vmatprep.subr.mxu0 0.0
        %3121 = vmatpush2.xpose.msra.mxu0 0.0
        %3122 = vmatprep.subr.mxu0 0.0
        %3123 = vmatpush2.xpose.msra.mxu0 0.0
        %3124 = vmatprep.subr.mxu0 0.0
        %3125 = vmatpush2.xpose.msra.mxu0 0.0
        %3126 = vmatprep.subr.mxu0 0.0
        %3127 = vmatpush2.xpose.msra.mxu0 0.0
        %3128 = vmatprep.subr.mxu0 0.0
        %3129 = vmatpush2.xpose.msra.mxu0 0.0
        %3130 = vmatprep.mubr.f32.mxu0 0.0
        %3131 = vmatmul.mubr.f32.gmra.mxu0 %v3058
        %v3132 = vpop.f32.mrf.mxu0
        %v3133 = vadd.f32 0.0, %v3132
        %v3134 = vpop.f32.mrf.mxu0
        %3135 = vmatprep.mubr.f32.mxu0 0.0
        %3136 = vmatmul.mubr.f32.gmra.mxu0 %v3060
        %v3137 = vpop.f32.mrf.mxu0
        %v3138 = vadd.f32 0.0, %v3137
        %v3139 = vpop.f32.mrf.mxu0
        %3140 = vdwg.mxu0
        %v3141 = vsel %vm1701, %v3133, -inf
        %3142 = vmax.xlane.f32.xlu0 %v3141
        %v3143 = vpop.xlane.xlu0 %3142
        %v3144 = vsel %vm1705, %v3138, -inf
        %3145 = vmax.xlane.f32.xlu0 %v3144
        %v3146 = vpop.xlane.xlu0 %3145
        %v3147 = vsub.f32 %v3133, %v3143
        %v3148 = vsub.f32 %v3138, %v3146
        %v3149 = vmul.f32 %v3147, 1.442695
        %v3150 = vpow.pop %v3149
        %v3151 = vmul.f32 %v3148, 1.442695
        %v3152 = vpow.pop %v3151
        %v3153 = vsel %vm1701, %v3150, 0.0
        %3154 = vadd.xlane.f32.xlu0 %v3153
        %v3155 = vpop.xlane.xlu0 %3154
        %v3156 = vsel %vm1705, %v3152, 0.0
        %3157 = vadd.xlane.f32.xlu0 %v3156
        %v3158 = vpop.xlane.xlu0 %3157
        %v3159 = vrcp.pop %v3155
        %v3160 = vrcp.pop %v3158
        %v3161 = vmul.f32 %v3150, %v3159
        %v3162 = vmul.f32 %v3152, %v3160
        %3163 = vrot.lane.b32.xlu0 %v2563, 32
        %v3164 = vpop.permute.xlu0 %3163
        %3165 = vrot.lane.b32.xlu0 %v2562, 32
        %v3166 = vpop.permute.xlu0 %3165
        %v3169 = vsel %vm1701, %v3161, 0
        %v3172 = vsel %vm1701, %v3162, 0
        %v3174 = vsel %vm1731, %v3166, 0
        %3176 = vmatprep.subr.mxu0 0.0
        %3177 = vmatpush1.msra.mxu0 0.0
        %3178 = vmatprep.subr.mxu0 0.0
        %3179 = vmatpush1.msra.mxu0 0.0
        %3180 = vmatprep.subr.mxu0 0.0
        %3181 = vmatpush1.msra.mxu0 0.0
        %3182 = vmatprep.subr.mxu0 0.0
        %3183 = vmatpush1.msra.mxu0 0.0
        %3184 = vmatprep.subr.mxu0 0.0
        %3185 = vmatpush1.msra.mxu0 0.0
        %3186 = vmatprep.subr.mxu0 0.0
        %3187 = vmatpush1.msra.mxu0 0.0
        %3188 = vmatprep.subr.mxu0 0.0
        %3189 = vmatpush1.msra.mxu0 0.0
        %3190 = vmatprep.subr.mxu0 0.0
        %3191 = vmatpush1.msra.mxu0 0.0
        %3192 = vmatprep.subr.mxu0 0.0
        %3193 = vmatpush1.msra.mxu0 0.0
        %3194 = vmatprep.subr.mxu0 0.0
        %3195 = vmatpush1.msra.mxu0 0.0
        %3196 = vmatprep.subr.mxu0 0.0
        %3197 = vmatpush1.msra.mxu0 0.0
        %3198 = vmatprep.subr.mxu0 0.0
        %3199 = vmatpush1.msra.mxu0 0.0
        %3200 = vmatprep.subr.mxu0 0.0
        %3201 = vmatpush1.msra.mxu0 0.0
        %3202 = vmatprep.subr.mxu0 0.0
        %3203 = vmatpush1.msra.mxu0 0.0
        %3204 = vmatprep.subr.mxu0 0.0
        %3205 = vmatpush1.msra.mxu0 %v3174
        %3206 = vmatprep.subr.mxu0 0.0
        %3207 = vmatpush1.msra.mxu0 %v3164
        %3208 = vmatprep.subr.mxu0 0.0
        %3209 = vmatpush2.msra.mxu0 0.0
        %3210 = vmatprep.subr.mxu0 0.0
        %3211 = vmatpush2.msra.mxu0 0.0
        %3212 = vmatprep.subr.mxu0 0.0
        %3213 = vmatpush2.msra.mxu0 0.0
        %3214 = vmatprep.subr.mxu0 0.0
        %3215 = vmatpush2.msra.mxu0 0.0
        %3216 = vmatprep.subr.mxu0 0.0
        %3217 = vmatpush2.msra.mxu0 0.0
        %3218 = vmatprep.subr.mxu0 0.0
        %3219 = vmatpush2.msra.mxu0 0.0
        %3220 = vmatprep.subr.mxu0 0.0
        %3221 = vmatpush2.msra.mxu0 0.0
        %3222 = vmatprep.subr.mxu0 0.0
        %3223 = vmatpush2.msra.mxu0 0.0
        %3224 = vmatprep.subr.mxu0 0.0
        %3225 = vmatpush2.msra.mxu0 0.0
        %3226 = vmatprep.subr.mxu0 0.0
        %3227 = vmatpush2.msra.mxu0 0.0
        %3228 = vmatprep.subr.mxu0 0.0
        %3229 = vmatpush2.msra.mxu0 0.0
        %3230 = vmatprep.subr.mxu0 0.0
        %3231 = vmatpush2.msra.mxu0 0.0
        %3232 = vmatprep.subr.mxu0 0.0
        %3233 = vmatpush2.msra.mxu0 0.0
        %3234 = vmatprep.subr.mxu0 0.0
        %3235 = vmatpush2.msra.mxu0 0.0
        %3236 = vmatprep.subr.mxu0 0.0
        %3237 = vmatpush2.msra.mxu0 0.0
        %3238 = vmatprep.subr.mxu0 0.0
        %3239 = vmatpush2.msra.mxu0 0.0
        %3240 = vmatprep.mubr.f32.mxu0 0.0
        %3241 = vmatmul.mubr.f32.gmra.mxu0 %v3169
        %v3242 = vpop.f32.mrf.mxu0
        %v3243 = vadd.f32 0.0, %v3242
        %v3244 = vpop.f32.mrf.mxu0
        %3245 = vmatprep.mubr.f32.mxu0 0.0
        %3246 = vmatmul.mubr.f32.gmra.mxu0 %v3172
        %v3247 = vpop.f32.mrf.mxu0
        %v3248 = vadd.f32 0.0, %v3247
        %v3249 = vpop.f32.mrf.mxu0
        %3250 = vdwg.mxu0
        %3253 = vrot.lane.b32.xlu0 %v2841, 32
        %v3254 = vpop.permute.xlu0 %3253
        %3255 = vrot.lane.b32.xlu0 %v2846, 32
        %v3256 = vpop.permute.xlu0 %3255
        %3261 = vrot.lane.b32.xlu0 %v3042, 64
        %v3262 = vpop.permute.xlu0 %3261
        %3263 = vrot.lane.b32.xlu0 %v3047, 64
        %v3264 = vpop.permute.xlu0 %3263
        %3269 = vrot.lane.b32.xlu0 %v3243, 96
        %v3270 = vpop.permute.xlu0 %3269
        %3271 = vrot.lane.b32.xlu0 %v3248, 96
        %v3272 = vpop.permute.xlu0 %3271
        %v3275 = vsel %vm1613, %v2640, %v3254
        %v3276 = vsel %vm1613, %v2645, %v3256
        %v3277 = vsel %vm2440, %v3275, %v3262
        %v3278 = vsel %vm2440, %v3276, %v3264
        %v3279 = vsel %vm2443, %v3277, %v3270
        %v3280 = vsel %vm2443, %v3278, %v3272
        %v3283 = vrot.slane %v3279, 7
        %v3284 = vrot.slane %v3280, 7
        %v3285 = vsel %vm1731, %v3283, %v3284
        %v3288 = vsel %vm1731, %v2445, %v3283
        %v3289 = vld [vmem:[%s716] sm:$0xff]
        %v3290 = vld [vmem:[%s716 + $0x8] sm:$0xff]
        %v3291 = vld [vmem:[%s716 + $0x10] sm:$0xff]
        %v3292 = vld [vmem:[%s716 + $0x18] sm:$0xff]
        %v3293 = vld [vmem:[%s716 + $0x20] sm:$0xff]
        %v3294 = vld [vmem:[%s716 + $0x28] sm:$0xff]
        %v3295 = vld [vmem:[%s716 + $0x30] sm:$0xff]
        %v3296 = vld [vmem:[%s716 + $0x38] sm:$0xff]
        %v3297 = vld [vmem:[%s716 + $0x40] sm:$0xff]
        %v3298 = vld [vmem:[%s716 + $0x48] sm:$0xff]
        %v3299 = vld [vmem:[%s716 + $0x50] sm:$0xff]
        %v3300 = vld [vmem:[%s716 + $0x58] sm:$0xff]
        %v3301 = vld [vmem:[%s716 + $0x60] sm:$0xff]
        %v3302 = vld [vmem:[%s716 + $0x68] sm:$0xff]
        %v3303 = vld [vmem:[%s716 + $0x70] sm:$0xff]
        %v3304 = vld [vmem:[%s716 + $0x78] sm:$0xff]
        %v3305 = vld [vmem:[%s837] sm:$0x1]
        %v3307 = vlaneseq
        %v3308 = vshrl.u32 %v3307, 7
        %v3309 = vsub.s32 0, %v3308
        %v3310 = vrot.slane %v3305, %v3309
        %3312 = vmatprep.subr.mxu0 0.0
        %3313 = vmatpush1.msra.mxu0 %v3304
        %3314 = vmatprep.subr.mxu0 0.0
        %3315 = vmatpush1.msra.mxu0 %v3303
        %3316 = vmatprep.subr.mxu0 0.0
        %3317 = vmatpush1.msra.mxu0 %v3302
        %3318 = vmatprep.subr.mxu0 0.0
        %3319 = vmatpush1.msra.mxu0 %v3301
        %3320 = vmatprep.subr.mxu0 0.0
        %3321 = vmatpush1.msra.mxu0 %v3300
        %3322 = vmatprep.subr.mxu0 0.0
        %3323 = vmatpush1.msra.mxu0 %v3299
        %3324 = vmatprep.subr.mxu0 0.0
        %3325 = vmatpush1.msra.mxu0 %v3298
        %3326 = vmatprep.subr.mxu0 0.0
        %3327 = vmatpush1.msra.mxu0 %v3297
        %3328 = vmatprep.subr.mxu0 0.0
        %3329 = vmatpush1.msra.mxu0 %v3296
        %3330 = vmatprep.subr.mxu0 0.0
        %3331 = vmatpush1.msra.mxu0 %v3295
        %3332 = vmatprep.subr.mxu0 0.0
        %3333 = vmatpush1.msra.mxu0 %v3294
        %3334 = vmatprep.subr.mxu0 0.0
        %3335 = vmatpush1.msra.mxu0 %v3293
        %3336 = vmatprep.subr.mxu0 0.0
        %3337 = vmatpush1.msra.mxu0 %v3292
        %3338 = vmatprep.subr.mxu0 0.0
        %3339 = vmatpush1.msra.mxu0 %v3291
        %3340 = vmatprep.subr.mxu0 0.0
        %3341 = vmatpush1.msra.mxu0 %v3290
        %3342 = vmatprep.subr.mxu0 0.0
        %3343 = vmatpush1.msra.mxu0 %v3289
        %3344 = vmatprep.subr.mxu0 0.0
        %3345 = vmatpush2.msra.mxu0 0.0
        %3346 = vmatprep.subr.mxu0 0.0
        %3347 = vmatpush2.msra.mxu0 0.0
        %3348 = vmatprep.subr.mxu0 0.0
        %3349 = vmatpush2.msra.mxu0 0.0
        %3350 = vmatprep.subr.mxu0 0.0
        %3351 = vmatpush2.msra.mxu0 0.0
        %3352 = vmatprep.subr.mxu0 0.0
        %3353 = vmatpush2.msra.mxu0 0.0
        %3354 = vmatprep.subr.mxu0 0.0
        %3355 = vmatpush2.msra.mxu0 0.0
        %3356 = vmatprep.subr.mxu0 0.0
        %3357 = vmatpush2.msra.mxu0 0.0
        %3358 = vmatprep.subr.mxu0 0.0
        %3359 = vmatpush2.msra.mxu0 0.0
        %3360 = vmatprep.subr.mxu0 0.0
        %3361 = vmatpush2.msra.mxu0 0.0
        %3362 = vmatprep.subr.mxu0 0.0
        %3363 = vmatpush2.msra.mxu0 0.0
        %3364 = vmatprep.subr.mxu0 0.0
        %3365 = vmatpush2.msra.mxu0 0.0
        %3366 = vmatprep.subr.mxu0 0.0
        %3367 = vmatpush2.msra.mxu0 0.0
        %3368 = vmatprep.subr.mxu0 0.0
        %3369 = vmatpush2.msra.mxu0 0.0
        %3370 = vmatprep.subr.mxu0 0.0
        %3371 = vmatpush2.msra.mxu0 0.0
        %3372 = vmatprep.subr.mxu0 0.0
        %3373 = vmatpush2.msra.mxu0 0.0
        %3374 = vmatprep.subr.mxu0 0.0
        %3375 = vmatpush2.msra.mxu0 0.0
        %3376 = vmatprep.mubr.f32.mxu0 0.0
        %3377 = vmatmul.mubr.f32.gmra.mxu0 %v2444
        %v3378 = vpop.f32.mrf.mxu0
        %v3379 = vadd.f32 %v3310, %v3378
        %v3380 = vpop.f32.mrf.mxu0
        %3381 = vmatprep.mubr.f32.mxu0 0.0
        %3382 = vmatmul.mubr.f32.gmra.mxu0 %v3288
        %v3383 = vpop.f32.mrf.mxu0
        %v3384 = vadd.f32 %v3310, %v3383
        %v3385 = vpop.f32.mrf.mxu0
        %3386 = vmatprep.mubr.f32.mxu0 0.0
        %3387 = vmatmul.mubr.f32.gmra.mxu0 %v3285
        %v3388 = vpop.f32.mrf.mxu0
        %v3389 = vadd.f32 %v3310, %v3388
        %v3390 = vpop.f32.mrf.mxu0
        %3391 = vdwg.mxu0
        %v3392 = vadd.f32 %v1322, %v3379
        %v3393 = vadd.f32 %v1323, %v3384
        %v3394 = vadd.f32 %v1324, %v3389
        %v3395 = vld [vmem:[%s840] sm:$0x1]
        %v3396 = vld [vmem:[%s843] sm:$0x1]
        %3397 = vadd.xlane.f32.xlu0 %v3392
        %v3398 = vpop.xlane.xlu0 %3397
        %3399 = vadd.xlane.f32.xlu0 %v3393
        %v3400 = vpop.xlane.xlu0 %3399
        %v3401 = vsel %vm1331, %v3394, 0.0
        %3402 = vadd.xlane.f32.xlu0 %v3401
        %v3403 = vpop.xlane.xlu0 %3402
        %v3404 = vmul.f32 %v3398, %v1335
        %v3405 = vmul.f32 %v3400, %v1335
        %v3406 = vmul.f32 %v3403, %v1335
        %v3407 = vsub.f32 %v3392, %v3404
        %v3408 = vsub.f32 %v3393, %v3405
        %v3409 = vsub.f32 %v3394, %v3406
        %v3410 = vmul.f32 %v3407, %v3407
        %v3411 = vmul.f32 %v3408, %v3408
        %v3412 = vmul.f32 %v3409, %v3409
        %3413 = vadd.xlane.f32.xlu0 %v3410
        %v3414 = vpop.xlane.xlu0 %3413
        %3415 = vadd.xlane.f32.xlu0 %v3411
        %v3416 = vpop.xlane.xlu0 %3415
        %v3417 = vsel %vm1331, %v3412, 0.0
        %3418 = vadd.xlane.f32.xlu0 %v3417
        %v3419 = vpop.xlane.xlu0 %3418
        %v3420 = vmul.f32 %v3414, %v1335
        %v3421 = vmul.f32 %v3416, %v1335
        %v3422 = vmul.f32 %v3419, %v1335
        %v3423 = vadd.f32 %v3420, 1e-06
        %v3424 = vadd.f32 %v3421, 1e-06
        %v3425 = vadd.f32 %v3422, 1e-06
        %v3426 = vrsqrt.pop %v3423
        %v3427 = vrsqrt.pop %v3424
        %v3428 = vrsqrt.pop %v3425
        %v3429 = vmul.f32 %v3407, %v3426
        %v3430 = vmul.f32 %v3408, %v3427
        %v3431 = vmul.f32 %v3409, %v3428
        %v3433 = vlaneseq
        %v3434 = vshrl.u32 %v3433, 7
        %v3435 = vsub.s32 0, %v3434
        %v3436 = vrot.slane %v3395, %v3435
        %v3438 = vmul.f32 %v3429, %v3436
        %v3439 = vmul.f32 %v3430, %v3436
        %v3440 = vmul.f32 %v3431, %v3436
        %v3442 = vlaneseq
        %v3443 = vshrl.u32 %v3442, 7
        %v3444 = vsub.s32 0, %v3443
        %v3445 = vrot.slane %v3396, %v3444
        %v3447 = vadd.f32 %v3438, %v3445
        %v3448 = vadd.f32 %v3439, %v3445
        %v3449 = vadd.f32 %v3440, %v3445
        %v3450 = vld [vmem:[%s725] sm:$0xff]
        %v3451 = vld [vmem:[%s725 + $0x8] sm:$0xff]
        %v3452 = vld [vmem:[%s725 + $0x10] sm:$0xff]
        %v3453 = vld [vmem:[%s725 + $0x18] sm:$0xff]
        %v3454 = vld [vmem:[%s725 + $0x20] sm:$0xff]
        %v3455 = vld [vmem:[%s725 + $0x28] sm:$0xff]
        %v3456 = vld [vmem:[%s725 + $0x30] sm:$0xff]
        %v3457 = vld [vmem:[%s725 + $0x38] sm:$0xff]
        %v3458 = vld [vmem:[%s725 + $0x40] sm:$0xff]
        %v3459 = vld [vmem:[%s725 + $0x48] sm:$0xff]
        %v3460 = vld [vmem:[%s725 + $0x50] sm:$0xff]
        %v3461 = vld [vmem:[%s725 + $0x58] sm:$0xff]
        %v3462 = vld [vmem:[%s725 + $0x60] sm:$0xff]
        %v3463 = vld [vmem:[%s725 + $0x68] sm:$0xff]
        %v3464 = vld [vmem:[%s725 + $0x70] sm:$0xff]
        %v3465 = vld [vmem:[%s725 + $0x78] sm:$0xff]
        %v3466 = vld [vmem:[%s725 + $0x80] sm:$0xff]
        %v3467 = vld [vmem:[%s725 + $0x88] sm:$0xff]
        %v3468 = vld [vmem:[%s725 + $0x90] sm:$0xff]
        %v3469 = vld [vmem:[%s725 + $0x98] sm:$0xff]
        %v3470 = vld [vmem:[%s725 + $0xa0] sm:$0xff]
        %v3471 = vld [vmem:[%s725 + $0xa8] sm:$0xff]
        %v3472 = vld [vmem:[%s725 + $0xb0] sm:$0xff]
        %v3473 = vld [vmem:[%s725 + $0xb8] sm:$0xff]
        %v3474 = vld [vmem:[%s725 + $0xc0] sm:$0xff]
        %v3475 = vld [vmem:[%s725 + $0xc8] sm:$0xff]
        %v3476 = vld [vmem:[%s725 + $0xd0] sm:$0xff]
        %v3477 = vld [vmem:[%s725 + $0xd8] sm:$0xff]
        %v3478 = vld [vmem:[%s725 + $0xe0] sm:$0xff]
        %v3479 = vld [vmem:[%s725 + $0xe8] sm:$0xff]
        %v3480 = vld [vmem:[%s725 + $0xf0] sm:$0xff]
        %v3481 = vld [vmem:[%s725 + $0xf8] sm:$0xff]
        %v3482 = vld [vmem:[%s847] sm:$0x3]
        %v3484 = vlaneseq
        %v3485 = vshrl.u32 %v3484, 7
        %v3486 = vsub.s32 0, %v3485
        %v3487 = vrot.slane %v3482, %v3486
        %v3488 = vlaneseq
        %v3489 = vshrl.u32 %v3488, 7
        %v3490 = vsub.s32 1, %v3489
        %v3491 = vrot.slane %v3482, %v3490
        %3494 = vmatprep.subr.mxu0 %v3481
        %3495 = vmatpush1.msra.mxu0 %v3480
        %3496 = vmatprep.subr.mxu0 %v3479
        %3497 = vmatpush1.msra.mxu0 %v3478
        %3498 = vmatprep.subr.mxu0 %v3477
        %3499 = vmatpush1.msra.mxu0 %v3476
        %3500 = vmatprep.subr.mxu0 %v3475
        %3501 = vmatpush1.msra.mxu0 %v3474
        %3502 = vmatprep.subr.mxu0 %v3473
        %3503 = vmatpush1.msra.mxu0 %v3472
        %3504 = vmatprep.subr.mxu0 %v3471
        %3505 = vmatpush1.msra.mxu0 %v3470
        %3506 = vmatprep.subr.mxu0 %v3469
        %3507 = vmatpush1.msra.mxu0 %v3468
        %3508 = vmatprep.subr.mxu0 %v3467
        %3509 = vmatpush1.msra.mxu0 %v3466
        %3510 = vmatprep.subr.mxu0 %v3465
        %3511 = vmatpush1.msra.mxu0 %v3464
        %3512 = vmatprep.subr.mxu0 %v3463
        %3513 = vmatpush1.msra.mxu0 %v3462
        %3514 = vmatprep.subr.mxu0 %v3461
        %3515 = vmatpush1.msra.mxu0 %v3460
        %3516 = vmatprep.subr.mxu0 %v3459
        %3517 = vmatpush1.msra.mxu0 %v3458
        %3518 = vmatprep.subr.mxu0 %v3457
        %3519 = vmatpush1.msra.mxu0 %v3456
        %3520 = vmatprep.subr.mxu0 %v3455
        %3521 = vmatpush1.msra.mxu0 %v3454
        %3522 = vmatprep.subr.mxu0 %v3453
        %3523 = vmatpush1.msra.mxu0 %v3452
        %3524 = vmatprep.subr.mxu0 %v3451
        %3525 = vmatpush1.msra.mxu0 %v3450
        %3526 = vmatprep.subr.mxu0 0.0
        %3527 = vmatpush2.msra.mxu0 0.0
        %3528 = vmatprep.subr.mxu0 0.0
        %3529 = vmatpush2.msra.mxu0 0.0
        %3530 = vmatprep.subr.mxu0 0.0
        %3531 = vmatpush2.msra.mxu0 0.0
        %3532 = vmatprep.subr.mxu0 0.0
        %3533 = vmatpush2.msra.mxu0 0.0
        %3534 = vmatprep.subr.mxu0 0.0
        %3535 = vmatpush2.msra.mxu0 0.0
        %3536 = vmatprep.subr.mxu0 0.0
        %3537 = vmatpush2.msra.mxu0 0.0
        %3538 = vmatprep.subr.mxu0 0.0
        %3539 = vmatpush2.msra.mxu0 0.0
        %3540 = vmatprep.subr.mxu0 0.0
        %3541 = vmatpush2.msra.mxu0 0.0
        %3542 = vmatprep.subr.mxu0 0.0
        %3543 = vmatpush2.msra.mxu0 0.0
        %3544 = vmatprep.subr.mxu0 0.0
        %3545 = vmatpush2.msra.mxu0 0.0
        %3546 = vmatprep.subr.mxu0 0.0
        %3547 = vmatpush2.msra.mxu0 0.0
        %3548 = vmatprep.subr.mxu0 0.0
        %3549 = vmatpush2.msra.mxu0 0.0
        %3550 = vmatprep.subr.mxu0 0.0
        %3551 = vmatpush2.msra.mxu0 0.0
        %3552 = vmatprep.subr.mxu0 0.0
        %3553 = vmatpush2.msra.mxu0 0.0
        %3554 = vmatprep.subr.mxu0 0.0
        %3555 = vmatpush2.msra.mxu0 0.0
        %3556 = vmatprep.subr.mxu0 0.0
        %3557 = vmatpush2.msra.mxu0 0.0
        %3558 = vmatprep.mubr.f32.mxu0 0.0
        %3559 = vmatmul.mubr.f32.gmra.mxu0 %v3447
        %v3560 = vpop.f32.mrf.mxu0
        %v3561 = vadd.f32 %v3487, %v3560
        %v3562 = vpop.f32.mrf.mxu0
        %v3563 = vadd.f32 %v3491, %v3562
        %3564 = vmatprep.mubr.f32.mxu0 0.0
        %3565 = vmatmul.mubr.f32.gmra.mxu0 %v3448
        %v3566 = vpop.f32.mrf.mxu0
        %v3567 = vadd.f32 %v3487, %v3566
        %v3568 = vpop.f32.mrf.mxu0
        %v3569 = vadd.f32 %v3491, %v3568
        %3570 = vmatprep.mubr.f32.mxu0 0.0
        %3571 = vmatmul.mubr.f32.gmra.mxu0 %v3449
        %v3572 = vpop.f32.mrf.mxu0
        %v3573 = vadd.f32 %v3487, %v3572
        %v3574 = vpop.f32.mrf.mxu0
        %v3575 = vadd.f32 %v3491, %v3574
        %3576 = vdwg.mxu0
        %v3577 = vmul.f32 %v3561, 0.5
        %v3578 = vmul.f32 %v3563, 0.5
        %v3579 = vmul.f32 %v3567, 0.5
        %v3580 = vmul.f32 %v3569, 0.5
        %v3581 = vmul.f32 %v3573, 0.5
        %v3582 = vmul.f32 %v3575, 0.5
        %v3583 = vmul.f32 %v3561, 0.044715
        %v3584 = vmul.f32 %v3563, 0.044715
        %v3585 = vmul.f32 %v3567, 0.044715
        %v3586 = vmul.f32 %v3569, 0.044715
        %v3587 = vmul.f32 %v3573, 0.044715
        %v3588 = vmul.f32 %v3575, 0.044715
        %v3589 = vmul.f32 %v3583, %v3561
        %v3590 = vmul.f32 %v3584, %v3563
        %v3591 = vmul.f32 %v3585, %v3567
        %v3592 = vmul.f32 %v3586, %v3569
        %v3593 = vmul.f32 %v3587, %v3573
        %v3594 = vmul.f32 %v3588, %v3575
        %v3595 = vmul.f32 %v3589, %v3561
        %v3596 = vmul.f32 %v3590, %v3563
        %v3597 = vmul.f32 %v3591, %v3567
        %v3598 = vmul.f32 %v3592, %v3569
        %v3599 = vmul.f32 %v3593, %v3573
        %v3600 = vmul.f32 %v3594, %v3575
        %v3601 = vadd.f32 %v3561, %v3595
        %v3602 = vadd.f32 %v3563, %v3596
        %v3603 = vadd.f32 %v3567, %v3597
        %v3604 = vadd.f32 %v3569, %v3598
        %v3605 = vadd.f32 %v3573, %v3599
        %v3606 = vadd.f32 %v3575, %v3600
        %v3607 = vmul.f32 %v3601, 0.7978846
        %v3608 = vmul.f32 %v3602, 0.7978846
        %v3609 = vmul.f32 %v3603, 0.7978846
        %v3610 = vmul.f32 %v3604, 0.7978846
        %v3611 = vmul.f32 %v3605, 0.7978846
        %v3612 = vmul.f32 %v3606, 0.7978846
        %v3613 = vtanh.pop %v3607
        %v3614 = vtanh.pop %v3608
        %v3615 = vtanh.pop %v3609
        %v3616 = vtanh.pop %v3610
        %v3617 = vtanh.pop %v3611
        %v3618 = vtanh.pop %v3612
        %v3619 = vadd.f32 %v3613, 1.0
        %v3620 = vadd.f32 %v3614, 1.0
        %v3621 = vadd.f32 %v3615, 1.0
        %v3622 = vadd.f32 %v3616, 1.0
        %v3623 = vadd.f32 %v3617, 1.0
        %v3624 = vadd.f32 %v3618, 1.0
        %v3625 = vmul.f32 %v3577, %v3619
        %v3626 = vmul.f32 %v3578, %v3620
        %v3627 = vmul.f32 %v3579, %v3621
        %v3628 = vmul.f32 %v3580, %v3622
        %v3629 = vmul.f32 %v3581, %v3623
        %v3630 = vmul.f32 %v3582, %v3624
        %v3631 = vld [vmem:[%s734] sm:$0xff]
        %v3632 = vld [vmem:[%s734 + $0x8] sm:$0xff]
        %v3633 = vld [vmem:[%s734 + $0x10] sm:$0xff]
        %v3634 = vld [vmem:[%s734 + $0x18] sm:$0xff]
        %v3635 = vld [vmem:[%s734 + $0x20] sm:$0xff]
        %v3636 = vld [vmem:[%s734 + $0x28] sm:$0xff]
        %v3637 = vld [vmem:[%s734 + $0x30] sm:$0xff]
        %v3638 = vld [vmem:[%s734 + $0x38] sm:$0xff]
        %v3639 = vld [vmem:[%s734 + $0x40] sm:$0xff]
        %v3640 = vld [vmem:[%s734 + $0x48] sm:$0xff]
        %v3641 = vld [vmem:[%s734 + $0x50] sm:$0xff]
        %v3642 = vld [vmem:[%s734 + $0x58] sm:$0xff]
        %v3643 = vld [vmem:[%s734 + $0x60] sm:$0xff]
        %v3644 = vld [vmem:[%s734 + $0x68] sm:$0xff]
        %v3645 = vld [vmem:[%s734 + $0x70] sm:$0xff]
        %v3646 = vld [vmem:[%s734 + $0x78] sm:$0xff]
        %v3647 = vld [vmem:[%s734 + $0x80] sm:$0xff]
        %v3648 = vld [vmem:[%s734 + $0x88] sm:$0xff]
        %v3649 = vld [vmem:[%s734 + $0x90] sm:$0xff]
        %v3650 = vld [vmem:[%s734 + $0x98] sm:$0xff]
        %v3651 = vld [vmem:[%s734 + $0xa0] sm:$0xff]
        %v3652 = vld [vmem:[%s734 + $0xa8] sm:$0xff]
        %v3653 = vld [vmem:[%s734 + $0xb0] sm:$0xff]
        %v3654 = vld [vmem:[%s734 + $0xb8] sm:$0xff]
        %v3655 = vld [vmem:[%s734 + $0xc0] sm:$0xff]
        %v3656 = vld [vmem:[%s734 + $0xc8] sm:$0xff]
        %v3657 = vld [vmem:[%s734 + $0xd0] sm:$0xff]
        %v3658 = vld [vmem:[%s734 + $0xd8] sm:$0xff]
        %v3659 = vld [vmem:[%s734 + $0xe0] sm:$0xff]
        %v3660 = vld [vmem:[%s734 + $0xe8] sm:$0xff]
        %v3661 = vld [vmem:[%s734 + $0xf0] sm:$0xff]
        %v3662 = vld [vmem:[%s734 + $0xf8] sm:$0xff]
        %v3663 = vld [vmem:[%s850] sm:$0x1]
        %v3665 = vlaneseq
        %v3666 = vshrl.u32 %v3665, 7
        %v3667 = vsub.s32 0, %v3666
        %v3668 = vrot.slane %v3663, %v3667
        %3670 = vmatprep.subr.mxu0 0.0
        %3671 = vmatpush1.msra.mxu0 %v3646
        %3672 = vmatprep.subr.mxu0 0.0
        %3673 = vmatpush1.msra.mxu0 %v3645
        %3674 = vmatprep.subr.mxu0 0.0
        %3675 = vmatpush1.msra.mxu0 %v3644
        %3676 = vmatprep.subr.mxu0 0.0
        %3677 = vmatpush1.msra.mxu0 %v3643
        %3678 = vmatprep.subr.mxu0 0.0
        %3679 = vmatpush1.msra.mxu0 %v3642
        %3680 = vmatprep.subr.mxu0 0.0
        %3681 = vmatpush1.msra.mxu0 %v3641
        %3682 = vmatprep.subr.mxu0 0.0
        %3683 = vmatpush1.msra.mxu0 %v3640
        %3684 = vmatprep.subr.mxu0 0.0
        %3685 = vmatpush1.msra.mxu0 %v3639
        %3686 = vmatprep.subr.mxu0 0.0
        %3687 = vmatpush1.msra.mxu0 %v3638
        %3688 = vmatprep.subr.mxu0 0.0
        %3689 = vmatpush1.msra.mxu0 %v3637
        %3690 = vmatprep.subr.mxu0 0.0
        %3691 = vmatpush1.msra.mxu0 %v3636
        %3692 = vmatprep.subr.mxu0 0.0
        %3693 = vmatpush1.msra.mxu0 %v3635
        %3694 = vmatprep.subr.mxu0 0.0
        %3695 = vmatpush1.msra.mxu0 %v3634
        %3696 = vmatprep.subr.mxu0 0.0
        %3697 = vmatpush1.msra.mxu0 %v3633
        %3698 = vmatprep.subr.mxu0 0.0
        %3699 = vmatpush1.msra.mxu0 %v3632
        %3700 = vmatprep.subr.mxu0 0.0
        %3701 = vmatpush1.msra.mxu0 %v3631
        %3702 = vmatprep.subr.mxu0 0.0
        %3703 = vmatpush2.msra.mxu0 %v3662
        %3704 = vmatprep.subr.mxu0 0.0
        %3705 = vmatpush2.msra.mxu0 %v3661
        %3706 = vmatprep.subr.mxu0 0.0
        %3707 = vmatpush2.msra.mxu0 %v3660
        %3708 = vmatprep.subr.mxu0 0.0
        %3709 = vmatpush2.msra.mxu0 %v3659
        %3710 = vmatprep.subr.mxu0 0.0
        %3711 = vmatpush2.msra.mxu0 %v3658
        %3712 = vmatprep.subr.mxu0 0.0
        %3713 = vmatpush2.msra.mxu0 %v3657
        %3714 = vmatprep.subr.mxu0 0.0
        %3715 = vmatpush2.msra.mxu0 %v3656
        %3716 = vmatprep.subr.mxu0 0.0
        %3717 = vmatpush2.msra.mxu0 %v3655
        %3718 = vmatprep.subr.mxu0 0.0
        %3719 = vmatpush2.msra.mxu0 %v3654
        %3720 = vmatprep.subr.mxu0 0.0
        %3721 = vmatpush2.msra.mxu0 %v3653
        %3722 = vmatprep.subr.mxu0 0.0
        %3723 = vmatpush2.msra.mxu0 %v3652
        %3724 = vmatprep.subr.mxu0 0.0
        %3725 = vmatpush2.msra.mxu0 %v3651
        %3726 = vmatprep.subr.mxu0 0.0
        %3727 = vmatpush2.msra.mxu0 %v3650
        %3728 = vmatprep.subr.mxu0 0.0
        %3729 = vmatpush2.msra.mxu0 %v3649
        %3730 = vmatprep.subr.mxu0 0.0
        %3731 = vmatpush2.msra.mxu0 %v3648
        %3732 = vmatprep.subr.mxu0 0.0
        %3733 = vmatpush2.msra.mxu0 %v3647
        %3734 = vmatprep.mubr.f32.mxu0 %v3626
        %3735 = vmatmul.mubr.f32.gmra.mxu0 %v3625
        %v3736 = vpop.f32.mrf.mxu0
        %v3737 = vadd.f32 %v3668, %v3736
        %v3738 = vpop.f32.mrf.mxu0
        %3739 = vmatprep.mubr.f32.mxu0 %v3628
        %3740 = vmatmul.mubr.f32.gmra.mxu0 %v3627
        %v3741 = vpop.f32.mrf.mxu0
        %v3742 = vadd.f32 %v3668, %v3741
        %v3743 = vpop.f32.mrf.mxu0
        %3744 = vmatprep.mubr.f32.mxu0 %v3630
        %3745 = vmatmul.mubr.f32.gmra.mxu0 %v3629
        %v3746 = vpop.f32.mrf.mxu0
        %v3747 = vadd.f32 %v3668, %v3746
        %v3748 = vpop.f32.mrf.mxu0
        %3749 = vdwg.mxu0
        %v3750 = vadd.f32 %v3392, %v3737
        %v3751 = vadd.f32 %v3393, %v3742
        %v3752 = vadd.f32 %v3394, %v3747
        %3753 = vst [vmem:[#allocation2] sm:$0xff] %v3750
        %3754 = vst [vmem:[#allocation2 + $0x8] sm:$0xff] %v3751
        %3755 = vst [vmem:[#allocation2 + $0x10] sm:$0x3] %v3752
        %p3756 = scmp.eq.s32.totalorder %s47, 1
        // Predicated region
        $region117: #{vit_forward.1} parent=95 // pred_check
          %p3757 = pneg %p3756
        $region118: #{vit_forward.1} parent=95 // pred_check_branch
          %3759 = sbr.rel (%p3757) target = $region120
        $region119: #{vit_forward.1} parent=95 // pred_region
          %v3760 = vsel %vm1731, %v3750, %v3751
          %v3761 = vld [vmem:[%s18] sm:$0x1]
          %v3762 = vld [vmem:[%s19] sm:$0x1]
          %v3763 = vsel %vm1331, %v3760, 0.0
          %3764 = vadd.xlane.f32.xlu0 %v3763
          %v3765 = vpop.xlane.xlu0 %3764
          %v3766 = vmul.f32 %v3765, %v1335
          %v3767 = vsub.f32 %v3760, %v3766
          %v3768 = vmul.f32 %v3767, %v3767
          %v3769 = vsel %vm1331, %v3768, 0.0
          %3770 = vadd.xlane.f32.xlu0 %v3769
          %v3771 = vpop.xlane.xlu0 %3770
          %v3772 = vmul.f32 %v3771, %v1335
          %v3773 = vadd.f32 %v3772, 1e-06
          %v3774 = vrsqrt.pop %v3773
          %v3775 = vmul.f32 %v3767, %v3774
          %v3777 = vlaneseq
          %v3778 = vshrl.u32 %v3777, 7
          %v3779 = vsub.s32 0, %v3778
          %v3780 = vrot.slane %v3761, %v3779
          %v3782 = vmul.f32 %v3775, %v3780
          %v3784 = vlaneseq
          %v3785 = vshrl.u32 %v3784, 7
          %v3786 = vsub.s32 0, %v3785
          %v3787 = vrot.slane %v3762, %v3786
          %v3789 = vadd.f32 %v3782, %v3787
          %3790 = vst [vmem:[#allocation13] sm:$0x3] %v3789
        $region120: #{vit_forward.1} parent=95 // pred_fallthru
          _
        // Predicated region
        $region121: #{vit_forward.1} parent=95 // pred_check
          %p3791 = pneg %p519
        $region122: #{vit_forward.1} parent=95 // pred_check_branch
          %3793 = sbr.rel (%p3791) target = $region124
        $region123: #{vit_forward.1} parent=95 // pred_region
          %s3795 = ssub.s32 32, 32
          %3796 = vsyncadd [#allocation7], %s3795
          %s3798 = sshll.u32 [#allocation13], 4
          %s3799 = int_to_ptr.vmem [resolvable:$true] %s3798
          %3801 = dma.vmem_to_hbm [thread:$0]  %s3799, 32, %s20, [#allocation7]
        $region124: #{vit_forward.1} parent=95 // pred_fallthru
          _
        // Predicated region
        $region125: #{vit_forward.1} parent=95 // pred_check
          %p3802 = pneg %p519
        $region126: #{vit_forward.1} parent=95 // pred_check_branch
          %3804 = sbr.rel (%p3802) target = $region128
        $region127: #{vit_forward.1} parent=95 // pred_region
          %3805 = dma.done [#allocation7], 32
        $region128: #{vit_forward.1} parent=95 // pred_fallthru
          _
      $region96: #{vit_forward.1} parent=5 // pred_fallthru
        _
      %p3806 = scmp.le.s32.totalorder 2, %s42
      // Predicated region
      $region129: #{vit_forward.1} parent=5 // pred_check
        %p3807 = pneg %p3806
      $region130: #{vit_forward.1} parent=5 // pred_check_branch
        %3809 = sbr.rel (%p3807) target = $region132
      $region131: #{vit_forward.1} parent=5 // pred_region
        %s3810 = ssub.s32 %s42, 2
      $region132: #{vit_forward.1} parent=5 // pred_fallthru
        _
    $region6: #{vit_forward.1} parent=1 // loop_footer
      %s46 = sadd.s32 1, %s42
    $region7: #{vit_forward.1} parent=1 // loop_footer_branch
      %41 = sbr.rel target = $region3
    $region8: #{vit_forward.1} parent=1 // loop_exit
      _
    %3811 = vsyncpa [#allocation6], 1
    %s3812 = scalar_lea.sflag [#allocation6], 1
    %3813 = vsyncpa %s3812, 1
    %3814 = vsyncpa [#allocation9], 1
    %s3815 = scalar_lea.sflag [#allocation9], 1
    %3816 = vsyncpa %s3815, 1
    %3817 = vsyncpa [#allocation12], 1
    %s3818 = scalar_lea.sflag [#allocation12], 1
    %3819 = vsyncpa %s3818, 1
    %3820 = vsyncpa [#allocation7], 1
    %s3821 = scalar_lea.sflag [#allocation7], 1
    %3822 = vsyncpa %s3821, 1

</llo_original>
